<compile_context>
chip_gen: v5e
topology: v5e:2x2
jax: 0.10.0
libtpu: 0.0.40
codegen_flags: <defaults>
</compile_context>

<pallas_src>
import numpy as np
import jax
import jax.numpy as jnp
from jax.experimental import pallas as pl
from jax.experimental.pallas import tpu as pltpu


# ------------------------------ fused kernel -------------------------------- #
def _tcbam_kernel(x_ref,
                  w1c_ref, b1c_ref, w2c_ref, b2c_ref,
                  w1t_ref, b1t_ref, w2t_ref, b2t_ref,
                  band_ref, bnb_ref, out_ref):
    f32 = jnp.float32
    prec = jax.lax.Precision.HIGHEST
    xk = x_ref[0]                                    # (C, T, HW) float32
    C, T, HW = xk.shape

    # ---- ChannelGate1: per-channel scale from avg/max pooling over (T, H, W) ----
    s_ct = jnp.sum(xk, axis=2)                       # (C, T)
    m_ct = jnp.max(xk, axis=2)                       # (C, T)
    avg_c = jnp.sum(s_ct, axis=1, keepdims=True) * (1.0 / (T * HW))   # (C, 1)
    max_c = jnp.max(m_ct, axis=1, keepdims=True)                      # (C, 1)
    pc = jnp.concatenate([avg_c, max_c], axis=1)                      # (C, 2)  avg|max batched
    h1 = jnp.maximum(jnp.dot(w1c_ref[...], pc, precision=prec,
                             preferred_element_type=f32) + b1c_ref[...], 0.0)   # (Ch, 2)
    a1 = jnp.dot(w2c_ref[...], h1, precision=prec,
                 preferred_element_type=f32) + b2c_ref[...]                      # (C, 2)
    sc1 = jax.nn.sigmoid(a1[:, 0:1] + a1[:, 1:2])                                # (C, 1)
    y1 = xk * sc1[:, :, None]                                                    # (C, T, HW)

    # ---- channel reductions of y1 (shared by temporal gate and ChannelPool) ----
    sum_c = jnp.sum(y1, axis=0)                      # (T, HW)
    max_c_map = jnp.max(y1, axis=0)                  # (T, HW)

    # ---- ChannelGate2 (temporal): per-frame scale from avg/max over (C, H, W) ----
    avg_t = jnp.sum(sum_c, axis=1, keepdims=True) * (1.0 / (C * HW))  # (T, 1)
    max_t = jnp.max(max_c_map, axis=1, keepdims=True)                 # (T, 1)
    pt = jnp.concatenate([avg_t, max_t], axis=1)                      # (T, 2)
    h2 = jnp.maximum(jnp.dot(w1t_ref[...], pt, precision=prec,
                             preferred_element_type=f32) + b1t_ref[...], 0.0)    # (Th, 2)
    a2 = jnp.dot(w2t_ref[...], h2, precision=prec,
                 preferred_element_type=f32) + b2t_ref[...]                      # (T, 2)
    sc2 = jax.nn.sigmoid(a2[:, 0:1] + a2[:, 1:2])                                # (T, 1), > 0

    # ---- ChannelPool on y2 = y1 * sc2  (sc2 > 0, so max/mean factor through) ----
    comp_max = max_c_map * sc2                       # (T, HW)  ChannelPool channel 0 (max)
    comp_mean = sum_c * (sc2 * (1.0 / C))            # (T, HW)  ChannelPool channel 1 (mean)

    # ---- SpatialGate: 7x7x7 conv (+ folded BN) as ONE lane-dense bf16 matmul ----
    zpad = jnp.zeros((3, HW), f32)
    p_max = jnp.concatenate([zpad, comp_max, zpad], axis=0)     # (T+6, HW) temporal pad
    p_mean = jnp.concatenate([zpad, comp_mean, zpad], axis=0)   # (T+6, HW)
    pieces = ([p_max[kd:kd + T, :] for kd in range(7)]
              + [p_mean[kd:kd + T, :] for kd in range(7)])
    lhs = jnp.concatenate(pieces, axis=1).astype(jnp.bfloat16)  # (T, 14*HW)
    conv = jnp.dot(lhs, band_ref[...],
                   preferred_element_type=f32)                  # (T, HW), f32 accumulation
    sp = jax.nn.sigmoid(conv + bnb_ref[0, 0])                   # (T, HW)

    # ---- epilogue: out = x + y2 * sp = x + y1 * (sc2 * sp)  (lane-dense store) ----
    out_ref[0] = xk + y1 * (sc2 * sp)[None, :, :]


# --------------------------------- wrapper ---------------------------------- #
def tcbam_forward(x, kp):
    B, C, T, H, W = x.shape
    HW = H * W
    Ch = kp['w1c'].shape[0]
    Th = kp['w1t'].shape[0]
    KB = 2 * 7 * HW                                   # band K (c, kd, h', w')

    x4 = x.astype(jnp.float32).reshape(B, C, T, HW)   # free contiguous reshape

    out = pl.pallas_call(
        _tcbam_kernel,
        out_shape=jax.ShapeDtypeStruct((B, C, T, HW), jnp.float32),
        grid=(B,),
        in_specs=[
            pl.BlockSpec((1, C, T, HW), lambda b: (b, 0, 0, 0)),
            pl.BlockSpec((Ch, C), lambda b: (0, 0)),
            pl.BlockSpec((Ch, 1), lambda b: (0, 0)),
            pl.BlockSpec((C, Ch), lambda b: (0, 0)),
            pl.BlockSpec((C, 1), lambda b: (0, 0)),
            pl.BlockSpec((Th, T), lambda b: (0, 0)),
            pl.BlockSpec((Th, 1), lambda b: (0, 0)),
            pl.BlockSpec((T, Th), lambda b: (0, 0)),
            pl.BlockSpec((T, 1), lambda b: (0, 0)),
            pl.BlockSpec((KB, HW), lambda b: (0, 0)),            # bf16 band, loaded once
            pl.BlockSpec(memory_space=pltpu.MemorySpace.SMEM),   # bn bias scalar
        ],
        out_specs=pl.BlockSpec((1, C, T, HW), lambda b: (b, 0, 0, 0)),
        compiler_params=pltpu.CompilerParams(
            dimension_semantics=("parallel",),        # independent per-batch work (v7x 2 TCs)
            vmem_limit_bytes=32 * 1024 * 1024),       # small working set; <= v7x 64 MiB VMEM
    )(x4,
      kp['w1c'], kp['b1c'], kp['w2c'], kp['b2c'],
      kp['w1t'], kp['b1t'], kp['w2t'], kp['b2t'],
      kp['band'], kp['bn_bias'])
    return out.reshape(B, C, T, H, W)


# --------------------------- parameters (glue) ------------------------------ #
def make_params(key, C, T, H, W, reduction_ratio=16, reduction_t=2):
    Ch = max(C // reduction_ratio, 1)
    Th = max(T // reduction_t, 1)
    ks = jax.random.split(key, 12)
    # torch nn.Linear weights are (out, in)
    w1c = 0.3 * jax.random.normal(ks[0], (Ch, C), jnp.float32)
    b1c = 0.1 * jax.random.normal(ks[1], (Ch,), jnp.float32)
    w2c = 0.3 * jax.random.normal(ks[2], (C, Ch), jnp.float32)
    b2c = 0.1 * jax.random.normal(ks[3], (C,), jnp.float32)
    w1t = 0.3 * jax.random.normal(ks[4], (Th, T), jnp.float32)
    b1t = 0.1 * jax.random.normal(ks[5], (Th,), jnp.float32)
    w2t = 0.3 * jax.random.normal(ks[6], (T, Th), jnp.float32)
    b2t = 0.1 * jax.random.normal(ks[7], (T,), jnp.float32)
    conv_w = 0.05 * jax.random.normal(ks[8], (1, 2, 7, 7, 7), jnp.float32)
    gamma = 1.0 + 0.1 * jax.random.normal(ks[9], (), jnp.float32)
    beta = 0.1 * jax.random.normal(ks[10], (), jnp.float32)
    run_mean = 0.1 * jax.random.normal(ks[11], (), jnp.float32)
    run_var = jnp.float32(1.0)
    eps = 1e-5
    bn_scale = gamma / jnp.sqrt(run_var + eps)
    bn_bias = beta - run_mean * bn_scale

    # Band operator: conv_out[t, (h,w)] = sum_{c,kd} frame[c, t+kd-3] @ band[c,kd]
    # where band[c,kd][(h',w'), (h,w)] = w_eff[c,kd,h'-h+3,w'-w+3] (zero outside the 7x7
    # window). Spatial zero padding is absorbed; only temporal padding stays in-kernel.
    w_eff = np.asarray(conv_w[0] * bn_scale)                 # (2,7,7,7) [c,kd,kh,kw]
    band = np.zeros((2, 7, H, W, H, W), np.float32)
    for kh in range(7):
        for kw in range(7):
            for h in range(H):
                hp = h + kh - 3
                if hp < 0 or hp >= H:
                    continue
                for w in range(W):
                    wp = w + kw - 3
                    if wp < 0 or wp >= W:
                        continue
                    band[:, :, hp, wp, h, w] = w_eff[:, :, kh, kw]
    band = band.reshape(2 * 7 * H * W, H * W)

    torch_params = dict(w1c=w1c, b1c=b1c, w2c=w2c, b2c=b2c,
                        w1t=w1t, b1t=b1t, w2t=w2t, b2t=b2t,
                        conv_w=conv_w, gamma=gamma, beta=beta,
                        run_mean=run_mean, run_var=run_var, eps=eps)
    kernel_params = dict(
        w1c=w1c, b1c=b1c.reshape(Ch, 1),
        w2c=w2c, b2c=b2c.reshape(C, 1),
        w1t=w1t, b1t=b1t.reshape(Th, 1),
        w2t=w2t, b2t=b2t.reshape(T, 1),
        band=jnp.asarray(band, jnp.bfloat16),
        bn_bias=jnp.asarray(bn_bias, jnp.float32).reshape(1, 1),
    )
    return torch_params, kernel_params


# ------------------------ pure-JAX reference (check) ------------------------ #
def reference_forward(x, tp):
    prec = jax.lax.Precision.HIGHEST
    B, C, T, H, W = x.shape

    def mlp(p, w1, b1, w2, b2):
        h = jnp.maximum(jnp.dot(p, w1.T, precision=prec) + b1, 0.0)
        return jnp.dot(h, w2.T, precision=prec) + b2

    flat = x.reshape(B, C, -1)
    att1 = (mlp(flat.mean(-1), tp['w1c'], tp['b1c'], tp['w2c'], tp['b2c'])
            + mlp(flat.max(-1), tp['w1c'], tp['b1c'], tp['w2c'], tp['b2c']))
    sc1 = jax.nn.sigmoid(att1)
    y1 = x * sc1[:, :, None, None, None]

    xt = jnp.transpose(y1, (0, 2, 1, 3, 4))                 # (B,T,C,H,W)
    flat_t = xt.reshape(B, T, -1)
    att2 = (mlp(flat_t.mean(-1), tp['w1t'], tp['b1t'], tp['w2t'], tp['b2t'])
            + mlp(flat_t.max(-1), tp['w1t'], tp['b1t'], tp['w2t'], tp['b2t']))
    sc2 = jax.nn.sigmoid(att2)                              # (B,T)
    y2t = xt * sc2[:, :, None, None, None]
    y2 = jnp.transpose(y2t, (0, 2, 1, 3, 4))                # (B,C,T,H,W)

    comp = jnp.stack([y2.max(1), y2.mean(1)], axis=1)       # (B,2,T,H,W) [max, mean]
    conv = jax.lax.conv_general_dilated(
        comp, tp['conv_w'], window_strides=(1, 1, 1),
        padding=((3, 3), (3, 3), (3, 3)),
        dimension_numbers=('NCDHW', 'OIDHW', 'NCDHW'),
        precision=prec)
    bn = (conv - tp['run_mean']) / jnp.sqrt(tp['run_var'] + tp['eps']) * tp['gamma'] + tp['beta']
    sp = jax.nn.sigmoid(bn)                                 # (B,1,T,H,W)
    return x + y2 * sp


if __name__ == "__main__":
    B, C, T, H, W = 2, 32, 8, 16, 16        # gate_channels=32, gate_temporal=8
    key = jax.random.PRNGKey(0)
    kx, kp_key = jax.random.split(key, 2)
    x = jax.random.normal(kx, (B, C, T, H, W), jnp.float32)
    torch_params, kernel_params = make_params(kp_key, C, T, H, W)

    run = jax.jit(lambda a: tcbam_forward(a, kernel_params))
    out = jax.block_until_ready(run(x))

    ref = reference_forward(x, torch_params)
    np.testing.assert_allclose(np.asarray(out), np.asarray(ref), rtol=5e-3, atol=5e-3)
    print("KERNEL_OK")
</pallas_src>

<mosaic_0001>
module attributes {stable_mosaic.version = 11 : i64} {
  func.func @_tcbam_kernel(%arg0: i32, %arg1: memref<1x32x8x256xf32, #tpu.memory_space<vmem>>, %arg2: memref<2x32xf32, #tpu.memory_space<vmem>>, %arg3: memref<2x1xf32, #tpu.memory_space<vmem>>, %arg4: memref<32x2xf32, #tpu.memory_space<vmem>>, %arg5: memref<32x1xf32, #tpu.memory_space<vmem>>, %arg6: memref<4x8xf32, #tpu.memory_space<vmem>>, %arg7: memref<4x1xf32, #tpu.memory_space<vmem>>, %arg8: memref<8x4xf32, #tpu.memory_space<vmem>>, %arg9: memref<8x1xf32, #tpu.memory_space<vmem>>, %arg10: memref<3584x256xbf16, #tpu.memory_space<vmem>>, %arg11: memref<1x1xf32, #tpu.memory_space<smem>>, %arg12: memref<1x32x8x256xf32, #tpu.memory_space<vmem>>) attributes {dimension_semantics = [#tpu.dimension_semantics<parallel>], iteration_bounds = array<i64: 2>, scalar_prefetch = 0 : i64, scratch_operands = 0 : i64, tpu.core_type = #tpu.core_type<tc>, window_params = [{transform_indices = @transform_0, window_bounds = array<i64: 1, 32, 8, 256>}, {pipeline_mode = #tpu.pipeline_mode<synchronous>, transform_indices = @transform_1, window_bounds = array<i64: 2, 32>}, {pipeline_mode = #tpu.pipeline_mode<synchronous>, transform_indices = @transform_2, window_bounds = array<i64: 2, 1>}, {pipeline_mode = #tpu.pipeline_mode<synchronous>, transform_indices = @transform_3, window_bounds = array<i64: 32, 2>}, {pipeline_mode = #tpu.pipeline_mode<synchronous>, transform_indices = @transform_4, window_bounds = array<i64: 32, 1>}, {pipeline_mode = #tpu.pipeline_mode<synchronous>, transform_indices = @transform_5, window_bounds = array<i64: 4, 8>}, {pipeline_mode = #tpu.pipeline_mode<synchronous>, transform_indices = @transform_6, window_bounds = array<i64: 4, 1>}, {pipeline_mode = #tpu.pipeline_mode<synchronous>, transform_indices = @transform_7, window_bounds = array<i64: 8, 4>}, {pipeline_mode = #tpu.pipeline_mode<synchronous>, transform_indices = @transform_8, window_bounds = array<i64: 8, 1>}, {pipeline_mode = #tpu.pipeline_mode<synchronous>, transform_indices = @transform_9, window_bounds = array<i64: 3584, 256>}, {transform_indices = @transform_10, window_bounds = array<i64: 1, 1>}, {transform_indices = @transform_11, window_bounds = array<i64: 1, 32, 8, 256>}]} {
    %c0 = arith.constant 0 : index
    %c0_0 = arith.constant 0 : index
    %c0_1 = arith.constant 0 : index
    %c0_2 = arith.constant 0 : index
    %0 = vector.load %arg1[%c0, %c0_0, %c0_1, %c0_2] : memref<1x32x8x256xf32, #tpu.memory_space<vmem>>, vector<1x32x8x256xf32>
    %1 = vector.shape_cast %0 : vector<1x32x8x256xf32> to vector<32x8x256xf32>
    %cst = arith.constant dense<0.000000e+00> : vector<32x8xf32>
    %2 = vector.multi_reduction <add>, %1, %cst [2] : vector<32x8x256xf32> to vector<32x8xf32>
    %cst_3 = arith.constant dense<0xFF800000> : vector<32x8xf32>
    %3 = vector.multi_reduction <maximumf>, %1, %cst_3 [2] : vector<32x8x256xf32> to vector<32x8xf32>
    %cst_4 = arith.constant dense<0.000000e+00> : vector<32xf32>
    %4 = vector.multi_reduction <add>, %2, %cst_4 [1] : vector<32x8xf32> to vector<32xf32>
    %5 = vector.shape_cast %4 : vector<32xf32> to vector<32x1xf32>
    %cst_5 = arith.constant 4.8828125E-4 : f32
    %6 = vector.broadcast %cst_5 : f32 to vector<32x1xf32>
    %7 = arith.mulf %5, %6 : vector<32x1xf32>
    %cst_6 = arith.constant dense<0xFF800000> : vector<32xf32>
    %8 = vector.multi_reduction <maximumf>, %3, %cst_6 [1] : vector<32x8xf32> to vector<32xf32>
    %9 = vector.shape_cast %8 : vector<32xf32> to vector<32x1xf32>
    %10 = tpu.concatenate %7, %9 in 1 : vector<32x1xf32>, vector<32x1xf32> -> vector<32x2xf32>
    %c0_7 = arith.constant 0 : index
    %c0_8 = arith.constant 0 : index
    %11 = vector.load %arg2[%c0_7, %c0_8] : memref<2x32xf32, #tpu.memory_space<vmem>>, vector<2x32xf32>
    %cst_9 = arith.constant dense<0.000000e+00> : vector<2x2xf32>
    %12 = tpu.matmul %11, %10, %cst_9 {dimension_numbers = #tpu.dot_dimension_numbers<[1], [0], [0], [1], [0, 0, 1, 1], [], []>, precision = #tpu.contract_precision<fp32>} : vector<2x32xf32>, vector<32x2xf32>, vector<2x2xf32> -> vector<2x2xf32>
    %c0_10 = arith.constant 0 : index
    %c0_11 = arith.constant 0 : index
    %13 = vector.load %arg3[%c0_10, %c0_11] : memref<2x1xf32, #tpu.memory_space<vmem>>, vector<2x1xf32>
    %14 = vector.broadcast %13 : vector<2x1xf32> to vector<2x2xf32>
    %15 = arith.addf %12, %14 : vector<2x2xf32>
    %cst_12 = arith.constant 0.000000e+00 : f32
    %16 = vector.broadcast %cst_12 : f32 to vector<2x2xf32>
    %17 = arith.maximumf %15, %16 : vector<2x2xf32>
    %c0_13 = arith.constant 0 : index
    %c0_14 = arith.constant 0 : index
    %18 = vector.load %arg4[%c0_13, %c0_14] : memref<32x2xf32, #tpu.memory_space<vmem>>, vector<32x2xf32>
    %cst_15 = arith.constant dense<0.000000e+00> : vector<32x2xf32>
    %19 = tpu.matmul %18, %17, %cst_15 {dimension_numbers = #tpu.dot_dimension_numbers<[1], [0], [0], [1], [0, 0, 1, 1], [], []>, precision = #tpu.contract_precision<fp32>} : vector<32x2xf32>, vector<2x2xf32>, vector<32x2xf32> -> vector<32x2xf32>
    %c0_16 = arith.constant 0 : index
    %c0_17 = arith.constant 0 : index
    %20 = vector.load %arg5[%c0_16, %c0_17] : memref<32x1xf32, #tpu.memory_space<vmem>>, vector<32x1xf32>
    %21 = vector.broadcast %20 : vector<32x1xf32> to vector<32x2xf32>
    %22 = arith.addf %19, %21 : vector<32x2xf32>
    %23 = vector.extract_strided_slice %22 {offsets = [0, 0], sizes = [32, 1], strides = [1, 1]} : vector<32x2xf32> to vector<32x1xf32>
    %24 = vector.extract_strided_slice %22 {offsets = [0, 1], sizes = [32, 1], strides = [1, 1]} : vector<32x2xf32> to vector<32x1xf32>
    %25 = arith.addf %23, %24 : vector<32x1xf32>
    %26 = arith.negf %25 : vector<32x1xf32>
    %27 = math.exp %26 : vector<32x1xf32>
    %cst_18 = arith.constant 1.000000e+00 : f32
    %28 = vector.broadcast %cst_18 : f32 to vector<32x1xf32>
    %29 = arith.addf %28, %27 : vector<32x1xf32>
    %30 = arith.divf %28, %29 : vector<32x1xf32>
    %31 = vector.shape_cast %30 : vector<32x1xf32> to vector<32x1x1xf32>
    %32 = vector.broadcast %31 : vector<32x1x1xf32> to vector<32x8x256xf32>
    %33 = arith.mulf %1, %32 : vector<32x8x256xf32>
    %cst_19 = arith.constant dense<0.000000e+00> : vector<8x256xf32>
    %34 = vector.multi_reduction <add>, %33, %cst_19 [0] : vector<32x8x256xf32> to vector<8x256xf32>
    %cst_20 = arith.constant dense<0xFF800000> : vector<8x256xf32>
    %35 = vector.multi_reduction <maximumf>, %33, %cst_20 [0] : vector<32x8x256xf32> to vector<8x256xf32>
    %cst_21 = arith.constant dense<0.000000e+00> : vector<8xf32>
    %36 = vector.multi_reduction <add>, %34, %cst_21 [1] : vector<8x256xf32> to vector<8xf32>
    %37 = vector.shape_cast %36 : vector<8xf32> to vector<8x1xf32>
    %cst_22 = arith.constant 1.22070313E-4 : f32
    %38 = vector.broadcast %cst_22 : f32 to vector<8x1xf32>
    %39 = arith.mulf %37, %38 : vector<8x1xf32>
    %cst_23 = arith.constant dense<0xFF800000> : vector<8xf32>
    %40 = vector.multi_reduction <maximumf>, %35, %cst_23 [1] : vector<8x256xf32> to vector<8xf32>
    %41 = vector.shape_cast %40 : vector<8xf32> to vector<8x1xf32>
    %42 = tpu.concatenate %39, %41 in 1 : vector<8x1xf32>, vector<8x1xf32> -> vector<8x2xf32>
    %c0_24 = arith.constant 0 : index
    %c0_25 = arith.constant 0 : index
    %43 = vector.load %arg6[%c0_24, %c0_25] : memref<4x8xf32, #tpu.memory_space<vmem>>, vector<4x8xf32>
    %cst_26 = arith.constant dense<0.000000e+00> : vector<4x2xf32>
    %44 = tpu.matmul %43, %42, %cst_26 {dimension_numbers = #tpu.dot_dimension_numbers<[1], [0], [0], [1], [0, 0, 1, 1], [], []>, precision = #tpu.contract_precision<fp32>} : vector<4x8xf32>, vector<8x2xf32>, vector<4x2xf32> -> vector<4x2xf32>
    %c0_27 = arith.constant 0 : index
    %c0_28 = arith.constant 0 : index
    %45 = vector.load %arg7[%c0_27, %c0_28] : memref<4x1xf32, #tpu.memory_space<vmem>>, vector<4x1xf32>
    %46 = vector.broadcast %45 : vector<4x1xf32> to vector<4x2xf32>
    %47 = arith.addf %44, %46 : vector<4x2xf32>
    %cst_29 = arith.constant 0.000000e+00 : f32
    %48 = vector.broadcast %cst_29 : f32 to vector<4x2xf32>
    %49 = arith.maximumf %47, %48 : vector<4x2xf32>
    %c0_30 = arith.constant 0 : index
    %c0_31 = arith.constant 0 : index
    %50 = vector.load %arg8[%c0_30, %c0_31] : memref<8x4xf32, #tpu.memory_space<vmem>>, vector<8x4xf32>
    %cst_32 = arith.constant dense<0.000000e+00> : vector<8x2xf32>
    %51 = tpu.matmul %50, %49, %cst_32 {dimension_numbers = #tpu.dot_dimension_numbers<[1], [0], [0], [1], [0, 0, 1, 1], [], []>, precision = #tpu.contract_precision<fp32>} : vector<8x4xf32>, vector<4x2xf32>, vector<8x2xf32> -> vector<8x2xf32>
    %c0_33 = arith.constant 0 : index
    %c0_34 = arith.constant 0 : index
    %52 = vector.load %arg9[%c0_33, %c0_34] : memref<8x1xf32, #tpu.memory_space<vmem>>, vector<8x1xf32>
    %53 = vector.broadcast %52 : vector<8x1xf32> to vector<8x2xf32>
    %54 = arith.addf %51, %53 : vector<8x2xf32>
    %55 = vector.extract_strided_slice %54 {offsets = [0, 0], sizes = [8, 1], strides = [1, 1]} : vector<8x2xf32> to vector<8x1xf32>
    %56 = vector.extract_strided_slice %54 {offsets = [0, 1], sizes = [8, 1], strides = [1, 1]} : vector<8x2xf32> to vector<8x1xf32>
    %57 = arith.addf %55, %56 : vector<8x1xf32>
    %58 = arith.negf %57 : vector<8x1xf32>
    %59 = math.exp %58 : vector<8x1xf32>
    %cst_35 = arith.constant 1.000000e+00 : f32
    %60 = vector.broadcast %cst_35 : f32 to vector<8x1xf32>
    %61 = arith.addf %60, %59 : vector<8x1xf32>
    %62 = arith.divf %60, %61 : vector<8x1xf32>
    %63 = vector.broadcast %62 : vector<8x1xf32> to vector<8x256xf32>
    %64 = arith.mulf %35, %63 : vector<8x256xf32>
    %cst_36 = arith.constant 3.125000e-02 : f32
    %65 = vector.broadcast %cst_36 : f32 to vector<8x1xf32>
    %66 = arith.mulf %62, %65 : vector<8x1xf32>
    %67 = vector.broadcast %66 : vector<8x1xf32> to vector<8x256xf32>
    %68 = arith.mulf %34, %67 : vector<8x256xf32>
    %cst_37 = arith.constant 0.000000e+00 : f32
    %69 = vector.broadcast %cst_37 : f32 to vector<3x256xf32>
    %70 = tpu.concatenate %69, %64, %69 in 0 : vector<3x256xf32>, vector<8x256xf32>, vector<3x256xf32> -> vector<14x256xf32>
    %71 = tpu.concatenate %69, %68, %69 in 0 : vector<3x256xf32>, vector<8x256xf32>, vector<3x256xf32> -> vector<14x256xf32>
    %72 = vector.extract_strided_slice %70 {offsets = [0, 0], sizes = [8, 256], strides = [1, 1]} : vector<14x256xf32> to vector<8x256xf32>
    %73 = vector.extract_strided_slice %70 {offsets = [1, 0], sizes = [8, 256], strides = [1, 1]} : vector<14x256xf32> to vector<8x256xf32>
    %74 = vector.extract_strided_slice %70 {offsets = [2, 0], sizes = [8, 256], strides = [1, 1]} : vector<14x256xf32> to vector<8x256xf32>
    %75 = vector.extract_strided_slice %70 {offsets = [3, 0], sizes = [8, 256], strides = [1, 1]} : vector<14x256xf32> to vector<8x256xf32>
    %76 = vector.extract_strided_slice %70 {offsets = [4, 0], sizes = [8, 256], strides = [1, 1]} : vector<14x256xf32> to vector<8x256xf32>
    %77 = vector.extract_strided_slice %70 {offsets = [5, 0], sizes = [8, 256], strides = [1, 1]} : vector<14x256xf32> to vector<8x256xf32>
    %78 = vector.extract_strided_slice %70 {offsets = [6, 0], sizes = [8, 256], strides = [1, 1]} : vector<14x256xf32> to vector<8x256xf32>
    %79 = vector.extract_strided_slice %71 {offsets = [0, 0], sizes = [8, 256], strides = [1, 1]} : vector<14x256xf32> to vector<8x256xf32>
    %80 = vector.extract_strided_slice %71 {offsets = [1, 0], sizes = [8, 256], strides = [1, 1]} : vector<14x256xf32> to vector<8x256xf32>
    %81 = vector.extract_strided_slice %71 {offsets = [2, 0], sizes = [8, 256], strides = [1, 1]} : vector<14x256xf32> to vector<8x256xf32>
    %82 = vector.extract_strided_slice %71 {offsets = [3, 0], sizes = [8, 256], strides = [1, 1]} : vector<14x256xf32> to vector<8x256xf32>
    %83 = vector.extract_strided_slice %71 {offsets = [4, 0], sizes = [8, 256], strides = [1, 1]} : vector<14x256xf32> to vector<8x256xf32>
    %84 = vector.extract_strided_slice %71 {offsets = [5, 0], sizes = [8, 256], strides = [1, 1]} : vector<14x256xf32> to vector<8x256xf32>
    %85 = vector.extract_strided_slice %71 {offsets = [6, 0], sizes = [8, 256], strides = [1, 1]} : vector<14x256xf32> to vector<8x256xf32>
    %86 = tpu.concatenate %72, %73, %74, %75, %76, %77, %78, %79, %80, %81, %82, %83, %84, %85 in 1 : vector<8x256xf32>, vector<8x256xf32>, vector<8x256xf32>, vector<8x256xf32>, vector<8x256xf32>, vector<8x256xf32>, vector<8x256xf32>, vector<8x256xf32>, vector<8x256xf32>, vector<8x256xf32>, vector<8x256xf32>, vector<8x256xf32>, vector<8x256xf32>, vector<8x256xf32> -> vector<8x3584xf32>
    %87 = arith.truncf %86 : vector<8x3584xf32> to vector<8x3584xbf16>
    %c0_38 = arith.constant 0 : index
    %c0_39 = arith.constant 0 : index
    %88 = vector.load %arg10[%c0_38, %c0_39] : memref<3584x256xbf16, #tpu.memory_space<vmem>>, vector<3584x256xbf16>
    %cst_40 = arith.constant dense<0.000000e+00> : vector<8x256xf32>
    %89 = tpu.matmul %87, %88, %cst_40 {dimension_numbers = #tpu.dot_dimension_numbers<[1], [0], [0], [1], [0, 0, 1, 1], [], []>} : vector<8x3584xbf16>, vector<3584x256xbf16>, vector<8x256xf32> -> vector<8x256xf32>
    %c0_41 = arith.constant 0 : index
    %c0_42 = arith.constant 0 : index
    %90 = memref.load %arg11[%c0_41, %c0_42] : memref<1x1xf32, #tpu.memory_space<smem>>
    %91 = vector.broadcast %90 : f32 to vector<8x256xf32>
    %92 = arith.addf %89, %91 : vector<8x256xf32>
    %93 = arith.negf %92 : vector<8x256xf32>
    %94 = math.exp %93 : vector<8x256xf32>
    %cst_43 = arith.constant 1.000000e+00 : f32
    %95 = vector.broadcast %cst_43 : f32 to vector<8x256xf32>
    %96 = arith.addf %95, %94 : vector<8x256xf32>
    %97 = arith.divf %95, %96 : vector<8x256xf32>
    %98 = vector.broadcast %62 : vector<8x1xf32> to vector<8x256xf32>
    %99 = arith.mulf %98, %97 : vector<8x256xf32>
    %100 = vector.shape_cast %99 : vector<8x256xf32> to vector<1x8x256xf32>
    %101 = vector.broadcast %100 : vector<1x8x256xf32> to vector<32x8x256xf32>
    %102 = arith.mulf %33, %101 : vector<32x8x256xf32>
    %103 = arith.addf %1, %102 : vector<32x8x256xf32>
    %c0_44 = arith.constant 0 : index
    %c0_45 = arith.constant 0 : index
    %c0_46 = arith.constant 0 : index
    %c0_47 = arith.constant 0 : index
    %104 = vector.load %arg12[%c0_44, %c0_45, %c0_46, %c0_47] : memref<1x32x8x256xf32, #tpu.memory_space<vmem>>, vector<1x32x8x256xf32>
    %105 = vector.shape_cast %104 : vector<1x32x8x256xf32> to vector<32x8x256xf32>
    %106 = vector.shape_cast %103 : vector<32x8x256xf32> to vector<1x32x8x256xf32>
    tpu.vector_store %arg12[%c0_44, %c0_45, %c0_46, %c0_47], %106 {strides = array<i32>} : memref<1x32x8x256xf32, #tpu.memory_space<vmem>>, vector<1x32x8x256xf32>,
    return
  }
  func.func @transform_0(%arg0: i32) -> (i32, i32, i32, i32) {
    %c0_i32 = arith.constant 0 : i32
    %c0_i32_0 = arith.constant 0 : i32
    %c0_i32_1 = arith.constant 0 : i32
    %c0_i32_2 = arith.constant 0 : i32
    return %arg0, %c0_i32, %c0_i32_0, %c0_i32_1 : i32, i32, i32, i32
  }
  func.func @transform_1(%arg0: i32) -> (i32, i32) {
    %c0_i32 = arith.constant 0 : i32
    %c0_i32_0 = arith.constant 0 : i32
    %c0_i32_1 = arith.constant 0 : i32
    return %c0_i32, %c0_i32_0 : i32, i32
  }
  func.func @transform_2(%arg0: i32) -> (i32, i32) {
    %c0_i32 = arith.constant 0 : i32
    %c0_i32_0 = arith.constant 0 : i32
    %c0_i32_1 = arith.constant 0 : i32
    return %c0_i32, %c0_i32_0 : i32, i32
  }
  func.func @transform_3(%arg0: i32) -> (i32, i32) {
    %c0_i32 = arith.constant 0 : i32
    %c0_i32_0 = arith.constant 0 : i32
    %c0_i32_1 = arith.constant 0 : i32
    return %c0_i32, %c0_i32_0 : i32, i32
  }
  func.func @transform_4(%arg0: i32) -> (i32, i32) {
    %c0_i32 = arith.constant 0 : i32
    %c0_i32_0 = arith.constant 0 : i32
    %c0_i32_1 = arith.constant 0 : i32
    return %c0_i32, %c0_i32_0 : i32, i32
  }
  func.func @transform_5(%arg0: i32) -> (i32, i32) {
    %c0_i32 = arith.constant 0 : i32
    %c0_i32_0 = arith.constant 0 : i32
    %c0_i32_1 = arith.constant 0 : i32
    return %c0_i32, %c0_i32_0 : i32, i32
  }
  func.func @transform_6(%arg0: i32) -> (i32, i32) {
    %c0_i32 = arith.constant 0 : i32
    %c0_i32_0 = arith.constant 0 : i32
    %c0_i32_1 = arith.constant 0 : i32
    return %c0_i32, %c0_i32_0 : i32, i32
  }
  func.func @transform_7(%arg0: i32) -> (i32, i32) {
    %c0_i32 = arith.constant 0 : i32
    %c0_i32_0 = arith.constant 0 : i32
    %c0_i32_1 = arith.constant 0 : i32
    return %c0_i32, %c0_i32_0 : i32, i32
  }
  func.func @transform_8(%arg0: i32) -> (i32, i32) {
    %c0_i32 = arith.constant 0 : i32
    %c0_i32_0 = arith.constant 0 : i32
    %c0_i32_1 = arith.constant 0 : i32
    return %c0_i32, %c0_i32_0 : i32, i32
  }
  func.func @transform_9(%arg0: i32) -> (i32, i32) {
    %c0_i32 = arith.constant 0 : i32
    %c0_i32_0 = arith.constant 0 : i32
    %c0_i32_1 = arith.constant 0 : i32
    return %c0_i32, %c0_i32_0 : i32, i32
  }
  func.func @transform_10(%arg0: i32) -> (i32, i32) {
    %c0_i32 = arith.constant 0 : i32
    %c0_i32_0 = arith.constant 0 : i32
    %c0_i32_1 = arith.constant 0 : i32
    return %c0_i32, %c0_i32_0 : i32, i32
  }
  func.func @transform_11(%arg0: i32) -> (i32, i32, i32, i32) {
    %c0_i32 = arith.constant 0 : i32
    %c0_i32_0 = arith.constant 0 : i32
    %c0_i32_1 = arith.constant 0 : i32
    %c0_i32_2 = arith.constant 0 : i32
    return %arg0, %c0_i32, %c0_i32_0, %c0_i32_1 : i32, i32, i32, i32
  }
}

</mosaic_0001>

<llo_original>
// kernel: _lambda_.1
$region0: #{_lambda_.1}
  #allocation0 [shape = 'u32[]', space=smem, size = 0x4, offset = 0x4, fixed_abs, tag = 'smem constant byte address 0x4 - core index']
  #allocation1 [shape = 'u32[72,128]{1,0:T(1,128)}', space=vmem, size = 0x9000, scoped, tag = 'internal scratch']
  #allocation2 [shape = 'f32[1,1]{1,0:T(1,128)S(6)}', space=smem, size = 0x200, scoped, tag = 'scoped memory for _lambda_.1']
  %s0 = inlined_call_operand.vmem [shape: f32[2,32,8,256], index: 0, kind: input, shape index: {}]
  %s1 = inlined_call_operand.vmem [shape: f32[2,32], index: 1, kind: input, shape index: {}]
  %s2 = inlined_call_operand.vmem [shape: f32[2,1], index: 2, kind: input, shape index: {}]
  %s3 = inlined_call_operand.vmem [shape: f32[32,2], index: 3, kind: input, shape index: {}]
  %s4 = inlined_call_operand.vmem [shape: f32[32,1], index: 4, kind: input, shape index: {}]
  %s5 = inlined_call_operand.vmem [shape: f32[4,8], index: 5, kind: input, shape index: {}]
  %s6 = inlined_call_operand.vmem [shape: f32[4,1], index: 6, kind: input, shape index: {}]
  %s7 = inlined_call_operand.vmem [shape: f32[8,4], index: 7, kind: input, shape index: {}]
  %s8 = inlined_call_operand.vmem [shape: f32[8,1], index: 8, kind: input, shape index: {}]
  %s9 = inlined_call_operand.vmem [shape: bf16[3584,256], index: 9, kind: input, shape index: {}]
  %s10 = inlined_call_operand.<no memory space> [shape: f32[1,1], index: 10, kind: input, shape index: {}]
  %s11 = inlined_call_operand.vmem [shape: f32[2,32,8,256], index: 11, kind: output, shape index: {}]
  %s12 = sld [smem:[#allocation0]]
  $region77: #{_lambda_.1} parent=0
    _
  %s14 = ssub.s32 1, %s12
  %s15 = scalar_select 0, %s14, %s12
  %16 = sst [smem:[#allocation2]] %s10
  loop: start=0, step=1, limit=4
  $region2: #{_lambda_.1} parent=0 // loop_pre_header
    _
  $region3: #{_lambda_.1} parent=0 // loop_header
    %s18 = sphi 0, %s22
    %p19 = scmp.ge.s32.totalorder %s18, 4
    %s28 = sphi 0, %s30
    %s31 = sphi 0, %s28
    %s32 = sphi 0, %s31
    %s48 = sphi 0, %s32
    %s52 = sphi 0, %s52
    %s54 = sphi 0, %s52
    %s55 = sphi 0, %s54
    %s69 = sphi 0, %s55
    %s73 = sphi 0, %s73
    %s75 = sphi 0, %s73
    %s76 = sphi 0, %s75
    %s90 = sphi 0, %s76
    %s94 = sphi 0, %s94
    %s96 = sphi 0, %s94
    %s97 = sphi 0, %s96
    %s111 = sphi 0, %s97
    %s115 = sphi 0, %s115
    %s117 = sphi 0, %s115
    %s118 = sphi 0, %s117
    %s132 = sphi 0, %s118
    %s136 = sphi 0, %s136
    %s138 = sphi 0, %s136
    %s139 = sphi 0, %s138
    %s153 = sphi 0, %s139
    %s157 = sphi 0, %s157
    %s159 = sphi 0, %s157
    %s160 = sphi 0, %s159
    %s174 = sphi 0, %s160
    %s178 = sphi 0, %s178
    %s180 = sphi 0, %s178
    %s181 = sphi 0, %s180
    %s195 = sphi 0, %s181
    %s199 = sphi 0, %s199
    %s201 = sphi 0, %s199
    %s202 = sphi 0, %s201
    %s216 = sphi 0, %s202
    %s220 = sphi 0, %s220
    %s222 = sphi 0, %s220
    %s223 = sphi 0, %s222
    %s237 = sphi 0, %s223
    %s241 = sphi 0, %s241
    %s243 = sphi 0, %s241
    %s244 = sphi 0, %s243
    %s258 = sphi 0, %s244
    %s264 = sphi 0, %s266
    %s267 = sphi 0, %s264
    %s268 = sphi 0, %s267
    %s284 = sphi 0, %s268
  $region4: #{_lambda_.1} parent=0 // loop_header_branch
    %21 = sbr.rel (%p19) target = $region8
  $region5: #{_lambda_.1} parent=0 // loop_body
    %s23 = ssub.s32 %s18, 1
    %s24 = ssub.s32 %s18, 2
    %s25 = sadd.s32 %s18, 1
    %s26 = ssub.s32 %s18, %s25
    %p27 = scmp.eq.s32.totalorder %s26, 0
    %s29 = sadd.s32 %s28, 1
    %s30 = scalar_select %p27, %s28, %s29
    %p33 = pneg %p27
    %p34 = scmp.eq.s32.totalorder %s18, 1
    %p35 = por %p33, %p34
    %p36 = scmp.ne.s32.totalorder %s28, %s31
    %p37 = scmp.eq.s32.totalorder %s18, 0
    %p38 = por %p36, %p37
    %p39 = scmp.ne.s32.totalorder %s28, %s31
    %p40 = scmp.eq.s32.totalorder %s23, 1
    %p41 = por %p39, %p40
    %p42 = scmp.ne.s32.totalorder %s31, %s32
    %p43 = scmp.eq.s32.totalorder %s23, 0
    %p44 = por %p42, %p43
    %p45 = scmp.ne.s32.totalorder %s31, %s32
    %p46 = scmp.eq.s32.totalorder %s24, 1
    %p47 = por %p45, %p46
    %p49 = scmp.ne.s32.totalorder %s32, %s48
    %p50 = scmp.eq.s32.totalorder %s24, 0
    %p51 = por %p49, %p50
    %s53 = sadd.s32 %s52, 1
    %p56 = scmp.eq.s32.totalorder %s18, 1
    %p57 = scmp.ne.s32.totalorder %s52, %s54
    %p58 = scmp.eq.s32.totalorder %s18, 0
    %p59 = por %p57, %p58
    %p60 = scmp.ne.s32.totalorder %s52, %s54
    %p61 = scmp.eq.s32.totalorder %s23, 1
    %p62 = por %p60, %p61
    %p63 = scmp.ne.s32.totalorder %s54, %s55
    %p64 = scmp.eq.s32.totalorder %s23, 0
    %p65 = por %p63, %p64
    %p66 = scmp.ne.s32.totalorder %s54, %s55
    %p67 = scmp.eq.s32.totalorder %s24, 1
    %p68 = por %p66, %p67
    %p70 = scmp.ne.s32.totalorder %s55, %s69
    %p71 = scmp.eq.s32.totalorder %s24, 0
    %p72 = por %p70, %p71
    %s74 = sadd.s32 %s73, 1
    %p77 = scmp.eq.s32.totalorder %s18, 1
    %p78 = scmp.ne.s32.totalorder %s73, %s75
    %p79 = scmp.eq.s32.totalorder %s18, 0
    %p80 = por %p78, %p79
    %p81 = scmp.ne.s32.totalorder %s73, %s75
    %p82 = scmp.eq.s32.totalorder %s23, 1
    %p83 = por %p81, %p82
    %p84 = scmp.ne.s32.totalorder %s75, %s76
    %p85 = scmp.eq.s32.totalorder %s23, 0
    %p86 = por %p84, %p85
    %p87 = scmp.ne.s32.totalorder %s75, %s76
    %p88 = scmp.eq.s32.totalorder %s24, 1
    %p89 = por %p87, %p88
    %p91 = scmp.ne.s32.totalorder %s76, %s90
    %p92 = scmp.eq.s32.totalorder %s24, 0
    %p93 = por %p91, %p92
    %s95 = sadd.s32 %s94, 1
    %p98 = scmp.eq.s32.totalorder %s18, 1
    %p99 = scmp.ne.s32.totalorder %s94, %s96
    %p100 = scmp.eq.s32.totalorder %s18, 0
    %p101 = por %p99, %p100
    %p102 = scmp.ne.s32.totalorder %s94, %s96
    %p103 = scmp.eq.s32.totalorder %s23, 1
    %p104 = por %p102, %p103
    %p105 = scmp.ne.s32.totalorder %s96, %s97
    %p106 = scmp.eq.s32.totalorder %s23, 0
    %p107 = por %p105, %p106
    %p108 = scmp.ne.s32.totalorder %s96, %s97
    %p109 = scmp.eq.s32.totalorder %s24, 1
    %p110 = por %p108, %p109
    %p112 = scmp.ne.s32.totalorder %s97, %s111
    %p113 = scmp.eq.s32.totalorder %s24, 0
    %p114 = por %p112, %p113
    %s116 = sadd.s32 %s115, 1
    %p119 = scmp.eq.s32.totalorder %s18, 1
    %p120 = scmp.ne.s32.totalorder %s115, %s117
    %p121 = scmp.eq.s32.totalorder %s18, 0
    %p122 = por %p120, %p121
    %p123 = scmp.ne.s32.totalorder %s115, %s117
    %p124 = scmp.eq.s32.totalorder %s23, 1
    %p125 = por %p123, %p124
    %p126 = scmp.ne.s32.totalorder %s117, %s118
    %p127 = scmp.eq.s32.totalorder %s23, 0
    %p128 = por %p126, %p127
    %p129 = scmp.ne.s32.totalorder %s117, %s118
    %p130 = scmp.eq.s32.totalorder %s24, 1
    %p131 = por %p129, %p130
    %p133 = scmp.ne.s32.totalorder %s118, %s132
    %p134 = scmp.eq.s32.totalorder %s24, 0
    %p135 = por %p133, %p134
    %s137 = sadd.s32 %s136, 1
    %p140 = scmp.eq.s32.totalorder %s18, 1
    %p141 = scmp.ne.s32.totalorder %s136, %s138
    %p142 = scmp.eq.s32.totalorder %s18, 0
    %p143 = por %p141, %p142
    %p144 = scmp.ne.s32.totalorder %s136, %s138
    %p145 = scmp.eq.s32.totalorder %s23, 1
    %p146 = por %p144, %p145
    %p147 = scmp.ne.s32.totalorder %s138, %s139
    %p148 = scmp.eq.s32.totalorder %s23, 0
    %p149 = por %p147, %p148
    %p150 = scmp.ne.s32.totalorder %s138, %s139
    %p151 = scmp.eq.s32.totalorder %s24, 1
    %p152 = por %p150, %p151
    %p154 = scmp.ne.s32.totalorder %s139, %s153
    %p155 = scmp.eq.s32.totalorder %s24, 0
    %p156 = por %p154, %p155
    %s158 = sadd.s32 %s157, 1
    %p161 = scmp.eq.s32.totalorder %s18, 1
    %p162 = scmp.ne.s32.totalorder %s157, %s159
    %p163 = scmp.eq.s32.totalorder %s18, 0
    %p164 = por %p162, %p163
    %p165 = scmp.ne.s32.totalorder %s157, %s159
    %p166 = scmp.eq.s32.totalorder %s23, 1
    %p167 = por %p165, %p166
    %p168 = scmp.ne.s32.totalorder %s159, %s160
    %p169 = scmp.eq.s32.totalorder %s23, 0
    %p170 = por %p168, %p169
    %p171 = scmp.ne.s32.totalorder %s159, %s160
    %p172 = scmp.eq.s32.totalorder %s24, 1
    %p173 = por %p171, %p172
    %p175 = scmp.ne.s32.totalorder %s160, %s174
    %p176 = scmp.eq.s32.totalorder %s24, 0
    %p177 = por %p175, %p176
    %s179 = sadd.s32 %s178, 1
    %p182 = scmp.eq.s32.totalorder %s18, 1
    %p183 = scmp.ne.s32.totalorder %s178, %s180
    %p184 = scmp.eq.s32.totalorder %s18, 0
    %p185 = por %p183, %p184
    %p186 = scmp.ne.s32.totalorder %s178, %s180
    %p187 = scmp.eq.s32.totalorder %s23, 1
    %p188 = por %p186, %p187
    %p189 = scmp.ne.s32.totalorder %s180, %s181
    %p190 = scmp.eq.s32.totalorder %s23, 0
    %p191 = por %p189, %p190
    %p192 = scmp.ne.s32.totalorder %s180, %s181
    %p193 = scmp.eq.s32.totalorder %s24, 1
    %p194 = por %p192, %p193
    %p196 = scmp.ne.s32.totalorder %s181, %s195
    %p197 = scmp.eq.s32.totalorder %s24, 0
    %p198 = por %p196, %p197
    %s200 = sadd.s32 %s199, 1
    %p203 = scmp.eq.s32.totalorder %s18, 1
    %p204 = scmp.ne.s32.totalorder %s199, %s201
    %p205 = scmp.eq.s32.totalorder %s18, 0
    %p206 = por %p204, %p205
    %p207 = scmp.ne.s32.totalorder %s199, %s201
    %p208 = scmp.eq.s32.totalorder %s23, 1
    %p209 = por %p207, %p208
    %p210 = scmp.ne.s32.totalorder %s201, %s202
    %p211 = scmp.eq.s32.totalorder %s23, 0
    %p212 = por %p210, %p211
    %p213 = scmp.ne.s32.totalorder %s201, %s202
    %p214 = scmp.eq.s32.totalorder %s24, 1
    %p215 = por %p213, %p214
    %p217 = scmp.ne.s32.totalorder %s202, %s216
    %p218 = scmp.eq.s32.totalorder %s24, 0
    %p219 = por %p217, %p218
    %s221 = sadd.s32 %s220, 1
    %p224 = scmp.eq.s32.totalorder %s18, 1
    %p225 = scmp.ne.s32.totalorder %s220, %s222
    %p226 = scmp.eq.s32.totalorder %s18, 0
    %p227 = por %p225, %p226
    %p228 = scmp.ne.s32.totalorder %s220, %s222
    %p229 = scmp.eq.s32.totalorder %s23, 1
    %p230 = por %p228, %p229
    %p231 = scmp.ne.s32.totalorder %s222, %s223
    %p232 = scmp.eq.s32.totalorder %s23, 0
    %p233 = por %p231, %p232
    %p234 = scmp.ne.s32.totalorder %s222, %s223
    %p235 = scmp.eq.s32.totalorder %s24, 1
    %p236 = por %p234, %p235
    %p238 = scmp.ne.s32.totalorder %s223, %s237
    %p239 = scmp.eq.s32.totalorder %s24, 0
    %p240 = por %p238, %p239
    %s242 = sadd.s32 %s241, 1
    %p245 = scmp.eq.s32.totalorder %s18, 1
    %p246 = scmp.ne.s32.totalorder %s241, %s243
    %p247 = scmp.eq.s32.totalorder %s18, 0
    %p248 = por %p246, %p247
    %p249 = scmp.ne.s32.totalorder %s241, %s243
    %p250 = scmp.eq.s32.totalorder %s23, 1
    %p251 = por %p249, %p250
    %p252 = scmp.ne.s32.totalorder %s243, %s244
    %p253 = scmp.eq.s32.totalorder %s23, 0
    %p254 = por %p252, %p253
    %p255 = scmp.ne.s32.totalorder %s243, %s244
    %p256 = scmp.eq.s32.totalorder %s24, 1
    %p257 = por %p255, %p256
    %p259 = scmp.ne.s32.totalorder %s244, %s258
    %p260 = scmp.eq.s32.totalorder %s24, 0
    %p261 = por %p259, %p260
    %s262 = ssub.s32 %s18, %s25
    %p263 = scmp.eq.s32.totalorder %s262, 0
    %s265 = sadd.s32 %s264, 1
    %s266 = scalar_select %p263, %s264, %s265
    %p269 = pneg %p263
    %p270 = scmp.eq.s32.totalorder %s18, 1
    %p271 = por %p269, %p270
    %p272 = scmp.ne.s32.totalorder %s264, %s267
    %p273 = scmp.eq.s32.totalorder %s18, 0
    %p274 = por %p272, %p273
    %p275 = scmp.ne.s32.totalorder %s264, %s267
    %p276 = scmp.eq.s32.totalorder %s23, 1
    %p277 = por %p275, %p276
    %p278 = scmp.ne.s32.totalorder %s267, %s268
    %p279 = scmp.eq.s32.totalorder %s23, 0
    %p280 = por %p278, %p279
    %p281 = scmp.ne.s32.totalorder %s267, %s268
    %p282 = scmp.eq.s32.totalorder %s24, 1
    %p283 = por %p281, %p282
    %p285 = scmp.ne.s32.totalorder %s268, %s284
    %p286 = scmp.eq.s32.totalorder %s24, 0
    %p287 = por %p285, %p286
    %p288 = scmp.le.s32.totalorder 1, %s18
    %p289 = scmp.lt.s32.totalorder %s18, 3
    %p290 = pnand %p288, %p289
    %p291 = pneg %p290
    // Predicated region
    $region9: #{_lambda_.1} parent=5 // pred_check
      _
    $region10: #{_lambda_.1} parent=5 // pred_check_branch
      %293 = sbr.rel (%p290) target = $region12
    $region11: #{_lambda_.1} parent=5 // pred_region
      %s294 = ssub.s32 %s18, 1
      // Predicated region
      $region13: #{_lambda_.1} parent=11 // pred_check
        %p295 = pneg %p65
      $region14: #{_lambda_.1} parent=11 // pred_check_branch
        %297 = sbr.rel (%p295) target = $region16
      $region15: #{_lambda_.1} parent=11 // pred_region
        _
      $region16: #{_lambda_.1} parent=11 // pred_fallthru
        _
      // Predicated region
      $region17: #{_lambda_.1} parent=11 // pred_check
        %p298 = pneg %p86
      $region18: #{_lambda_.1} parent=11 // pred_check_branch
        %300 = sbr.rel (%p298) target = $region20
      $region19: #{_lambda_.1} parent=11 // pred_region
        _
      $region20: #{_lambda_.1} parent=11 // pred_fallthru
        _
      // Predicated region
      $region21: #{_lambda_.1} parent=11 // pred_check
        %p301 = pneg %p107
      $region22: #{_lambda_.1} parent=11 // pred_check_branch
        %303 = sbr.rel (%p301) target = $region24
      $region23: #{_lambda_.1} parent=11 // pred_region
        _
      $region24: #{_lambda_.1} parent=11 // pred_fallthru
        _
      // Predicated region
      $region25: #{_lambda_.1} parent=11 // pred_check
        %p304 = pneg %p128
      $region26: #{_lambda_.1} parent=11 // pred_check_branch
        %306 = sbr.rel (%p304) target = $region28
      $region27: #{_lambda_.1} parent=11 // pred_region
        _
      $region28: #{_lambda_.1} parent=11 // pred_fallthru
        _
      // Predicated region
      $region29: #{_lambda_.1} parent=11 // pred_check
        %p307 = pneg %p149
      $region30: #{_lambda_.1} parent=11 // pred_check_branch
        %309 = sbr.rel (%p307) target = $region32
      $region31: #{_lambda_.1} parent=11 // pred_region
        _
      $region32: #{_lambda_.1} parent=11 // pred_fallthru
        _
      // Predicated region
      $region33: #{_lambda_.1} parent=11 // pred_check
        %p310 = pneg %p170
      $region34: #{_lambda_.1} parent=11 // pred_check_branch
        %312 = sbr.rel (%p310) target = $region36
      $region35: #{_lambda_.1} parent=11 // pred_region
        _
      $region36: #{_lambda_.1} parent=11 // pred_fallthru
        _
      // Predicated region
      $region37: #{_lambda_.1} parent=11 // pred_check
        %p313 = pneg %p191
      $region38: #{_lambda_.1} parent=11 // pred_check_branch
        %315 = sbr.rel (%p313) target = $region40
      $region39: #{_lambda_.1} parent=11 // pred_region
        _
      $region40: #{_lambda_.1} parent=11 // pred_fallthru
        _
      // Predicated region
      $region41: #{_lambda_.1} parent=11 // pred_check
        %p316 = pneg %p212
      $region42: #{_lambda_.1} parent=11 // pred_check_branch
        %318 = sbr.rel (%p316) target = $region44
      $region43: #{_lambda_.1} parent=11 // pred_region
        _
      $region44: #{_lambda_.1} parent=11 // pred_fallthru
        _
      // Predicated region
      $region45: #{_lambda_.1} parent=11 // pred_check
        %p319 = pneg %p233
      $region46: #{_lambda_.1} parent=11 // pred_check_branch
        %321 = sbr.rel (%p319) target = $region48
      $region47: #{_lambda_.1} parent=11 // pred_region
        _
      $region48: #{_lambda_.1} parent=11 // pred_fallthru
        _
      // Predicated region
      $region49: #{_lambda_.1} parent=11 // pred_check
        %p322 = pneg %p254
      $region50: #{_lambda_.1} parent=11 // pred_check_branch
        %324 = sbr.rel (%p322) target = $region52
      $region51: #{_lambda_.1} parent=11 // pred_region
        _
      $region52: #{_lambda_.1} parent=11 // pred_fallthru
        _
    $region12: #{_lambda_.1} parent=5 // pred_fallthru
      _
    %p325 = scmp.lt.s32.totalorder %s18, 2
    // Predicated region
    $region53: #{_lambda_.1} parent=5 // pred_check
      %p326 = pneg %p325
    $region54: #{_lambda_.1} parent=5 // pred_check_branch
      %328 = sbr.rel (%p326) target = $region56
    $region55: #{_lambda_.1} parent=5 // pred_region
      // Predicated region
      $region57: #{_lambda_.1} parent=55 // pred_check
        %p329 = pneg %p38
      $region58: #{_lambda_.1} parent=55 // pred_check_branch
        %331 = sbr.rel (%p329) target = $region60
      $region59: #{_lambda_.1} parent=55 // pred_region
        %p332 = scmp.lt.s32.totalorder %s18, 1
        %s333 = scalar_select %p332, %s18, 1
        %s334 = smul.addr %s333, 64
        %s335 = smul.addr %s334, 8
        %s336 = scalar_lea.vmem %s0, %s335
      $region60: #{_lambda_.1} parent=55 // pred_fallthru
        _
    $region56: #{_lambda_.1} parent=5 // pred_fallthru
      _
    %p337 = scmp.le.s32.totalorder 1, %s18
    %p338 = scmp.lt.s32.totalorder %s18, 3
    %p339 = pnand %p337, %p338
    %p340 = pneg %p339
    // Predicated region
    $region61: #{_lambda_.1} parent=5 // pred_check
      _
    $region62: #{_lambda_.1} parent=5 // pred_check_branch
      %342 = sbr.rel (%p339) target = $region64
    $region63: #{_lambda_.1} parent=5 // pred_region
      %s343 = ssub.s32 %s18, 1
      %p344 = scmp.lt.s32.totalorder %s23, 1
      %s345 = scalar_select %p344, %s23, 1
      %s346 = smul.addr %s345, 64
      %s347 = smul.addr %s346, 8
      %s348 = scalar_lea.vmem %s0, %s347
      %p349 = pneg %p44
      %p350 = pneg %p41
      %p351 = pneg %p65
      %p352 = pneg %p62
      %p353 = pneg %p86
      %p354 = pneg %p83
      %p355 = pneg %p107
      %p356 = pneg %p104
      %p357 = pneg %p128
      %p358 = pneg %p125
      %p359 = pneg %p149
      %p360 = pneg %p146
      %p361 = pneg %p170
      %p362 = pneg %p167
      %p363 = pneg %p191
      %p364 = pneg %p188
      %p365 = pneg %p212
      %p366 = pneg %p209
      %p367 = pneg %p233
      %p368 = pneg %p230
      %p369 = pneg %p254
      %p370 = pneg %p251
      %p371 = pneg %p280
      %p372 = pneg %p277
      %p373 = scmp.lt.s32.totalorder %s23, 1
      %s374 = scalar_select %p373, %s23, 1
      %s375 = smul.addr %s374, 64
      %s376 = smul.addr %s375, 8
      %s377 = scalar_lea.vmem %s11, %s376
      %p378 = scmp.lt.s32.totalorder %s23, 1
      %s379 = scalar_select %p378, %s23, 1
      %s380 = smul.addr %s379, 64
      %s381 = smul.addr %s380, 8
      %s382 = scalar_lea.vmem %s0, %s381
      %p383 = scmp.lt.s32.totalorder %s23, 1
      %s384 = scalar_select %p383, %s23, 1
      %s385 = smul.addr %s384, 64
      %s386 = smul.addr %s385, 8
      %s387 = scalar_lea.vmem %s11, %s386
      %v388 = vld [vmem:[%s382] sm:$0xff]
      %v389 = vld [vmem:[%s382 + $0x8] sm:$0xff]
      %v390 = vld [vmem:[%s382 + $0x10] sm:$0xff]
      %v391 = vld [vmem:[%s382 + $0x18] sm:$0xff]
      %v392 = vld [vmem:[%s382 + $0x20] sm:$0xff]
      %v393 = vld [vmem:[%s382 + $0x28] sm:$0xff]
      %v394 = vld [vmem:[%s382 + $0x30] sm:$0xff]
      %v395 = vld [vmem:[%s382 + $0x38] sm:$0xff]
      %v396 = vld [vmem:[%s382 + $0x40] sm:$0xff]
      %v397 = vld [vmem:[%s382 + $0x48] sm:$0xff]
      %v398 = vld [vmem:[%s382 + $0x50] sm:$0xff]
      %v399 = vld [vmem:[%s382 + $0x58] sm:$0xff]
      %v400 = vld [vmem:[%s382 + $0x60] sm:$0xff]
      %v401 = vld [vmem:[%s382 + $0x68] sm:$0xff]
      %v402 = vld [vmem:[%s382 + $0x70] sm:$0xff]
      %v403 = vld [vmem:[%s382 + $0x78] sm:$0xff]
      %v404 = vld [vmem:[%s382 + $0x80] sm:$0xff]
      %v405 = vld [vmem:[%s382 + $0x88] sm:$0xff]
      %v406 = vld [vmem:[%s382 + $0x90] sm:$0xff]
      %v407 = vld [vmem:[%s382 + $0x98] sm:$0xff]
      %v408 = vld [vmem:[%s382 + $0xa0] sm:$0xff]
      %v409 = vld [vmem:[%s382 + $0xa8] sm:$0xff]
      %v410 = vld [vmem:[%s382 + $0xb0] sm:$0xff]
      %v411 = vld [vmem:[%s382 + $0xb8] sm:$0xff]
      %v412 = vld [vmem:[%s382 + $0xc0] sm:$0xff]
      %v413 = vld [vmem:[%s382 + $0xc8] sm:$0xff]
      %v414 = vld [vmem:[%s382 + $0xd0] sm:$0xff]
      %v415 = vld [vmem:[%s382 + $0xd8] sm:$0xff]
      %v416 = vld [vmem:[%s382 + $0xe0] sm:$0xff]
      %v417 = vld [vmem:[%s382 + $0xe8] sm:$0xff]
      %v418 = vld [vmem:[%s382 + $0xf0] sm:$0xff]
      %v419 = vld [vmem:[%s382 + $0xf8] sm:$0xff]
      %v420 = vld [vmem:[%s382 + $0x100] sm:$0xff]
      %v421 = vld [vmem:[%s382 + $0x108] sm:$0xff]
      %v422 = vld [vmem:[%s382 + $0x110] sm:$0xff]
      %v423 = vld [vmem:[%s382 + $0x118] sm:$0xff]
      %v424 = vld [vmem:[%s382 + $0x120] sm:$0xff]
      %v425 = vld [vmem:[%s382 + $0x128] sm:$0xff]
      %v426 = vld [vmem:[%s382 + $0x130] sm:$0xff]
      %v427 = vld [vmem:[%s382 + $0x138] sm:$0xff]
      %v428 = vld [vmem:[%s382 + $0x140] sm:$0xff]
      %v429 = vld [vmem:[%s382 + $0x148] sm:$0xff]
      %v430 = vld [vmem:[%s382 + $0x150] sm:$0xff]
      %v431 = vld [vmem:[%s382 + $0x158] sm:$0xff]
      %v432 = vld [vmem:[%s382 + $0x160] sm:$0xff]
      %v433 = vld [vmem:[%s382 + $0x168] sm:$0xff]
      %v434 = vld [vmem:[%s382 + $0x170] sm:$0xff]
      %v435 = vld [vmem:[%s382 + $0x178] sm:$0xff]
      %v436 = vld [vmem:[%s382 + $0x180] sm:$0xff]
      %v437 = vld [vmem:[%s382 + $0x188] sm:$0xff]
      %v438 = vld [vmem:[%s382 + $0x190] sm:$0xff]
      %v439 = vld [vmem:[%s382 + $0x198] sm:$0xff]
      %v440 = vld [vmem:[%s382 + $0x1a0] sm:$0xff]
      %v441 = vld [vmem:[%s382 + $0x1a8] sm:$0xff]
      %v442 = vld [vmem:[%s382 + $0x1b0] sm:$0xff]
      %v443 = vld [vmem:[%s382 + $0x1b8] sm:$0xff]
      %v444 = vld [vmem:[%s382 + $0x1c0] sm:$0xff]
      %v445 = vld [vmem:[%s382 + $0x1c8] sm:$0xff]
      %v446 = vld [vmem:[%s382 + $0x1d0] sm:$0xff]
      %v447 = vld [vmem:[%s382 + $0x1d8] sm:$0xff]
      %v448 = vld [vmem:[%s382 + $0x1e0] sm:$0xff]
      %v449 = vld [vmem:[%s382 + $0x1e8] sm:$0xff]
      %v450 = vld [vmem:[%s382 + $0x1f0] sm:$0xff]
      %v451 = vld [vmem:[%s382 + $0x1f8] sm:$0xff]
      %v452 = vadd.f32 %v388, %v389
      %453 = vadd.xlane.f32.xlu0 %v452
      %v454 = vpop.xlane.xlu0 %453
      %v455 = vadd.f32 %v390, %v391
      %456 = vadd.xlane.f32.xlu0 %v455
      %v457 = vpop.xlane.xlu0 %456
      %v458 = vadd.f32 %v392, %v393
      %459 = vadd.xlane.f32.xlu0 %v458
      %v460 = vpop.xlane.xlu0 %459
      %v461 = vadd.f32 %v394, %v395
      %462 = vadd.xlane.f32.xlu0 %v461
      %v463 = vpop.xlane.xlu0 %462
      %v464 = vadd.f32 %v396, %v397
      %465 = vadd.xlane.f32.xlu0 %v464
      %v466 = vpop.xlane.xlu0 %465
      %v467 = vadd.f32 %v398, %v399
      %468 = vadd.xlane.f32.xlu0 %v467
      %v469 = vpop.xlane.xlu0 %468
      %v470 = vadd.f32 %v400, %v401
      %471 = vadd.xlane.f32.xlu0 %v470
      %v472 = vpop.xlane.xlu0 %471
      %v473 = vadd.f32 %v402, %v403
      %474 = vadd.xlane.f32.xlu0 %v473
      %v475 = vpop.xlane.xlu0 %474
      %v476 = vadd.f32 %v404, %v405
      %477 = vadd.xlane.f32.xlu0 %v476
      %v478 = vpop.xlane.xlu0 %477
      %v479 = vadd.f32 %v406, %v407
      %480 = vadd.xlane.f32.xlu0 %v479
      %v481 = vpop.xlane.xlu0 %480
      %v482 = vadd.f32 %v408, %v409
      %483 = vadd.xlane.f32.xlu0 %v482
      %v484 = vpop.xlane.xlu0 %483
      %v485 = vadd.f32 %v410, %v411
      %486 = vadd.xlane.f32.xlu0 %v485
      %v487 = vpop.xlane.xlu0 %486
      %v488 = vadd.f32 %v412, %v413
      %489 = vadd.xlane.f32.xlu0 %v488
      %v490 = vpop.xlane.xlu0 %489
      %v491 = vadd.f32 %v414, %v415
      %492 = vadd.xlane.f32.xlu0 %v491
      %v493 = vpop.xlane.xlu0 %492
      %v494 = vadd.f32 %v416, %v417
      %495 = vadd.xlane.f32.xlu0 %v494
      %v496 = vpop.xlane.xlu0 %495
      %v497 = vadd.f32 %v418, %v419
      %498 = vadd.xlane.f32.xlu0 %v497
      %v499 = vpop.xlane.xlu0 %498
      %v500 = vadd.f32 %v420, %v421
      %501 = vadd.xlane.f32.xlu0 %v500
      %v502 = vpop.xlane.xlu0 %501
      %v503 = vadd.f32 %v422, %v423
      %504 = vadd.xlane.f32.xlu0 %v503
      %v505 = vpop.xlane.xlu0 %504
      %v506 = vadd.f32 %v424, %v425
      %507 = vadd.xlane.f32.xlu0 %v506
      %v508 = vpop.xlane.xlu0 %507
      %v509 = vadd.f32 %v426, %v427
      %510 = vadd.xlane.f32.xlu0 %v509
      %v511 = vpop.xlane.xlu0 %510
      %v512 = vadd.f32 %v428, %v429
      %513 = vadd.xlane.f32.xlu0 %v512
      %v514 = vpop.xlane.xlu0 %513
      %v515 = vadd.f32 %v430, %v431
      %516 = vadd.xlane.f32.xlu0 %v515
      %v517 = vpop.xlane.xlu0 %516
      %v518 = vadd.f32 %v432, %v433
      %519 = vadd.xlane.f32.xlu0 %v518
      %v520 = vpop.xlane.xlu0 %519
      %v521 = vadd.f32 %v434, %v435
      %522 = vadd.xlane.f32.xlu0 %v521
      %v523 = vpop.xlane.xlu0 %522
      %v524 = vadd.f32 %v436, %v437
      %525 = vadd.xlane.f32.xlu0 %v524
      %v526 = vpop.xlane.xlu0 %525
      %v527 = vadd.f32 %v438, %v439
      %528 = vadd.xlane.f32.xlu0 %v527
      %v529 = vpop.xlane.xlu0 %528
      %v530 = vadd.f32 %v440, %v441
      %531 = vadd.xlane.f32.xlu0 %v530
      %v532 = vpop.xlane.xlu0 %531
      %v533 = vadd.f32 %v442, %v443
      %534 = vadd.xlane.f32.xlu0 %v533
      %v535 = vpop.xlane.xlu0 %534
      %v536 = vadd.f32 %v444, %v445
      %537 = vadd.xlane.f32.xlu0 %v536
      %v538 = vpop.xlane.xlu0 %537
      %v539 = vadd.f32 %v446, %v447
      %540 = vadd.xlane.f32.xlu0 %v539
      %v541 = vpop.xlane.xlu0 %540
      %v542 = vadd.f32 %v448, %v449
      %543 = vadd.xlane.f32.xlu0 %v542
      %v544 = vpop.xlane.xlu0 %543
      %v545 = vadd.f32 %v450, %v451
      %546 = vadd.xlane.f32.xlu0 %v545
      %v547 = vpop.xlane.xlu0 %546
      %v548 = vmax.f32 %v388, %v389
      %549 = vmax.xlane.f32.xlu0 %v548
      %v550 = vpop.xlane.xlu0 %549
      %v551 = vmax.f32 %v390, %v391
      %552 = vmax.xlane.f32.xlu0 %v551
      %v553 = vpop.xlane.xlu0 %552
      %v554 = vmax.f32 %v392, %v393
      %555 = vmax.xlane.f32.xlu0 %v554
      %v556 = vpop.xlane.xlu0 %555
      %v557 = vmax.f32 %v394, %v395
      %558 = vmax.xlane.f32.xlu0 %v557
      %v559 = vpop.xlane.xlu0 %558
      %v560 = vmax.f32 %v396, %v397
      %561 = vmax.xlane.f32.xlu0 %v560
      %v562 = vpop.xlane.xlu0 %561
      %v563 = vmax.f32 %v398, %v399
      %564 = vmax.xlane.f32.xlu0 %v563
      %v565 = vpop.xlane.xlu0 %564
      %v566 = vmax.f32 %v400, %v401
      %567 = vmax.xlane.f32.xlu0 %v566
      %v568 = vpop.xlane.xlu0 %567
      %v569 = vmax.f32 %v402, %v403
      %570 = vmax.xlane.f32.xlu0 %v569
      %v571 = vpop.xlane.xlu0 %570
      %v572 = vmax.f32 %v404, %v405
      %573 = vmax.xlane.f32.xlu0 %v572
      %v574 = vpop.xlane.xlu0 %573
      %v575 = vmax.f32 %v406, %v407
      %576 = vmax.xlane.f32.xlu0 %v575
      %v577 = vpop.xlane.xlu0 %576
      %v578 = vmax.f32 %v408, %v409
      %579 = vmax.xlane.f32.xlu0 %v578
      %v580 = vpop.xlane.xlu0 %579
      %v581 = vmax.f32 %v410, %v411
      %582 = vmax.xlane.f32.xlu0 %v581
      %v583 = vpop.xlane.xlu0 %582
      %v584 = vmax.f32 %v412, %v413
      %585 = vmax.xlane.f32.xlu0 %v584
      %v586 = vpop.xlane.xlu0 %585
      %v587 = vmax.f32 %v414, %v415
      %588 = vmax.xlane.f32.xlu0 %v587
      %v589 = vpop.xlane.xlu0 %588
      %v590 = vmax.f32 %v416, %v417
      %591 = vmax.xlane.f32.xlu0 %v590
      %v592 = vpop.xlane.xlu0 %591
      %v593 = vmax.f32 %v418, %v419
      %594 = vmax.xlane.f32.xlu0 %v593
      %v595 = vpop.xlane.xlu0 %594
      %v596 = vmax.f32 %v420, %v421
      %597 = vmax.xlane.f32.xlu0 %v596
      %v598 = vpop.xlane.xlu0 %597
      %v599 = vmax.f32 %v422, %v423
      %600 = vmax.xlane.f32.xlu0 %v599
      %v601 = vpop.xlane.xlu0 %600
      %v602 = vmax.f32 %v424, %v425
      %603 = vmax.xlane.f32.xlu0 %v602
      %v604 = vpop.xlane.xlu0 %603
      %v605 = vmax.f32 %v426, %v427
      %606 = vmax.xlane.f32.xlu0 %v605
      %v607 = vpop.xlane.xlu0 %606
      %v608 = vmax.f32 %v428, %v429
      %609 = vmax.xlane.f32.xlu0 %v608
      %v610 = vpop.xlane.xlu0 %609
      %v611 = vmax.f32 %v430, %v431
      %612 = vmax.xlane.f32.xlu0 %v611
      %v613 = vpop.xlane.xlu0 %612
      %v614 = vmax.f32 %v432, %v433
      %615 = vmax.xlane.f32.xlu0 %v614
      %v616 = vpop.xlane.xlu0 %615
      %v617 = vmax.f32 %v434, %v435
      %618 = vmax.xlane.f32.xlu0 %v617
      %v619 = vpop.xlane.xlu0 %618
      %v620 = vmax.f32 %v436, %v437
      %621 = vmax.xlane.f32.xlu0 %v620
      %v622 = vpop.xlane.xlu0 %621
      %v623 = vmax.f32 %v438, %v439
      %624 = vmax.xlane.f32.xlu0 %v623
      %v625 = vpop.xlane.xlu0 %624
      %v626 = vmax.f32 %v440, %v441
      %627 = vmax.xlane.f32.xlu0 %v626
      %v628 = vpop.xlane.xlu0 %627
      %v629 = vmax.f32 %v442, %v443
      %630 = vmax.xlane.f32.xlu0 %v629
      %v631 = vpop.xlane.xlu0 %630
      %v632 = vmax.f32 %v444, %v445
      %633 = vmax.xlane.f32.xlu0 %v632
      %v634 = vpop.xlane.xlu0 %633
      %v635 = vmax.f32 %v446, %v447
      %636 = vmax.xlane.f32.xlu0 %v635
      %v637 = vpop.xlane.xlu0 %636
      %v638 = vmax.f32 %v448, %v449
      %639 = vmax.xlane.f32.xlu0 %v638
      %v640 = vpop.xlane.xlu0 %639
      %v641 = vmax.f32 %v450, %v451
      %642 = vmax.xlane.f32.xlu0 %v641
      %v643 = vpop.xlane.xlu0 %642
      %v676 = vlaneseq
      %v677 = vand.u32 %v676, 127
      %v678 = vperm.slane %v454, %v677
      %v679 = vperm.slane %v457, %v677
      %v680 = vperm.slane %v460, %v677
      %v681 = vperm.slane %v463, %v677
      %v682 = vperm.slane %v466, %v677
      %v683 = vperm.slane %v469, %v677
      %v684 = vperm.slane %v472, %v677
      %v685 = vperm.slane %v475, %v677
      %v686 = vperm.slane %v478, %v677
      %v687 = vperm.slane %v481, %v677
      %v688 = vperm.slane %v484, %v677
      %v689 = vperm.slane %v487, %v677
      %v690 = vperm.slane %v490, %v677
      %v691 = vperm.slane %v493, %v677
      %v692 = vperm.slane %v496, %v677
      %v693 = vperm.slane %v499, %v677
      %v694 = vperm.slane %v502, %v677
      %v695 = vperm.slane %v505, %v677
      %v696 = vperm.slane %v508, %v677
      %v697 = vperm.slane %v511, %v677
      %v698 = vperm.slane %v514, %v677
      %v699 = vperm.slane %v517, %v677
      %v700 = vperm.slane %v520, %v677
      %v701 = vperm.slane %v523, %v677
      %v702 = vperm.slane %v526, %v677
      %v703 = vperm.slane %v529, %v677
      %v704 = vperm.slane %v532, %v677
      %v705 = vperm.slane %v535, %v677
      %v706 = vperm.slane %v538, %v677
      %v707 = vperm.slane %v541, %v677
      %v708 = vperm.slane %v544, %v677
      %v709 = vperm.slane %v547, %v677
      %vm710 = vcmask 1041409
      %v711 = vsel %vm710, %v679, %v678
      %vm712 = vcmask 1042434
      %v713 = vsel %vm712, %v680, %v711
      %vm714 = vcmask 1043459
      %v715 = vsel %vm714, %v681, %v713
      %vm716 = vcmask 1044484
      %v717 = vsel %vm716, %v682, %v715
      %vm718 = vcmask 1045509
      %v719 = vsel %vm718, %v683, %v717
      %vm720 = vcmask 1046534
      %v721 = vsel %vm720, %v684, %v719
      %vm722 = vcmask 1047559
      %v723 = vsel %vm722, %v685, %v721
      %v724 = vsel %vm710, %v687, %v686
      %v725 = vsel %vm712, %v688, %v724
      %v726 = vsel %vm714, %v689, %v725
      %v727 = vsel %vm716, %v690, %v726
      %v728 = vsel %vm718, %v691, %v727
      %v729 = vsel %vm720, %v692, %v728
      %v730 = vsel %vm722, %v693, %v729
      %v731 = vsel %vm710, %v695, %v694
      %v732 = vsel %vm712, %v696, %v731
      %v733 = vsel %vm714, %v697, %v732
      %v734 = vsel %vm716, %v698, %v733
      %v735 = vsel %vm718, %v699, %v734
      %v736 = vsel %vm720, %v700, %v735
      %v737 = vsel %vm722, %v701, %v736
      %v738 = vsel %vm710, %v703, %v702
      %v739 = vsel %vm712, %v704, %v738
      %v740 = vsel %vm714, %v705, %v739
      %v741 = vsel %vm716, %v706, %v740
      %v742 = vsel %vm718, %v707, %v741
      %v743 = vsel %vm720, %v708, %v742
      %v744 = vsel %vm722, %v709, %v743
      %vm749 = vcmask 64512
      %v750 = vsel %vm749, %v723, 0.0
      %751 = vadd.xlane.f32.xlu0 %v750
      %v752 = vpop.xlane.xlu0 %751
      %v753 = vsel %vm749, %v730, 0.0
      %754 = vadd.xlane.f32.xlu0 %v753
      %v755 = vpop.xlane.xlu0 %754
      %v756 = vsel %vm749, %v737, 0.0
      %757 = vadd.xlane.f32.xlu0 %v756
      %v758 = vpop.xlane.xlu0 %757
      %v759 = vsel %vm749, %v744, 0.0
      %760 = vadd.xlane.f32.xlu0 %v759
      %v761 = vpop.xlane.xlu0 %760
      %v762 = vmul.f32 %v752, 0.00048828125
      %v763 = vmul.f32 %v755, 0.00048828125
      %v764 = vmul.f32 %v758, 0.00048828125
      %v765 = vmul.f32 %v761, 0.00048828125
      %v798 = vperm.slane %v550, %v677
      %v799 = vperm.slane %v553, %v677
      %v800 = vperm.slane %v556, %v677
      %v801 = vperm.slane %v559, %v677
      %v802 = vperm.slane %v562, %v677
      %v803 = vperm.slane %v565, %v677
      %v804 = vperm.slane %v568, %v677
      %v805 = vperm.slane %v571, %v677
      %v806 = vperm.slane %v574, %v677
      %v807 = vperm.slane %v577, %v677
      %v808 = vperm.slane %v580, %v677
      %v809 = vperm.slane %v583, %v677
      %v810 = vperm.slane %v586, %v677
      %v811 = vperm.slane %v589, %v677
      %v812 = vperm.slane %v592, %v677
      %v813 = vperm.slane %v595, %v677
      %v814 = vperm.slane %v598, %v677
      %v815 = vperm.slane %v601, %v677
      %v816 = vperm.slane %v604, %v677
      %v817 = vperm.slane %v607, %v677
      %v818 = vperm.slane %v610, %v677
      %v819 = vperm.slane %v613, %v677
      %v820 = vperm.slane %v616, %v677
      %v821 = vperm.slane %v619, %v677
      %v822 = vperm.slane %v622, %v677
      %v823 = vperm.slane %v625, %v677
      %v824 = vperm.slane %v628, %v677
      %v825 = vperm.slane %v631, %v677
      %v826 = vperm.slane %v634, %v677
      %v827 = vperm.slane %v637, %v677
      %v828 = vperm.slane %v640, %v677
      %v829 = vperm.slane %v643, %v677
      %v830 = vsel %vm710, %v799, %v798
      %v831 = vsel %vm712, %v800, %v830
      %v832 = vsel %vm714, %v801, %v831
      %v833 = vsel %vm716, %v802, %v832
      %v834 = vsel %vm718, %v803, %v833
      %v835 = vsel %vm720, %v804, %v834
      %v836 = vsel %vm722, %v805, %v835
      %v837 = vsel %vm710, %v807, %v806
      %v838 = vsel %vm712, %v808, %v837
      %v839 = vsel %vm714, %v809, %v838
      %v840 = vsel %vm716, %v810, %v839
      %v841 = vsel %vm718, %v811, %v840
      %v842 = vsel %vm720, %v812, %v841
      %v843 = vsel %vm722, %v813, %v842
      %v844 = vsel %vm710, %v815, %v814
      %v845 = vsel %vm712, %v816, %v844
      %v846 = vsel %vm714, %v817, %v845
      %v847 = vsel %vm716, %v818, %v846
      %v848 = vsel %vm718, %v819, %v847
      %v849 = vsel %vm720, %v820, %v848
      %v850 = vsel %vm722, %v821, %v849
      %v851 = vsel %vm710, %v823, %v822
      %v852 = vsel %vm712, %v824, %v851
      %v853 = vsel %vm714, %v825, %v852
      %v854 = vsel %vm716, %v826, %v853
      %v855 = vsel %vm718, %v827, %v854
      %v856 = vsel %vm720, %v828, %v855
      %v857 = vsel %vm722, %v829, %v856
      %v862 = vsel %vm749, %v836, -inf
      %863 = vmax.xlane.f32.xlu0 %v862
      %v864 = vpop.xlane.xlu0 %863
      %v865 = vsel %vm749, %v843, -inf
      %866 = vmax.xlane.f32.xlu0 %v865
      %v867 = vpop.xlane.xlu0 %866
      %v868 = vsel %vm749, %v850, -inf
      %869 = vmax.xlane.f32.xlu0 %v868
      %v870 = vpop.xlane.xlu0 %869
      %v871 = vsel %vm749, %v857, -inf
      %872 = vmax.xlane.f32.xlu0 %v871
      %v873 = vpop.xlane.xlu0 %872
      %vm874 = vcmask 7168
      %v875 = vsel %vm874, %v762, %v864
      %v876 = vsel %vm874, %v763, %v867
      %v877 = vsel %vm874, %v764, %v870
      %v878 = vsel %vm874, %v765, %v873
      %v879 = vld [vmem:[%s1] sm:$0x3]
      %v880 = vld [vmem:[%s2] sm:$0x3]
      %882 = vset.pattern.permute.xlu0 0
      %883 = vperm.xlu0 %882, %v880
      %v884 = vpop.permute.xlu0 %883
      %vm886 = vcmask 261120
      %v888 = vsel %vm886, %v879, 0
      %890 = vmatpush.msra.mxu0 0.0
      %891 = vmatpush.msra.mxu0 0.0
      %892 = vmatpush.msra.mxu0 0.0
      %893 = vmatpush.msra.mxu0 0.0
      %894 = vmatpush.msra.mxu0 0.0
      %895 = vmatpush.msra.mxu0 0.0
      %896 = vmatpush.msra.mxu0 0.0
      %897 = vmatpush.msra.mxu0 0.0
      %898 = vmatpush.msra.mxu0 0.0
      %899 = vmatpush.msra.mxu0 0.0
      %900 = vmatpush.msra.mxu0 0.0
      %901 = vmatpush.msra.mxu0 0.0
      %v902 = vand.u32 %v878, 4294901760
      %903 = vmatpush.msra.mxu0 %v902
      %v904 = vand.u32 %v877, 4294901760
      %905 = vmatpush.msra.mxu0 %v904
      %v906 = vand.u32 %v876, 4294901760
      %907 = vmatpush.msra.mxu0 %v906
      %v908 = vand.u32 %v875, 4294901760
      %909 = vmatpush.msra.mxu0 %v908
      %v910 = vand.u32 %v888, 4294901760
      %v911 = vsub.f32 %v888, %v910
      %v912 = vand.u32 %v911, 4294901760
      %v913 = vsub.f32 %v911, %v912
      %v914 = vand.u32 %v913, 4294901760
      %915 = vmatmul.f32.gmra.mxu0 %v914
      %v916 = vpop.f32.mrf.mxu0
      %v917 = vadd.f32 %v884, %v916
      %918 = vdwg.mxu0
      %919 = vmatpush.msra.mxu0 0.0
      %920 = vmatpush.msra.mxu0 0.0
      %921 = vmatpush.msra.mxu0 0.0
      %922 = vmatpush.msra.mxu0 0.0
      %923 = vmatpush.msra.mxu0 0.0
      %924 = vmatpush.msra.mxu0 0.0
      %925 = vmatpush.msra.mxu0 0.0
      %926 = vmatpush.msra.mxu0 0.0
      %927 = vmatpush.msra.mxu0 0.0
      %928 = vmatpush.msra.mxu0 0.0
      %929 = vmatpush.msra.mxu0 0.0
      %930 = vmatpush.msra.mxu0 0.0
      %v931 = vand.u32 %v878, 4294901760
      %v932 = vsub.f32 %v878, %v931
      %v933 = vand.u32 %v932, 4294901760
      %v934 = vsub.f32 %v932, %v933
      %v935 = vand.u32 %v934, 4294901760
      %936 = vmatpush.msra.mxu0 %v935
      %v937 = vand.u32 %v877, 4294901760
      %v938 = vsub.f32 %v877, %v937
      %v939 = vand.u32 %v938, 4294901760
      %v940 = vsub.f32 %v938, %v939
      %v941 = vand.u32 %v940, 4294901760
      %942 = vmatpush.msra.mxu0 %v941
      %v943 = vand.u32 %v876, 4294901760
      %v944 = vsub.f32 %v876, %v943
      %v945 = vand.u32 %v944, 4294901760
      %v946 = vsub.f32 %v944, %v945
      %v947 = vand.u32 %v946, 4294901760
      %948 = vmatpush.msra.mxu0 %v947
      %v949 = vand.u32 %v875, 4294901760
      %v950 = vsub.f32 %v875, %v949
      %v951 = vand.u32 %v950, 4294901760
      %v952 = vsub.f32 %v950, %v951
      %v953 = vand.u32 %v952, 4294901760
      %954 = vmatpush.msra.mxu0 %v953
      %v955 = vand.u32 %v888, 4294901760
      %956 = vmatmul.f32.gmra.mxu0 %v955
      %v957 = vpop.f32.mrf.mxu0
      %v958 = vadd.f32 %v917, %v957
      %959 = vdwg.mxu0
      %960 = vmatpush.msra.mxu0 0.0
      %961 = vmatpush.msra.mxu0 0.0
      %962 = vmatpush.msra.mxu0 0.0
      %963 = vmatpush.msra.mxu0 0.0
      %964 = vmatpush.msra.mxu0 0.0
      %965 = vmatpush.msra.mxu0 0.0
      %966 = vmatpush.msra.mxu0 0.0
      %967 = vmatpush.msra.mxu0 0.0
      %968 = vmatpush.msra.mxu0 0.0
      %969 = vmatpush.msra.mxu0 0.0
      %970 = vmatpush.msra.mxu0 0.0
      %971 = vmatpush.msra.mxu0 0.0
      %v972 = vand.u32 %v878, 4294901760
      %v973 = vsub.f32 %v878, %v972
      %974 = vmatpush.msra.mxu0 %v973
      %v975 = vand.u32 %v877, 4294901760
      %v976 = vsub.f32 %v877, %v975
      %977 = vmatpush.msra.mxu0 %v976
      %v978 = vand.u32 %v876, 4294901760
      %v979 = vsub.f32 %v876, %v978
      %980 = vmatpush.msra.mxu0 %v979
      %v981 = vand.u32 %v875, 4294901760
      %v982 = vsub.f32 %v875, %v981
      %983 = vmatpush.msra.mxu0 %v982
      %v984 = vand.u32 %v888, 4294901760
      %v985 = vsub.f32 %v888, %v984
      %986 = vmatmul.f32.gmra.mxu0 %v985
      %v987 = vpop.f32.mrf.mxu0
      %v988 = vadd.f32 %v958, %v987
      %989 = vdwg.mxu0
      %990 = vmatpush.msra.mxu0 0.0
      %991 = vmatpush.msra.mxu0 0.0
      %992 = vmatpush.msra.mxu0 0.0
      %993 = vmatpush.msra.mxu0 0.0
      %994 = vmatpush.msra.mxu0 0.0
      %995 = vmatpush.msra.mxu0 0.0
      %996 = vmatpush.msra.mxu0 0.0
      %997 = vmatpush.msra.mxu0 0.0
      %998 = vmatpush.msra.mxu0 0.0
      %999 = vmatpush.msra.mxu0 0.0
      %1000 = vmatpush.msra.mxu0 0.0
      %1001 = vmatpush.msra.mxu0 0.0
      %v1002 = vand.u32 %v878, 4294901760
      %1003 = vmatpush.msra.mxu0 %v1002
      %v1004 = vand.u32 %v877, 4294901760
      %1005 = vmatpush.msra.mxu0 %v1004
      %v1006 = vand.u32 %v876, 4294901760
      %1007 = vmatpush.msra.mxu0 %v1006
      %v1008 = vand.u32 %v875, 4294901760
      %1009 = vmatpush.msra.mxu0 %v1008
      %v1010 = vand.u32 %v888, 4294901760
      %v1011 = vsub.f32 %v888, %v1010
      %v1012 = vand.u32 %v1011, 4294901760
      %1013 = vmatmul.f32.gmra.mxu0 %v1012
      %v1014 = vpop.f32.mrf.mxu0
      %v1015 = vadd.f32 %v988, %v1014
      %1016 = vdwg.mxu0
      %1017 = vmatpush.msra.mxu0 0.0
      %1018 = vmatpush.msra.mxu0 0.0
      %1019 = vmatpush.msra.mxu0 0.0
      %1020 = vmatpush.msra.mxu0 0.0
      %1021 = vmatpush.msra.mxu0 0.0
      %1022 = vmatpush.msra.mxu0 0.0
      %1023 = vmatpush.msra.mxu0 0.0
      %1024 = vmatpush.msra.mxu0 0.0
      %1025 = vmatpush.msra.mxu0 0.0
      %1026 = vmatpush.msra.mxu0 0.0
      %1027 = vmatpush.msra.mxu0 0.0
      %1028 = vmatpush.msra.mxu0 0.0
      %v1029 = vand.u32 %v878, 4294901760
      %v1030 = vsub.f32 %v878, %v1029
      %v1031 = vand.u32 %v1030, 4294901760
      %1032 = vmatpush.msra.mxu0 %v1031
      %v1033 = vand.u32 %v877, 4294901760
      %v1034 = vsub.f32 %v877, %v1033
      %v1035 = vand.u32 %v1034, 4294901760
      %1036 = vmatpush.msra.mxu0 %v1035
      %v1037 = vand.u32 %v876, 4294901760
      %v1038 = vsub.f32 %v876, %v1037
      %v1039 = vand.u32 %v1038, 4294901760
      %1040 = vmatpush.msra.mxu0 %v1039
      %v1041 = vand.u32 %v875, 4294901760
      %v1042 = vsub.f32 %v875, %v1041
      %v1043 = vand.u32 %v1042, 4294901760
      %1044 = vmatpush.msra.mxu0 %v1043
      %v1045 = vand.u32 %v888, 4294901760
      %1046 = vmatmul.f32.gmra.mxu0 %v1045
      %v1047 = vpop.f32.mrf.mxu0
      %v1048 = vadd.f32 %v1015, %v1047
      %1049 = vdwg.mxu0
      %1050 = vmatpush.msra.mxu0 0.0
      %1051 = vmatpush.msra.mxu0 0.0
      %1052 = vmatpush.msra.mxu0 0.0
      %1053 = vmatpush.msra.mxu0 0.0
      %1054 = vmatpush.msra.mxu0 0.0
      %1055 = vmatpush.msra.mxu0 0.0
      %1056 = vmatpush.msra.mxu0 0.0
      %1057 = vmatpush.msra.mxu0 0.0
      %1058 = vmatpush.msra.mxu0 0.0
      %1059 = vmatpush.msra.mxu0 0.0
      %1060 = vmatpush.msra.mxu0 0.0
      %1061 = vmatpush.msra.mxu0 0.0
      %v1062 = vand.u32 %v878, 4294901760
      %1063 = vmatpush.msra.mxu0 %v1062
      %v1064 = vand.u32 %v877, 4294901760
      %1065 = vmatpush.msra.mxu0 %v1064
      %v1066 = vand.u32 %v876, 4294901760
      %1067 = vmatpush.msra.mxu0 %v1066
      %v1068 = vand.u32 %v875, 4294901760
      %1069 = vmatpush.msra.mxu0 %v1068
      %v1070 = vand.u32 %v888, 4294901760
      %1071 = vmatmul.f32.gmra.mxu0 %v1070
      %v1072 = vpop.f32.mrf.mxu0
      %v1073 = vadd.f32 %v1048, %v1072
      %1074 = vdwg.mxu0
      %v1075 = vmax.f32 %v1073, 0.0
      %v1076 = vld [vmem:[%s3] sm:$0xff]
      %v1077 = vld [vmem:[%s3 + $0x8] sm:$0xff]
      %v1078 = vld [vmem:[%s3 + $0x10] sm:$0xff]
      %v1079 = vld [vmem:[%s3 + $0x18] sm:$0xff]
      %v1080 = vld [vmem:[%s4] sm:$0xff]
      %v1081 = vld [vmem:[%s4 + $0x8] sm:$0xff]
      %v1082 = vld [vmem:[%s4 + $0x10] sm:$0xff]
      %v1083 = vld [vmem:[%s4 + $0x18] sm:$0xff]
      %1085 = vset.pattern.permute.xlu0 0
      %1086 = vperm.xlu0 %1085, %v1080
      %v1087 = vpop.permute.xlu0 %1086
      %1090 = vset.pattern.permute.xlu0 0
      %1091 = vperm.xlu0 %1090, %v1081
      %v1092 = vpop.permute.xlu0 %1091
      %1095 = vset.pattern.permute.xlu0 0
      %1096 = vperm.xlu0 %1095, %v1082
      %v1097 = vpop.permute.xlu0 %1096
      %1100 = vset.pattern.permute.xlu0 0
      %1101 = vperm.xlu0 %1100, %v1083
      %v1102 = vpop.permute.xlu0 %1101
      %vm1104 = vcmask 15360
      %v1106 = vsel %vm1104, %v1076, 0
      %v1109 = vsel %vm1104, %v1077, 0
      %v1112 = vsel %vm1104, %v1078, 0
      %v1115 = vsel %vm1104, %v1079, 0
      %vm1117 = vcmask 1041408
      %v1119 = vsel %vm1117, %v1075, 0
      %1121 = vmatpush.msra.mxu0 0.0
      %1122 = vmatpush.msra.mxu0 0.0
      %1123 = vmatpush.msra.mxu0 0.0
      %1124 = vmatpush.msra.mxu0 0.0
      %1125 = vmatpush.msra.mxu0 0.0
      %1126 = vmatpush.msra.mxu0 0.0
      %1127 = vmatpush.msra.mxu0 0.0
      %1128 = vmatpush.msra.mxu0 0.0
      %1129 = vmatpush.msra.mxu0 0.0
      %1130 = vmatpush.msra.mxu0 0.0
      %1131 = vmatpush.msra.mxu0 0.0
      %1132 = vmatpush.msra.mxu0 0.0
      %1133 = vmatpush.msra.mxu0 0.0
      %1134 = vmatpush.msra.mxu0 0.0
      %1135 = vmatpush.msra.mxu0 0.0
      %v1136 = vand.u32 %v1119, 4294901760
      %1137 = vmatpush.msra.mxu0 %v1136
      %v1138 = vand.u32 %v1106, 4294901760
      %v1139 = vsub.f32 %v1106, %v1138
      %v1140 = vand.u32 %v1139, 4294901760
      %v1141 = vsub.f32 %v1139, %v1140
      %v1142 = vand.u32 %v1141, 4294901760
      %1143 = vmatmul.f32.gmra.mxu0 %v1142
      %v1144 = vpop.f32.mrf.mxu0
      %v1145 = vadd.f32 %v1087, %v1144
      %v1146 = vand.u32 %v1109, 4294901760
      %v1147 = vsub.f32 %v1109, %v1146
      %v1148 = vand.u32 %v1147, 4294901760
      %v1149 = vsub.f32 %v1147, %v1148
      %v1150 = vand.u32 %v1149, 4294901760
      %1151 = vmatmul.f32.gmra.mxu0 %v1150
      %v1152 = vpop.f32.mrf.mxu0
      %v1153 = vadd.f32 %v1092, %v1152
      %v1154 = vand.u32 %v1112, 4294901760
      %v1155 = vsub.f32 %v1112, %v1154
      %v1156 = vand.u32 %v1155, 4294901760
      %v1157 = vsub.f32 %v1155, %v1156
      %v1158 = vand.u32 %v1157, 4294901760
      %1159 = vmatmul.f32.gmra.mxu0 %v1158
      %v1160 = vpop.f32.mrf.mxu0
      %v1161 = vadd.f32 %v1097, %v1160
      %v1162 = vand.u32 %v1115, 4294901760
      %v1163 = vsub.f32 %v1115, %v1162
      %v1164 = vand.u32 %v1163, 4294901760
      %v1165 = vsub.f32 %v1163, %v1164
      %v1166 = vand.u32 %v1165, 4294901760
      %1167 = vmatmul.f32.gmra.mxu0 %v1166
      %v1168 = vpop.f32.mrf.mxu0
      %v1169 = vadd.f32 %v1102, %v1168
      %1170 = vdwg.mxu0
      %1171 = vmatpush.msra.mxu0 0.0
      %1172 = vmatpush.msra.mxu0 0.0
      %1173 = vmatpush.msra.mxu0 0.0
      %1174 = vmatpush.msra.mxu0 0.0
      %1175 = vmatpush.msra.mxu0 0.0
      %1176 = vmatpush.msra.mxu0 0.0
      %1177 = vmatpush.msra.mxu0 0.0
      %1178 = vmatpush.msra.mxu0 0.0
      %1179 = vmatpush.msra.mxu0 0.0
      %1180 = vmatpush.msra.mxu0 0.0
      %1181 = vmatpush.msra.mxu0 0.0
      %1182 = vmatpush.msra.mxu0 0.0
      %1183 = vmatpush.msra.mxu0 0.0
      %1184 = vmatpush.msra.mxu0 0.0
      %1185 = vmatpush.msra.mxu0 0.0
      %v1186 = vand.u32 %v1119, 4294901760
      %v1187 = vsub.f32 %v1119, %v1186
      %v1188 = vand.u32 %v1187, 4294901760
      %v1189 = vsub.f32 %v1187, %v1188
      %v1190 = vand.u32 %v1189, 4294901760
      %1191 = vmatpush.msra.mxu0 %v1190
      %v1192 = vand.u32 %v1106, 4294901760
      %1193 = vmatmul.f32.gmra.mxu0 %v1192
      %v1194 = vpop.f32.mrf.mxu0
      %v1195 = vadd.f32 %v1145, %v1194
      %v1196 = vand.u32 %v1109, 4294901760
      %1197 = vmatmul.f32.gmra.mxu0 %v1196
      %v1198 = vpop.f32.mrf.mxu0
      %v1199 = vadd.f32 %v1153, %v1198
      %v1200 = vand.u32 %v1112, 4294901760
      %1201 = vmatmul.f32.gmra.mxu0 %v1200
      %v1202 = vpop.f32.mrf.mxu0
      %v1203 = vadd.f32 %v1161, %v1202
      %v1204 = vand.u32 %v1115, 4294901760
      %1205 = vmatmul.f32.gmra.mxu0 %v1204
      %v1206 = vpop.f32.mrf.mxu0
      %v1207 = vadd.f32 %v1169, %v1206
      %1208 = vdwg.mxu0
      %1209 = vmatpush.msra.mxu0 0.0
      %1210 = vmatpush.msra.mxu0 0.0
      %1211 = vmatpush.msra.mxu0 0.0
      %1212 = vmatpush.msra.mxu0 0.0
      %1213 = vmatpush.msra.mxu0 0.0
      %1214 = vmatpush.msra.mxu0 0.0
      %1215 = vmatpush.msra.mxu0 0.0
      %1216 = vmatpush.msra.mxu0 0.0
      %1217 = vmatpush.msra.mxu0 0.0
      %1218 = vmatpush.msra.mxu0 0.0
      %1219 = vmatpush.msra.mxu0 0.0
      %1220 = vmatpush.msra.mxu0 0.0
      %1221 = vmatpush.msra.mxu0 0.0
      %1222 = vmatpush.msra.mxu0 0.0
      %1223 = vmatpush.msra.mxu0 0.0
      %v1224 = vand.u32 %v1119, 4294901760
      %v1225 = vsub.f32 %v1119, %v1224
      %1226 = vmatpush.msra.mxu0 %v1225
      %v1227 = vand.u32 %v1106, 4294901760
      %v1228 = vsub.f32 %v1106, %v1227
      %1229 = vmatmul.f32.gmra.mxu0 %v1228
      %v1230 = vpop.f32.mrf.mxu0
      %v1231 = vadd.f32 %v1195, %v1230
      %v1232 = vand.u32 %v1109, 4294901760
      %v1233 = vsub.f32 %v1109, %v1232
      %1234 = vmatmul.f32.gmra.mxu0 %v1233
      %v1235 = vpop.f32.mrf.mxu0
      %v1236 = vadd.f32 %v1199, %v1235
      %v1237 = vand.u32 %v1112, 4294901760
      %v1238 = vsub.f32 %v1112, %v1237
      %1239 = vmatmul.f32.gmra.mxu0 %v1238
      %v1240 = vpop.f32.mrf.mxu0
      %v1241 = vadd.f32 %v1203, %v1240
      %v1242 = vand.u32 %v1115, 4294901760
      %v1243 = vsub.f32 %v1115, %v1242
      %1244 = vmatmul.f32.gmra.mxu0 %v1243
      %v1245 = vpop.f32.mrf.mxu0
      %v1246 = vadd.f32 %v1207, %v1245
      %1247 = vdwg.mxu0
      %1248 = vmatpush.msra.mxu0 0.0
      %1249 = vmatpush.msra.mxu0 0.0
      %1250 = vmatpush.msra.mxu0 0.0
      %1251 = vmatpush.msra.mxu0 0.0
      %1252 = vmatpush.msra.mxu0 0.0
      %1253 = vmatpush.msra.mxu0 0.0
      %1254 = vmatpush.msra.mxu0 0.0
      %1255 = vmatpush.msra.mxu0 0.0
      %1256 = vmatpush.msra.mxu0 0.0
      %1257 = vmatpush.msra.mxu0 0.0
      %1258 = vmatpush.msra.mxu0 0.0
      %1259 = vmatpush.msra.mxu0 0.0
      %1260 = vmatpush.msra.mxu0 0.0
      %1261 = vmatpush.msra.mxu0 0.0
      %1262 = vmatpush.msra.mxu0 0.0
      %v1263 = vand.u32 %v1119, 4294901760
      %1264 = vmatpush.msra.mxu0 %v1263
      %v1265 = vand.u32 %v1106, 4294901760
      %v1266 = vsub.f32 %v1106, %v1265
      %v1267 = vand.u32 %v1266, 4294901760
      %1268 = vmatmul.f32.gmra.mxu0 %v1267
      %v1269 = vpop.f32.mrf.mxu0
      %v1270 = vadd.f32 %v1231, %v1269
      %v1271 = vand.u32 %v1109, 4294901760
      %v1272 = vsub.f32 %v1109, %v1271
      %v1273 = vand.u32 %v1272, 4294901760
      %1274 = vmatmul.f32.gmra.mxu0 %v1273
      %v1275 = vpop.f32.mrf.mxu0
      %v1276 = vadd.f32 %v1236, %v1275
      %v1277 = vand.u32 %v1112, 4294901760
      %v1278 = vsub.f32 %v1112, %v1277
      %v1279 = vand.u32 %v1278, 4294901760
      %1280 = vmatmul.f32.gmra.mxu0 %v1279
      %v1281 = vpop.f32.mrf.mxu0
      %v1282 = vadd.f32 %v1241, %v1281
      %v1283 = vand.u32 %v1115, 4294901760
      %v1284 = vsub.f32 %v1115, %v1283
      %v1285 = vand.u32 %v1284, 4294901760
      %1286 = vmatmul.f32.gmra.mxu0 %v1285
      %v1287 = vpop.f32.mrf.mxu0
      %v1288 = vadd.f32 %v1246, %v1287
      %1289 = vdwg.mxu0
      %1290 = vmatpush.msra.mxu0 0.0
      %1291 = vmatpush.msra.mxu0 0.0
      %1292 = vmatpush.msra.mxu0 0.0
      %1293 = vmatpush.msra.mxu0 0.0
      %1294 = vmatpush.msra.mxu0 0.0
      %1295 = vmatpush.msra.mxu0 0.0
      %1296 = vmatpush.msra.mxu0 0.0
      %1297 = vmatpush.msra.mxu0 0.0
      %1298 = vmatpush.msra.mxu0 0.0
      %1299 = vmatpush.msra.mxu0 0.0
      %1300 = vmatpush.msra.mxu0 0.0
      %1301 = vmatpush.msra.mxu0 0.0
      %1302 = vmatpush.msra.mxu0 0.0
      %1303 = vmatpush.msra.mxu0 0.0
      %1304 = vmatpush.msra.mxu0 0.0
      %v1305 = vand.u32 %v1119, 4294901760
      %v1306 = vsub.f32 %v1119, %v1305
      %v1307 = vand.u32 %v1306, 4294901760
      %1308 = vmatpush.msra.mxu0 %v1307
      %v1309 = vand.u32 %v1106, 4294901760
      %1310 = vmatmul.f32.gmra.mxu0 %v1309
      %v1311 = vpop.f32.mrf.mxu0
      %v1312 = vadd.f32 %v1270, %v1311
      %v1313 = vand.u32 %v1109, 4294901760
      %1314 = vmatmul.f32.gmra.mxu0 %v1313
      %v1315 = vpop.f32.mrf.mxu0
      %v1316 = vadd.f32 %v1276, %v1315
      %v1317 = vand.u32 %v1112, 4294901760
      %1318 = vmatmul.f32.gmra.mxu0 %v1317
      %v1319 = vpop.f32.mrf.mxu0
      %v1320 = vadd.f32 %v1282, %v1319
      %v1321 = vand.u32 %v1115, 4294901760
      %1322 = vmatmul.f32.gmra.mxu0 %v1321
      %v1323 = vpop.f32.mrf.mxu0
      %v1324 = vadd.f32 %v1288, %v1323
      %1325 = vdwg.mxu0
      %1326 = vmatpush.msra.mxu0 0.0
      %1327 = vmatpush.msra.mxu0 0.0
      %1328 = vmatpush.msra.mxu0 0.0
      %1329 = vmatpush.msra.mxu0 0.0
      %1330 = vmatpush.msra.mxu0 0.0
      %1331 = vmatpush.msra.mxu0 0.0
      %1332 = vmatpush.msra.mxu0 0.0
      %1333 = vmatpush.msra.mxu0 0.0
      %1334 = vmatpush.msra.mxu0 0.0
      %1335 = vmatpush.msra.mxu0 0.0
      %1336 = vmatpush.msra.mxu0 0.0
      %1337 = vmatpush.msra.mxu0 0.0
      %1338 = vmatpush.msra.mxu0 0.0
      %1339 = vmatpush.msra.mxu0 0.0
      %1340 = vmatpush.msra.mxu0 0.0
      %v1341 = vand.u32 %v1119, 4294901760
      %1342 = vmatpush.msra.mxu0 %v1341
      %v1343 = vand.u32 %v1106, 4294901760
      %1344 = vmatmul.f32.gmra.mxu0 %v1343
      %v1345 = vpop.f32.mrf.mxu0
      %v1346 = vadd.f32 %v1312, %v1345
      %v1347 = vand.u32 %v1109, 4294901760
      %1348 = vmatmul.f32.gmra.mxu0 %v1347
      %v1349 = vpop.f32.mrf.mxu0
      %v1350 = vadd.f32 %v1316, %v1349
      %v1351 = vand.u32 %v1112, 4294901760
      %1352 = vmatmul.f32.gmra.mxu0 %v1351
      %v1353 = vpop.f32.mrf.mxu0
      %v1354 = vadd.f32 %v1320, %v1353
      %v1355 = vand.u32 %v1115, 4294901760
      %1356 = vmatmul.f32.gmra.mxu0 %v1355
      %v1357 = vpop.f32.mrf.mxu0
      %v1358 = vadd.f32 %v1324, %v1357
      %1359 = vdwg.mxu0
      %1364 = vrot.lane.b32.xlu0 %v1346, 127
      %v1365 = vpop.permute.xlu0 %1364
      %1366 = vrot.lane.b32.xlu0 %v1350, 127
      %v1367 = vpop.permute.xlu0 %1366
      %1368 = vrot.lane.b32.xlu0 %v1354, 127
      %v1369 = vpop.permute.xlu0 %1368
      %1370 = vrot.lane.b32.xlu0 %v1358, 127
      %v1371 = vpop.permute.xlu0 %1370
      %v1376 = vadd.f32 %v1346, %v1365
      %v1377 = vadd.f32 %v1350, %v1367
      %v1378 = vadd.f32 %v1354, %v1369
      %v1379 = vadd.f32 %v1358, %v1371
      %v1380 = vxor.u32 %v1376, 2147483648
      %v1381 = vxor.u32 %v1377, 2147483648
      %v1382 = vxor.u32 %v1378, 2147483648
      %v1383 = vxor.u32 %v1379, 2147483648
      %v1384 = vmul.f32 %v1380, 1.442695
      %v1385 = vpow.pop %v1384
      %v1386 = vmul.f32 %v1381, 1.442695
      %v1387 = vpow.pop %v1386
      %v1388 = vmul.f32 %v1382, 1.442695
      %v1389 = vpow.pop %v1388
      %v1390 = vmul.f32 %v1383, 1.442695
      %v1391 = vpow.pop %v1390
      %v1392 = vadd.f32 %v1385, 1.0
      %v1393 = vadd.f32 %v1387, 1.0
      %v1394 = vadd.f32 %v1389, 1.0
      %v1395 = vadd.f32 %v1391, 1.0
      %v1396 = vrcp.pop %v1392
      %v1397 = vmul.f32 %v1392, %v1396
      %v1398 = vsub.f32 1.0, %v1397
      %v1399 = vmul.f32 %v1396, %v1398
      %v1400 = vadd.f32 %v1396, %v1399
      %vm1401 = vweird.f32 %v1392
      %vm1402 = vweird.f32 %v1396
      %vm1403 = vmor %vm1401, %vm1402
      %v1404 = vsel %vm1403, %v1396, %v1400
      %v1405 = vand.u32 2147483647, %v1392
      %vm1406 = vcmp.eq.f32.partialorder %v1405, 8.507059e+37
      %v1407 = vand.u32 %v1392, 2147483648
      %v1408 = vor.u32 1.1754944e-38, %v1407
      %v1409 = vsel %vm1406, %v1408, %v1404
      %v1410 = vmul.f32 1.0, %v1409
      %v1411 = vrcp.pop %v1393
      %v1412 = vmul.f32 %v1393, %v1411
      %v1413 = vsub.f32 1.0, %v1412
      %v1414 = vmul.f32 %v1411, %v1413
      %v1415 = vadd.f32 %v1411, %v1414
      %vm1416 = vweird.f32 %v1393
      %vm1417 = vweird.f32 %v1411
      %vm1418 = vmor %vm1416, %vm1417
      %v1419 = vsel %vm1418, %v1411, %v1415
      %v1420 = vand.u32 2147483647, %v1393
      %vm1421 = vcmp.eq.f32.partialorder %v1420, 8.507059e+37
      %v1422 = vand.u32 %v1393, 2147483648
      %v1423 = vor.u32 1.1754944e-38, %v1422
      %v1424 = vsel %vm1421, %v1423, %v1419
      %v1425 = vmul.f32 1.0, %v1424
      %v1426 = vrcp.pop %v1394
      %v1427 = vmul.f32 %v1394, %v1426
      %v1428 = vsub.f32 1.0, %v1427
      %v1429 = vmul.f32 %v1426, %v1428
      %v1430 = vadd.f32 %v1426, %v1429
      %vm1431 = vweird.f32 %v1394
      %vm1432 = vweird.f32 %v1426
      %vm1433 = vmor %vm1431, %vm1432
      %v1434 = vsel %vm1433, %v1426, %v1430
      %v1435 = vand.u32 2147483647, %v1394
      %vm1436 = vcmp.eq.f32.partialorder %v1435, 8.507059e+37
      %v1437 = vand.u32 %v1394, 2147483648
      %v1438 = vor.u32 1.1754944e-38, %v1437
      %v1439 = vsel %vm1436, %v1438, %v1434
      %v1440 = vmul.f32 1.0, %v1439
      %v1441 = vrcp.pop %v1395
      %v1442 = vmul.f32 %v1395, %v1441
      %v1443 = vsub.f32 1.0, %v1442
      %v1444 = vmul.f32 %v1441, %v1443
      %v1445 = vadd.f32 %v1441, %v1444
      %vm1446 = vweird.f32 %v1395
      %vm1447 = vweird.f32 %v1441
      %vm1448 = vmor %vm1446, %vm1447
      %v1449 = vsel %vm1448, %v1441, %v1445
      %v1450 = vand.u32 2147483647, %v1395
      %vm1451 = vcmp.eq.f32.partialorder %v1450, 8.507059e+37
      %v1452 = vand.u32 %v1395, 2147483648
      %v1453 = vor.u32 1.1754944e-38, %v1452
      %v1454 = vsel %vm1451, %v1453, %v1449
      %v1455 = vmul.f32 1.0, %v1454
      %v1460 = vrot.slane %v1410, 1
      %v1461 = vrot.slane %v1410, 2
      %v1462 = vrot.slane %v1410, 3
      %v1463 = vrot.slane %v1410, 4
      %v1464 = vrot.slane %v1410, 5
      %v1465 = vrot.slane %v1410, 6
      %v1466 = vrot.slane %v1410, 7
      %v1467 = vrot.slane %v1425, 1
      %v1468 = vrot.slane %v1425, 2
      %v1469 = vrot.slane %v1425, 3
      %v1470 = vrot.slane %v1425, 4
      %v1471 = vrot.slane %v1425, 5
      %v1472 = vrot.slane %v1425, 6
      %v1473 = vrot.slane %v1425, 7
      %v1474 = vrot.slane %v1440, 1
      %v1475 = vrot.slane %v1440, 2
      %v1476 = vrot.slane %v1440, 3
      %v1477 = vrot.slane %v1440, 4
      %v1478 = vrot.slane %v1440, 5
      %v1479 = vrot.slane %v1440, 6
      %v1480 = vrot.slane %v1440, 7
      %v1481 = vrot.slane %v1455, 1
      %v1482 = vrot.slane %v1455, 2
      %v1483 = vrot.slane %v1455, 3
      %v1484 = vrot.slane %v1455, 4
      %v1485 = vrot.slane %v1455, 5
      %v1486 = vrot.slane %v1455, 6
      %v1487 = vrot.slane %v1455, 7
      %v1488 = vperm.slane %v1410, 0
      %v1489 = vperm.slane %v1460, 0
      %v1490 = vperm.slane %v1461, 0
      %v1491 = vperm.slane %v1462, 0
      %v1492 = vperm.slane %v1463, 0
      %v1493 = vperm.slane %v1464, 0
      %v1494 = vperm.slane %v1465, 0
      %v1495 = vperm.slane %v1466, 0
      %v1496 = vperm.slane %v1425, 0
      %v1497 = vperm.slane %v1467, 0
      %v1498 = vperm.slane %v1468, 0
      %v1499 = vperm.slane %v1469, 0
      %v1500 = vperm.slane %v1470, 0
      %v1501 = vperm.slane %v1471, 0
      %v1502 = vperm.slane %v1472, 0
      %v1503 = vperm.slane %v1473, 0
      %v1504 = vperm.slane %v1440, 0
      %v1505 = vperm.slane %v1474, 0
      %v1506 = vperm.slane %v1475, 0
      %v1507 = vperm.slane %v1476, 0
      %v1508 = vperm.slane %v1477, 0
      %v1509 = vperm.slane %v1478, 0
      %v1510 = vperm.slane %v1479, 0
      %v1511 = vperm.slane %v1480, 0
      %v1512 = vperm.slane %v1455, 0
      %v1513 = vperm.slane %v1481, 0
      %v1514 = vperm.slane %v1482, 0
      %v1515 = vperm.slane %v1483, 0
      %v1516 = vperm.slane %v1484, 0
      %v1517 = vperm.slane %v1485, 0
      %v1518 = vperm.slane %v1486, 0
      %v1519 = vperm.slane %v1487, 0
      %1520 = vset.pattern.permute.xlu0 0
      %1521 = vperm.xlu0 %1520, %v1488
      %v1522 = vpop.permute.xlu0 %1521
      %1524 = vset.pattern.permute.xlu0 0
      %1525 = vperm.xlu0 %1524, %v1489
      %v1526 = vpop.permute.xlu0 %1525
      %1528 = vset.pattern.permute.xlu0 0
      %1529 = vperm.xlu0 %1528, %v1490
      %v1530 = vpop.permute.xlu0 %1529
      %1532 = vset.pattern.permute.xlu0 0
      %1533 = vperm.xlu0 %1532, %v1491
      %v1534 = vpop.permute.xlu0 %1533
      %1536 = vset.pattern.permute.xlu0 0
      %1537 = vperm.xlu0 %1536, %v1492
      %v1538 = vpop.permute.xlu0 %1537
      %1540 = vset.pattern.permute.xlu0 0
      %1541 = vperm.xlu0 %1540, %v1493
      %v1542 = vpop.permute.xlu0 %1541
      %1544 = vset.pattern.permute.xlu0 0
      %1545 = vperm.xlu0 %1544, %v1494
      %v1546 = vpop.permute.xlu0 %1545
      %1548 = vset.pattern.permute.xlu0 0
      %1549 = vperm.xlu0 %1548, %v1495
      %v1550 = vpop.permute.xlu0 %1549
      %1552 = vset.pattern.permute.xlu0 0
      %1553 = vperm.xlu0 %1552, %v1496
      %v1554 = vpop.permute.xlu0 %1553
      %1556 = vset.pattern.permute.xlu0 0
      %1557 = vperm.xlu0 %1556, %v1497
      %v1558 = vpop.permute.xlu0 %1557
      %1560 = vset.pattern.permute.xlu0 0
      %1561 = vperm.xlu0 %1560, %v1498
      %v1562 = vpop.permute.xlu0 %1561
      %1564 = vset.pattern.permute.xlu0 0
      %1565 = vperm.xlu0 %1564, %v1499
      %v1566 = vpop.permute.xlu0 %1565
      %1568 = vset.pattern.permute.xlu0 0
      %1569 = vperm.xlu0 %1568, %v1500
      %v1570 = vpop.permute.xlu0 %1569
      %1572 = vset.pattern.permute.xlu0 0
      %1573 = vperm.xlu0 %1572, %v1501
      %v1574 = vpop.permute.xlu0 %1573
      %1576 = vset.pattern.permute.xlu0 0
      %1577 = vperm.xlu0 %1576, %v1502
      %v1578 = vpop.permute.xlu0 %1577
      %1580 = vset.pattern.permute.xlu0 0
      %1581 = vperm.xlu0 %1580, %v1503
      %v1582 = vpop.permute.xlu0 %1581
      %1584 = vset.pattern.permute.xlu0 0
      %1585 = vperm.xlu0 %1584, %v1504
      %v1586 = vpop.permute.xlu0 %1585
      %1588 = vset.pattern.permute.xlu0 0
      %1589 = vperm.xlu0 %1588, %v1505
      %v1590 = vpop.permute.xlu0 %1589
      %1592 = vset.pattern.permute.xlu0 0
      %1593 = vperm.xlu0 %1592, %v1506
      %v1594 = vpop.permute.xlu0 %1593
      %1596 = vset.pattern.permute.xlu0 0
      %1597 = vperm.xlu0 %1596, %v1507
      %v1598 = vpop.permute.xlu0 %1597
      %1600 = vset.pattern.permute.xlu0 0
      %1601 = vperm.xlu0 %1600, %v1508
      %v1602 = vpop.permute.xlu0 %1601
      %1604 = vset.pattern.permute.xlu0 0
      %1605 = vperm.xlu0 %1604, %v1509
      %v1606 = vpop.permute.xlu0 %1605
      %1608 = vset.pattern.permute.xlu0 0
      %1609 = vperm.xlu0 %1608, %v1510
      %v1610 = vpop.permute.xlu0 %1609
      %1612 = vset.pattern.permute.xlu0 0
      %1613 = vperm.xlu0 %1612, %v1511
      %v1614 = vpop.permute.xlu0 %1613
      %1616 = vset.pattern.permute.xlu0 0
      %1617 = vperm.xlu0 %1616, %v1512
      %v1618 = vpop.permute.xlu0 %1617
      %1620 = vset.pattern.permute.xlu0 0
      %1621 = vperm.xlu0 %1620, %v1513
      %v1622 = vpop.permute.xlu0 %1621
      %1624 = vset.pattern.permute.xlu0 0
      %1625 = vperm.xlu0 %1624, %v1514
      %v1626 = vpop.permute.xlu0 %1625
      %1628 = vset.pattern.permute.xlu0 0
      %1629 = vperm.xlu0 %1628, %v1515
      %v1630 = vpop.permute.xlu0 %1629
      %1632 = vset.pattern.permute.xlu0 0
      %1633 = vperm.xlu0 %1632, %v1516
      %v1634 = vpop.permute.xlu0 %1633
      %1636 = vset.pattern.permute.xlu0 0
      %1637 = vperm.xlu0 %1636, %v1517
      %v1638 = vpop.permute.xlu0 %1637
      %1640 = vset.pattern.permute.xlu0 0
      %1641 = vperm.xlu0 %1640, %v1518
      %v1642 = vpop.permute.xlu0 %1641
      %1644 = vset.pattern.permute.xlu0 0
      %1645 = vperm.xlu0 %1644, %v1519
      %v1646 = vpop.permute.xlu0 %1645
      %v1648 = vmul.f32 %v388, %v1522
      %v1649 = vmul.f32 %v389, %v1522
      %v1650 = vmul.f32 %v390, %v1526
      %v1651 = vmul.f32 %v391, %v1526
      %v1652 = vmul.f32 %v392, %v1530
      %v1653 = vmul.f32 %v393, %v1530
      %v1654 = vmul.f32 %v394, %v1534
      %v1655 = vmul.f32 %v395, %v1534
      %v1656 = vmul.f32 %v396, %v1538
      %v1657 = vmul.f32 %v397, %v1538
      %v1658 = vmul.f32 %v398, %v1542
      %v1659 = vmul.f32 %v399, %v1542
      %v1660 = vmul.f32 %v400, %v1546
      %v1661 = vmul.f32 %v401, %v1546
      %v1662 = vmul.f32 %v402, %v1550
      %v1663 = vmul.f32 %v403, %v1550
      %v1664 = vmul.f32 %v404, %v1554
      %v1665 = vmul.f32 %v405, %v1554
      %v1666 = vmul.f32 %v406, %v1558
      %v1667 = vmul.f32 %v407, %v1558
      %v1668 = vmul.f32 %v408, %v1562
      %v1669 = vmul.f32 %v409, %v1562
      %v1670 = vmul.f32 %v410, %v1566
      %v1671 = vmul.f32 %v411, %v1566
      %v1672 = vmul.f32 %v412, %v1570
      %v1673 = vmul.f32 %v413, %v1570
      %v1674 = vmul.f32 %v414, %v1574
      %v1675 = vmul.f32 %v415, %v1574
      %v1676 = vmul.f32 %v416, %v1578
      %v1677 = vmul.f32 %v417, %v1578
      %v1678 = vmul.f32 %v418, %v1582
      %v1679 = vmul.f32 %v419, %v1582
      %v1680 = vmul.f32 %v420, %v1586
      %v1681 = vmul.f32 %v421, %v1586
      %v1682 = vmul.f32 %v422, %v1590
      %v1683 = vmul.f32 %v423, %v1590
      %v1684 = vmul.f32 %v424, %v1594
      %v1685 = vmul.f32 %v425, %v1594
      %v1686 = vmul.f32 %v426, %v1598
      %v1687 = vmul.f32 %v427, %v1598
      %v1688 = vmul.f32 %v428, %v1602
      %v1689 = vmul.f32 %v429, %v1602
      %v1690 = vmul.f32 %v430, %v1606
      %v1691 = vmul.f32 %v431, %v1606
      %v1692 = vmul.f32 %v432, %v1610
      %v1693 = vmul.f32 %v433, %v1610
      %v1694 = vmul.f32 %v434, %v1614
      %v1695 = vmul.f32 %v435, %v1614
      %v1696 = vmul.f32 %v436, %v1618
      %v1697 = vmul.f32 %v437, %v1618
      %v1698 = vmul.f32 %v438, %v1622
      %v1699 = vmul.f32 %v439, %v1622
      %v1700 = vmul.f32 %v440, %v1626
      %v1701 = vmul.f32 %v441, %v1626
      %v1702 = vmul.f32 %v442, %v1630
      %v1703 = vmul.f32 %v443, %v1630
      %v1704 = vmul.f32 %v444, %v1634
      %v1705 = vmul.f32 %v445, %v1634
      %v1706 = vmul.f32 %v446, %v1638
      %v1707 = vmul.f32 %v447, %v1638
      %v1708 = vmul.f32 %v448, %v1642
      %v1709 = vmul.f32 %v449, %v1642
      %v1710 = vmul.f32 %v450, %v1646
      %v1711 = vmul.f32 %v451, %v1646
      %v1712 = vadd.f32 %v1648, %v1650
      %v1713 = vadd.f32 %v1712, %v1652
      %v1714 = vadd.f32 %v1713, %v1654
      %v1715 = vadd.f32 %v1714, %v1656
      %v1716 = vadd.f32 %v1715, %v1658
      %v1717 = vadd.f32 %v1716, %v1660
      %v1718 = vadd.f32 %v1717, %v1662
      %v1719 = vadd.f32 %v1718, %v1664
      %v1720 = vadd.f32 %v1719, %v1666
      %v1721 = vadd.f32 %v1720, %v1668
      %v1722 = vadd.f32 %v1721, %v1670
      %v1723 = vadd.f32 %v1722, %v1672
      %v1724 = vadd.f32 %v1723, %v1674
      %v1725 = vadd.f32 %v1724, %v1676
      %v1726 = vadd.f32 %v1725, %v1678
      %v1727 = vadd.f32 %v1726, %v1680
      %v1728 = vadd.f32 %v1727, %v1682
      %v1729 = vadd.f32 %v1728, %v1684
      %v1730 = vadd.f32 %v1729, %v1686
      %v1731 = vadd.f32 %v1730, %v1688
      %v1732 = vadd.f32 %v1731, %v1690
      %v1733 = vadd.f32 %v1732, %v1692
      %v1734 = vadd.f32 %v1733, %v1694
      %v1735 = vadd.f32 %v1734, %v1696
      %v1736 = vadd.f32 %v1735, %v1698
      %v1737 = vadd.f32 %v1736, %v1700
      %v1738 = vadd.f32 %v1737, %v1702
      %v1739 = vadd.f32 %v1738, %v1704
      %v1740 = vadd.f32 %v1739, %v1706
      %v1741 = vadd.f32 %v1740, %v1708
      %v1742 = vadd.f32 %v1741, %v1710
      %v1743 = vadd.f32 %v1649, %v1651
      %v1744 = vadd.f32 %v1743, %v1653
      %v1745 = vadd.f32 %v1744, %v1655
      %v1746 = vadd.f32 %v1745, %v1657
      %v1747 = vadd.f32 %v1746, %v1659
      %v1748 = vadd.f32 %v1747, %v1661
      %v1749 = vadd.f32 %v1748, %v1663
      %v1750 = vadd.f32 %v1749, %v1665
      %v1751 = vadd.f32 %v1750, %v1667
      %v1752 = vadd.f32 %v1751, %v1669
      %v1753 = vadd.f32 %v1752, %v1671
      %v1754 = vadd.f32 %v1753, %v1673
      %v1755 = vadd.f32 %v1754, %v1675
      %v1756 = vadd.f32 %v1755, %v1677
      %v1757 = vadd.f32 %v1756, %v1679
      %v1758 = vadd.f32 %v1757, %v1681
      %v1759 = vadd.f32 %v1758, %v1683
      %v1760 = vadd.f32 %v1759, %v1685
      %v1761 = vadd.f32 %v1760, %v1687
      %v1762 = vadd.f32 %v1761, %v1689
      %v1763 = vadd.f32 %v1762, %v1691
      %v1764 = vadd.f32 %v1763, %v1693
      %v1765 = vadd.f32 %v1764, %v1695
      %v1766 = vadd.f32 %v1765, %v1697
      %v1767 = vadd.f32 %v1766, %v1699
      %v1768 = vadd.f32 %v1767, %v1701
      %v1769 = vadd.f32 %v1768, %v1703
      %v1770 = vadd.f32 %v1769, %v1705
      %v1771 = vadd.f32 %v1770, %v1707
      %v1772 = vadd.f32 %v1771, %v1709
      %v1773 = vadd.f32 %v1772, %v1711
      %v1774 = vmax.f32 %v1648, %v1652
      %v1775 = vmax.f32 %v1650, %v1654
      %v1776 = vmax.f32 %v1774, %v1656
      %v1777 = vmax.f32 %v1775, %v1658
      %v1778 = vmax.f32 %v1776, %v1660
      %v1779 = vmax.f32 %v1777, %v1662
      %v1780 = vmax.f32 %v1778, %v1664
      %v1781 = vmax.f32 %v1779, %v1666
      %v1782 = vmax.f32 %v1780, %v1668
      %v1783 = vmax.f32 %v1781, %v1670
      %v1784 = vmax.f32 %v1782, %v1672
      %v1785 = vmax.f32 %v1783, %v1674
      %v1786 = vmax.f32 %v1784, %v1676
      %v1787 = vmax.f32 %v1785, %v1678
      %v1788 = vmax.f32 %v1786, %v1680
      %v1789 = vmax.f32 %v1787, %v1682
      %v1790 = vmax.f32 %v1788, %v1684
      %v1791 = vmax.f32 %v1789, %v1686
      %v1792 = vmax.f32 %v1790, %v1688
      %v1793 = vmax.f32 %v1791, %v1690
      %v1794 = vmax.f32 %v1792, %v1692
      %v1795 = vmax.f32 %v1793, %v1694
      %v1796 = vmax.f32 %v1794, %v1696
      %v1797 = vmax.f32 %v1795, %v1698
      %v1798 = vmax.f32 %v1796, %v1700
      %v1799 = vmax.f32 %v1797, %v1702
      %v1800 = vmax.f32 %v1798, %v1704
      %v1801 = vmax.f32 %v1799, %v1706
      %v1802 = vmax.f32 %v1800, %v1708
      %v1803 = vmax.f32 %v1801, %v1710
      %v1804 = vmax.f32 %v1802, %v1803
      %v1805 = vmax.f32 %v1649, %v1653
      %v1806 = vmax.f32 %v1651, %v1655
      %v1807 = vmax.f32 %v1805, %v1657
      %v1808 = vmax.f32 %v1806, %v1659
      %v1809 = vmax.f32 %v1807, %v1661
      %v1810 = vmax.f32 %v1808, %v1663
      %v1811 = vmax.f32 %v1809, %v1665
      %v1812 = vmax.f32 %v1810, %v1667
      %v1813 = vmax.f32 %v1811, %v1669
      %v1814 = vmax.f32 %v1812, %v1671
      %v1815 = vmax.f32 %v1813, %v1673
      %v1816 = vmax.f32 %v1814, %v1675
      %v1817 = vmax.f32 %v1815, %v1677
      %v1818 = vmax.f32 %v1816, %v1679
      %v1819 = vmax.f32 %v1817, %v1681
      %v1820 = vmax.f32 %v1818, %v1683
      %v1821 = vmax.f32 %v1819, %v1685
      %v1822 = vmax.f32 %v1820, %v1687
      %v1823 = vmax.f32 %v1821, %v1689
      %v1824 = vmax.f32 %v1822, %v1691
      %v1825 = vmax.f32 %v1823, %v1693
      %v1826 = vmax.f32 %v1824, %v1695
      %v1827 = vmax.f32 %v1825, %v1697
      %v1828 = vmax.f32 %v1826, %v1699
      %v1829 = vmax.f32 %v1827, %v1701
      %v1830 = vmax.f32 %v1828, %v1703
      %v1831 = vmax.f32 %v1829, %v1705
      %v1832 = vmax.f32 %v1830, %v1707
      %v1833 = vmax.f32 %v1831, %v1709
      %v1834 = vmax.f32 %v1832, %v1711
      %v1835 = vmax.f32 %v1833, %v1834
      %v1836 = vadd.f32 %v1742, %v1773
      %1837 = vadd.xlane.f32.xlu0 %v1836
      %v1838 = vpop.xlane.xlu0 %1837
      %v1839 = vmul.f32 %v1838, 0.00012207031
      %v1840 = vmax.f32 %v1804, %v1835
      %1841 = vmax.xlane.f32.xlu0 %v1840
      %v1842 = vpop.xlane.xlu0 %1841
      %v1843 = vsel %vm874, %v1839, %v1842
      %v1844 = vld [vmem:[%s5] sm:$0xf]
      %v1845 = vld [vmem:[%s6] sm:$0xf]
      %1847 = vset.pattern.permute.xlu0 0
      %1848 = vperm.xlu0 %1847, %v1845
      %v1849 = vpop.permute.xlu0 %1848
      %v1852 = vsel %vm749, %v1844, 0
      %1854 = vmatpush.msra.mxu0 0.0
      %1855 = vmatpush.msra.mxu0 0.0
      %1856 = vmatpush.msra.mxu0 0.0
      %1857 = vmatpush.msra.mxu0 0.0
      %1858 = vmatpush.msra.mxu0 0.0
      %1859 = vmatpush.msra.mxu0 0.0
      %1860 = vmatpush.msra.mxu0 0.0
      %1861 = vmatpush.msra.mxu0 0.0
      %1862 = vmatpush.msra.mxu0 0.0
      %1863 = vmatpush.msra.mxu0 0.0
      %1864 = vmatpush.msra.mxu0 0.0
      %1865 = vmatpush.msra.mxu0 0.0
      %1866 = vmatpush.msra.mxu0 0.0
      %1867 = vmatpush.msra.mxu0 0.0
      %1868 = vmatpush.msra.mxu0 0.0
      %v1869 = vand.u32 %v1843, 4294901760
      %1870 = vmatpush.msra.mxu0 %v1869
      %v1871 = vand.u32 %v1852, 4294901760
      %v1872 = vsub.f32 %v1852, %v1871
      %v1873 = vand.u32 %v1872, 4294901760
      %v1874 = vsub.f32 %v1872, %v1873
      %v1875 = vand.u32 %v1874, 4294901760
      %1876 = vmatmul.f32.gmra.mxu0 %v1875
      %v1877 = vpop.f32.mrf.mxu0
      %v1878 = vadd.f32 %v1849, %v1877
      %1879 = vdwg.mxu0
      %1880 = vmatpush.msra.mxu0 0.0
      %1881 = vmatpush.msra.mxu0 0.0
      %1882 = vmatpush.msra.mxu0 0.0
      %1883 = vmatpush.msra.mxu0 0.0
      %1884 = vmatpush.msra.mxu0 0.0
      %1885 = vmatpush.msra.mxu0 0.0
      %1886 = vmatpush.msra.mxu0 0.0
      %1887 = vmatpush.msra.mxu0 0.0
      %1888 = vmatpush.msra.mxu0 0.0
      %1889 = vmatpush.msra.mxu0 0.0
      %1890 = vmatpush.msra.mxu0 0.0
      %1891 = vmatpush.msra.mxu0 0.0
      %1892 = vmatpush.msra.mxu0 0.0
      %1893 = vmatpush.msra.mxu0 0.0
      %1894 = vmatpush.msra.mxu0 0.0
      %v1895 = vand.u32 %v1843, 4294901760
      %v1896 = vsub.f32 %v1843, %v1895
      %v1897 = vand.u32 %v1896, 4294901760
      %v1898 = vsub.f32 %v1896, %v1897
      %v1899 = vand.u32 %v1898, 4294901760
      %1900 = vmatpush.msra.mxu0 %v1899
      %v1901 = vand.u32 %v1852, 4294901760
      %1902 = vmatmul.f32.gmra.mxu0 %v1901
      %v1903 = vpop.f32.mrf.mxu0
      %v1904 = vadd.f32 %v1878, %v1903
      %1905 = vdwg.mxu0
      %1906 = vmatpush.msra.mxu0 0.0
      %1907 = vmatpush.msra.mxu0 0.0
      %1908 = vmatpush.msra.mxu0 0.0
      %1909 = vmatpush.msra.mxu0 0.0
      %1910 = vmatpush.msra.mxu0 0.0
      %1911 = vmatpush.msra.mxu0 0.0
      %1912 = vmatpush.msra.mxu0 0.0
      %1913 = vmatpush.msra.mxu0 0.0
      %1914 = vmatpush.msra.mxu0 0.0
      %1915 = vmatpush.msra.mxu0 0.0
      %1916 = vmatpush.msra.mxu0 0.0
      %1917 = vmatpush.msra.mxu0 0.0
      %1918 = vmatpush.msra.mxu0 0.0
      %1919 = vmatpush.msra.mxu0 0.0
      %1920 = vmatpush.msra.mxu0 0.0
      %v1921 = vand.u32 %v1843, 4294901760
      %v1922 = vsub.f32 %v1843, %v1921
      %1923 = vmatpush.msra.mxu0 %v1922
      %v1924 = vand.u32 %v1852, 4294901760
      %v1925 = vsub.f32 %v1852, %v1924
      %1926 = vmatmul.f32.gmra.mxu0 %v1925
      %v1927 = vpop.f32.mrf.mxu0
      %v1928 = vadd.f32 %v1904, %v1927
      %1929 = vdwg.mxu0
      %1930 = vmatpush.msra.mxu0 0.0
      %1931 = vmatpush.msra.mxu0 0.0
      %1932 = vmatpush.msra.mxu0 0.0
      %1933 = vmatpush.msra.mxu0 0.0
      %1934 = vmatpush.msra.mxu0 0.0
      %1935 = vmatpush.msra.mxu0 0.0
      %1936 = vmatpush.msra.mxu0 0.0
      %1937 = vmatpush.msra.mxu0 0.0
      %1938 = vmatpush.msra.mxu0 0.0
      %1939 = vmatpush.msra.mxu0 0.0
      %1940 = vmatpush.msra.mxu0 0.0
      %1941 = vmatpush.msra.mxu0 0.0
      %1942 = vmatpush.msra.mxu0 0.0
      %1943 = vmatpush.msra.mxu0 0.0
      %1944 = vmatpush.msra.mxu0 0.0
      %v1945 = vand.u32 %v1843, 4294901760
      %1946 = vmatpush.msra.mxu0 %v1945
      %v1947 = vand.u32 %v1852, 4294901760
      %v1948 = vsub.f32 %v1852, %v1947
      %v1949 = vand.u32 %v1948, 4294901760
      %1950 = vmatmul.f32.gmra.mxu0 %v1949
      %v1951 = vpop.f32.mrf.mxu0
      %v1952 = vadd.f32 %v1928, %v1951
      %1953 = vdwg.mxu0
      %1954 = vmatpush.msra.mxu0 0.0
      %1955 = vmatpush.msra.mxu0 0.0
      %1956 = vmatpush.msra.mxu0 0.0
      %1957 = vmatpush.msra.mxu0 0.0
      %1958 = vmatpush.msra.mxu0 0.0
      %1959 = vmatpush.msra.mxu0 0.0
      %1960 = vmatpush.msra.mxu0 0.0
      %1961 = vmatpush.msra.mxu0 0.0
      %1962 = vmatpush.msra.mxu0 0.0
      %1963 = vmatpush.msra.mxu0 0.0
      %1964 = vmatpush.msra.mxu0 0.0
      %1965 = vmatpush.msra.mxu0 0.0
      %1966 = vmatpush.msra.mxu0 0.0
      %1967 = vmatpush.msra.mxu0 0.0
      %1968 = vmatpush.msra.mxu0 0.0
      %v1969 = vand.u32 %v1843, 4294901760
      %v1970 = vsub.f32 %v1843, %v1969
      %v1971 = vand.u32 %v1970, 4294901760
      %1972 = vmatpush.msra.mxu0 %v1971
      %v1973 = vand.u32 %v1852, 4294901760
      %1974 = vmatmul.f32.gmra.mxu0 %v1973
      %v1975 = vpop.f32.mrf.mxu0
      %v1976 = vadd.f32 %v1952, %v1975
      %1977 = vdwg.mxu0
      %1978 = vmatpush.msra.mxu0 0.0
      %1979 = vmatpush.msra.mxu0 0.0
      %1980 = vmatpush.msra.mxu0 0.0
      %1981 = vmatpush.msra.mxu0 0.0
      %1982 = vmatpush.msra.mxu0 0.0
      %1983 = vmatpush.msra.mxu0 0.0
      %1984 = vmatpush.msra.mxu0 0.0
      %1985 = vmatpush.msra.mxu0 0.0
      %1986 = vmatpush.msra.mxu0 0.0
      %1987 = vmatpush.msra.mxu0 0.0
      %1988 = vmatpush.msra.mxu0 0.0
      %1989 = vmatpush.msra.mxu0 0.0
      %1990 = vmatpush.msra.mxu0 0.0
      %1991 = vmatpush.msra.mxu0 0.0
      %1992 = vmatpush.msra.mxu0 0.0
      %v1993 = vand.u32 %v1843, 4294901760
      %1994 = vmatpush.msra.mxu0 %v1993
      %v1995 = vand.u32 %v1852, 4294901760
      %1996 = vmatmul.f32.gmra.mxu0 %v1995
      %v1997 = vpop.f32.mrf.mxu0
      %v1998 = vadd.f32 %v1976, %v1997
      %1999 = vdwg.mxu0
      %v2000 = vmax.f32 %v1998, 0.0
      %v2001 = vld [vmem:[%s7] sm:$0xff]
      %v2002 = vld [vmem:[%s8] sm:$0xff]
      %2004 = vset.pattern.permute.xlu0 0
      %2005 = vperm.xlu0 %2004, %v2002
      %v2006 = vpop.permute.xlu0 %2005
      %vm2008 = vcmask 31744
      %v2010 = vsel %vm2008, %v2001, 0
      %vm2012 = vcmask 1043456
      %v2014 = vsel %vm2012, %v2000, 0
      %2016 = vmatpush.msra.mxu0 0.0
      %2017 = vmatpush.msra.mxu0 0.0
      %2018 = vmatpush.msra.mxu0 0.0
      %2019 = vmatpush.msra.mxu0 0.0
      %2020 = vmatpush.msra.mxu0 0.0
      %2021 = vmatpush.msra.mxu0 0.0
      %2022 = vmatpush.msra.mxu0 0.0
      %2023 = vmatpush.msra.mxu0 0.0
      %2024 = vmatpush.msra.mxu0 0.0
      %2025 = vmatpush.msra.mxu0 0.0
      %2026 = vmatpush.msra.mxu0 0.0
      %2027 = vmatpush.msra.mxu0 0.0
      %2028 = vmatpush.msra.mxu0 0.0
      %2029 = vmatpush.msra.mxu0 0.0
      %2030 = vmatpush.msra.mxu0 0.0
      %v2031 = vand.u32 %v2014, 4294901760
      %2032 = vmatpush.msra.mxu0 %v2031
      %v2033 = vand.u32 %v2010, 4294901760
      %v2034 = vsub.f32 %v2010, %v2033
      %v2035 = vand.u32 %v2034, 4294901760
      %v2036 = vsub.f32 %v2034, %v2035
      %v2037 = vand.u32 %v2036, 4294901760
      %2038 = vmatmul.f32.gmra.mxu0 %v2037
      %v2039 = vpop.f32.mrf.mxu0
      %v2040 = vadd.f32 %v2006, %v2039
      %2041 = vdwg.mxu0
      %2042 = vmatpush.msra.mxu0 0.0
      %2043 = vmatpush.msra.mxu0 0.0
      %2044 = vmatpush.msra.mxu0 0.0
      %2045 = vmatpush.msra.mxu0 0.0
      %2046 = vmatpush.msra.mxu0 0.0
      %2047 = vmatpush.msra.mxu0 0.0
      %2048 = vmatpush.msra.mxu0 0.0
      %2049 = vmatpush.msra.mxu0 0.0
      %2050 = vmatpush.msra.mxu0 0.0
      %2051 = vmatpush.msra.mxu0 0.0
      %2052 = vmatpush.msra.mxu0 0.0
      %2053 = vmatpush.msra.mxu0 0.0
      %2054 = vmatpush.msra.mxu0 0.0
      %2055 = vmatpush.msra.mxu0 0.0
      %2056 = vmatpush.msra.mxu0 0.0
      %v2057 = vand.u32 %v2014, 4294901760
      %v2058 = vsub.f32 %v2014, %v2057
      %v2059 = vand.u32 %v2058, 4294901760
      %v2060 = vsub.f32 %v2058, %v2059
      %v2061 = vand.u32 %v2060, 4294901760
      %2062 = vmatpush.msra.mxu0 %v2061
      %v2063 = vand.u32 %v2010, 4294901760
      %2064 = vmatmul.f32.gmra.mxu0 %v2063
      %v2065 = vpop.f32.mrf.mxu0
      %v2066 = vadd.f32 %v2040, %v2065
      %2067 = vdwg.mxu0
      %2068 = vmatpush.msra.mxu0 0.0
      %2069 = vmatpush.msra.mxu0 0.0
      %2070 = vmatpush.msra.mxu0 0.0
      %2071 = vmatpush.msra.mxu0 0.0
      %2072 = vmatpush.msra.mxu0 0.0
      %2073 = vmatpush.msra.mxu0 0.0
      %2074 = vmatpush.msra.mxu0 0.0
      %2075 = vmatpush.msra.mxu0 0.0
      %2076 = vmatpush.msra.mxu0 0.0
      %2077 = vmatpush.msra.mxu0 0.0
      %2078 = vmatpush.msra.mxu0 0.0
      %2079 = vmatpush.msra.mxu0 0.0
      %2080 = vmatpush.msra.mxu0 0.0
      %2081 = vmatpush.msra.mxu0 0.0
      %2082 = vmatpush.msra.mxu0 0.0
      %v2083 = vand.u32 %v2014, 4294901760
      %v2084 = vsub.f32 %v2014, %v2083
      %2085 = vmatpush.msra.mxu0 %v2084
      %v2086 = vand.u32 %v2010, 4294901760
      %v2087 = vsub.f32 %v2010, %v2086
      %2088 = vmatmul.f32.gmra.mxu0 %v2087
      %v2089 = vpop.f32.mrf.mxu0
      %v2090 = vadd.f32 %v2066, %v2089
      %2091 = vdwg.mxu0
      %2092 = vmatpush.msra.mxu0 0.0
      %2093 = vmatpush.msra.mxu0 0.0
      %2094 = vmatpush.msra.mxu0 0.0
      %2095 = vmatpush.msra.mxu0 0.0
      %2096 = vmatpush.msra.mxu0 0.0
      %2097 = vmatpush.msra.mxu0 0.0
      %2098 = vmatpush.msra.mxu0 0.0
      %2099 = vmatpush.msra.mxu0 0.0
      %2100 = vmatpush.msra.mxu0 0.0
      %2101 = vmatpush.msra.mxu0 0.0
      %2102 = vmatpush.msra.mxu0 0.0
      %2103 = vmatpush.msra.mxu0 0.0
      %2104 = vmatpush.msra.mxu0 0.0
      %2105 = vmatpush.msra.mxu0 0.0
      %2106 = vmatpush.msra.mxu0 0.0
      %v2107 = vand.u32 %v2014, 4294901760
      %2108 = vmatpush.msra.mxu0 %v2107
      %v2109 = vand.u32 %v2010, 4294901760
      %v2110 = vsub.f32 %v2010, %v2109
      %v2111 = vand.u32 %v2110, 4294901760
      %2112 = vmatmul.f32.gmra.mxu0 %v2111
      %v2113 = vpop.f32.mrf.mxu0
      %v2114 = vadd.f32 %v2090, %v2113
      %2115 = vdwg.mxu0
      %2116 = vmatpush.msra.mxu0 0.0
      %2117 = vmatpush.msra.mxu0 0.0
      %2118 = vmatpush.msra.mxu0 0.0
      %2119 = vmatpush.msra.mxu0 0.0
      %2120 = vmatpush.msra.mxu0 0.0
      %2121 = vmatpush.msra.mxu0 0.0
      %2122 = vmatpush.msra.mxu0 0.0
      %2123 = vmatpush.msra.mxu0 0.0
      %2124 = vmatpush.msra.mxu0 0.0
      %2125 = vmatpush.msra.mxu0 0.0
      %2126 = vmatpush.msra.mxu0 0.0
      %2127 = vmatpush.msra.mxu0 0.0
      %2128 = vmatpush.msra.mxu0 0.0
      %2129 = vmatpush.msra.mxu0 0.0
      %2130 = vmatpush.msra.mxu0 0.0
      %v2131 = vand.u32 %v2014, 4294901760
      %v2132 = vsub.f32 %v2014, %v2131
      %v2133 = vand.u32 %v2132, 4294901760
      %2134 = vmatpush.msra.mxu0 %v2133
      %v2135 = vand.u32 %v2010, 4294901760
      %2136 = vmatmul.f32.gmra.mxu0 %v2135
      %v2137 = vpop.f32.mrf.mxu0
      %v2138 = vadd.f32 %v2114, %v2137
      %2139 = vdwg.mxu0
      %2140 = vmatpush.msra.mxu0 0.0
      %2141 = vmatpush.msra.mxu0 0.0
      %2142 = vmatpush.msra.mxu0 0.0
      %2143 = vmatpush.msra.mxu0 0.0
      %2144 = vmatpush.msra.mxu0 0.0
      %2145 = vmatpush.msra.mxu0 0.0
      %2146 = vmatpush.msra.mxu0 0.0
      %2147 = vmatpush.msra.mxu0 0.0
      %2148 = vmatpush.msra.mxu0 0.0
      %2149 = vmatpush.msra.mxu0 0.0
      %2150 = vmatpush.msra.mxu0 0.0
      %2151 = vmatpush.msra.mxu0 0.0
      %2152 = vmatpush.msra.mxu0 0.0
      %2153 = vmatpush.msra.mxu0 0.0
      %2154 = vmatpush.msra.mxu0 0.0
      %v2155 = vand.u32 %v2014, 4294901760
      %2156 = vmatpush.msra.mxu0 %v2155
      %v2157 = vand.u32 %v2010, 4294901760
      %2158 = vmatmul.f32.gmra.mxu0 %v2157
      %v2159 = vpop.f32.mrf.mxu0
      %v2160 = vadd.f32 %v2138, %v2159
      %2161 = vdwg.mxu0
      %2163 = vrot.lane.b32.xlu0 %v2160, 127
      %v2164 = vpop.permute.xlu0 %2163
      %v2166 = vadd.f32 %v2160, %v2164
      %v2167 = vxor.u32 %v2166, 2147483648
      %v2168 = vmul.f32 %v2167, 1.442695
      %v2169 = vpow.pop %v2168
      %v2170 = vadd.f32 %v2169, 1.0
      %v2171 = vrcp.pop %v2170
      %v2172 = vmul.f32 %v2170, %v2171
      %v2173 = vsub.f32 1.0, %v2172
      %v2174 = vmul.f32 %v2171, %v2173
      %v2175 = vadd.f32 %v2171, %v2174
      %vm2176 = vweird.f32 %v2170
      %vm2177 = vweird.f32 %v2171
      %vm2178 = vmor %vm2176, %vm2177
      %v2179 = vsel %vm2178, %v2171, %v2175
      %v2180 = vand.u32 2147483647, %v2170
      %vm2181 = vcmp.eq.f32.partialorder %v2180, 8.507059e+37
      %v2182 = vand.u32 %v2170, 2147483648
      %v2183 = vor.u32 1.1754944e-38, %v2182
      %v2184 = vsel %vm2181, %v2183, %v2179
      %v2185 = vmul.f32 1.0, %v2184
      %2187 = vset.pattern.permute.xlu0 0
      %2188 = vperm.xlu0 %2187, %v2185
      %v2189 = vpop.permute.xlu0 %2188
      %v2191 = vmul.f32 %v1804, %v2189
      %v2192 = vmul.f32 %v1835, %v2189
      %v2193 = vmul.f32 %v2185, 0.03125
      %2195 = vset.pattern.permute.xlu0 0
      %2196 = vperm.xlu0 %2195, %v2193
      %v2197 = vpop.permute.xlu0 %2196
      %v2199 = vmul.f32 %v1742, %v2197
      %v2200 = vmul.f32 %v1773, %v2197
      %v2203 = vrot.slane %v2191, 5
      %v2204 = vrot.slane %v2192, 5
      %vm2207 = vcmask 1042432
      %v2208 = vsel %vm2207, 0.0, %v2203
      %v2209 = vsel %vm2207, 0.0, %v2204
      %v2210 = vsel %vm2207, %v2203, 0.0
      %v2211 = vsel %vm2207, %v2204, 0.0
      %v2214 = vrot.slane %v2199, 5
      %v2215 = vrot.slane %v2200, 5
      %v2218 = vsel %vm2207, 0.0, %v2214
      %v2219 = vsel %vm2207, 0.0, %v2215
      %v2220 = vsel %vm2207, %v2214, 0.0
      %v2221 = vsel %vm2207, %v2215, 0.0
      %vm2226 = vcmask 1046528
      %v2227 = vrot.slane %v2208, 1
      %v2228 = vrot.slane %v2210, 1
      %v2229 = vsel %vm2226, %v2227, %v2228
      %v2230 = vrot.slane %v2209, 1
      %v2231 = vrot.slane %v2211, 1
      %v2232 = vsel %vm2226, %v2230, %v2231
      %vm2235 = vcmask 1045504
      %v2236 = vrot.slane %v2208, 2
      %v2237 = vrot.slane %v2210, 2
      %v2238 = vsel %vm2235, %v2236, %v2237
      %v2239 = vrot.slane %v2209, 2
      %v2240 = vrot.slane %v2211, 2
      %v2241 = vsel %vm2235, %v2239, %v2240
      %vm2244 = vcmask 1044480
      %v2245 = vrot.slane %v2208, 3
      %v2246 = vrot.slane %v2210, 3
      %v2247 = vsel %vm2244, %v2245, %v2246
      %v2248 = vrot.slane %v2209, 3
      %v2249 = vrot.slane %v2211, 3
      %v2250 = vsel %vm2244, %v2248, %v2249
      %v2253 = vrot.slane %v2208, 4
      %v2254 = vrot.slane %v2210, 4
      %v2255 = vsel %vm2012, %v2253, %v2254
      %v2256 = vrot.slane %v2209, 4
      %v2257 = vrot.slane %v2211, 4
      %v2258 = vsel %vm2012, %v2256, %v2257
      %v2261 = vrot.slane %v2208, 5
      %v2262 = vrot.slane %v2210, 5
      %v2263 = vsel %vm2207, %v2261, %v2262
      %v2264 = vrot.slane %v2209, 5
      %v2265 = vrot.slane %v2211, 5
      %v2266 = vsel %vm2207, %v2264, %v2265
      %v2269 = vrot.slane %v2208, 6
      %v2270 = vrot.slane %v2210, 6
      %v2271 = vsel %vm1117, %v2269, %v2270
      %v2272 = vrot.slane %v2209, 6
      %v2273 = vrot.slane %v2211, 6
      %v2274 = vsel %vm1117, %v2272, %v2273
      %v2281 = vrot.slane %v2218, 1
      %v2282 = vrot.slane %v2220, 1
      %v2283 = vsel %vm2226, %v2281, %v2282
      %v2284 = vrot.slane %v2219, 1
      %v2285 = vrot.slane %v2221, 1
      %v2286 = vsel %vm2226, %v2284, %v2285
      %v2289 = vrot.slane %v2218, 2
      %v2290 = vrot.slane %v2220, 2
      %v2291 = vsel %vm2235, %v2289, %v2290
      %v2292 = vrot.slane %v2219, 2
      %v2293 = vrot.slane %v2221, 2
      %v2294 = vsel %vm2235, %v2292, %v2293
      %v2297 = vrot.slane %v2218, 3
      %v2298 = vrot.slane %v2220, 3
      %v2299 = vsel %vm2244, %v2297, %v2298
      %v2300 = vrot.slane %v2219, 3
      %v2301 = vrot.slane %v2221, 3
      %v2302 = vsel %vm2244, %v2300, %v2301
      %v2305 = vrot.slane %v2218, 4
      %v2306 = vrot.slane %v2220, 4
      %v2307 = vsel %vm2012, %v2305, %v2306
      %v2308 = vrot.slane %v2219, 4
      %v2309 = vrot.slane %v2221, 4
      %v2310 = vsel %vm2012, %v2308, %v2309
      %v2313 = vrot.slane %v2218, 5
      %v2314 = vrot.slane %v2220, 5
      %v2315 = vsel %vm2207, %v2313, %v2314
      %v2316 = vrot.slane %v2219, 5
      %v2317 = vrot.slane %v2221, 5
      %v2318 = vsel %vm2207, %v2316, %v2317
      %v2321 = vrot.slane %v2218, 6
      %v2322 = vrot.slane %v2220, 6
      %v2323 = vsel %vm1117, %v2321, %v2322
      %v2324 = vrot.slane %v2219, 6
      %v2325 = vrot.slane %v2221, 6
      %v2326 = vsel %vm1117, %v2324, %v2325
      %v2329 = vpack.c.bf16 %v2208, %v2208
      %v2330 = vpack.c.bf16 %v2209, %v2209
      %v2331 = vpack.c.bf16 %v2229, %v2229
      %v2332 = vpack.c.bf16 %v2232, %v2232
      %v2333 = vpack.c.bf16 %v2238, %v2238
      %v2334 = vpack.c.bf16 %v2241, %v2241
      %v2335 = vpack.c.bf16 %v2247, %v2247
      %v2336 = vpack.c.bf16 %v2250, %v2250
      %v2337 = vpack.c.bf16 %v2255, %v2255
      %v2338 = vpack.c.bf16 %v2258, %v2258
      %v2339 = vpack.c.bf16 %v2263, %v2263
      %v2340 = vpack.c.bf16 %v2266, %v2266
      %v2341 = vpack.c.bf16 %v2271, %v2271
      %v2342 = vpack.c.bf16 %v2274, %v2274
      %v2343 = vpack.c.bf16 %v2218, %v2218
      %v2344 = vpack.c.bf16 %v2219, %v2219
      %v2345 = vpack.c.bf16 %v2283, %v2283
      %v2346 = vpack.c.bf16 %v2286, %v2286
      %v2347 = vpack.c.bf16 %v2291, %v2291
      %v2348 = vpack.c.bf16 %v2294, %v2294
      %v2349 = vpack.c.bf16 %v2299, %v2299
      %v2350 = vpack.c.bf16 %v2302, %v2302
      %v2351 = vpack.c.bf16 %v2307, %v2307
      %v2352 = vpack.c.bf16 %v2310, %v2310
      %v2353 = vpack.c.bf16 %v2315, %v2315
      %v2354 = vpack.c.bf16 %v2318, %v2318
      %v2355 = vpack.c.bf16 %v2323, %v2323
      %v2356 = vpack.c.bf16 %v2326, %v2326
      %v2357 = vld [vmem:[%s9] sm:$0xff]
      %v2358 = vld [vmem:[%s9 + $0x8] sm:$0xff]
      %v2359 = vld [vmem:[%s9 + $0x10] sm:$0xff]
      %v2360 = vld [vmem:[%s9 + $0x18] sm:$0xff]
      %v2361 = vld [vmem:[%s9 + $0x20] sm:$0xff]
      %v2362 = vld [vmem:[%s9 + $0x28] sm:$0xff]
      %v2363 = vld [vmem:[%s9 + $0x30] sm:$0xff]
      %v2364 = vld [vmem:[%s9 + $0x38] sm:$0xff]
      %v2365 = vld [vmem:[%s9 + $0x40] sm:$0xff]
      %v2366 = vld [vmem:[%s9 + $0x48] sm:$0xff]
      %v2367 = vld [vmem:[%s9 + $0x50] sm:$0xff]
      %v2368 = vld [vmem:[%s9 + $0x58] sm:$0xff]
      %v2369 = vld [vmem:[%s9 + $0x60] sm:$0xff]
      %v2370 = vld [vmem:[%s9 + $0x68] sm:$0xff]
      %v2371 = vld [vmem:[%s9 + $0x70] sm:$0xff]
      %v2372 = vld [vmem:[%s9 + $0x78] sm:$0xff]
      %v2373 = vld [vmem:[%s9 + $0x80] sm:$0xff]
      %v2374 = vld [vmem:[%s9 + $0x88] sm:$0xff]
      %v2375 = vld [vmem:[%s9 + $0x90] sm:$0xff]
      %v2376 = vld [vmem:[%s9 + $0x98] sm:$0xff]
      %v2377 = vld [vmem:[%s9 + $0xa0] sm:$0xff]
      %v2378 = vld [vmem:[%s9 + $0xa8] sm:$0xff]
      %v2379 = vld [vmem:[%s9 + $0xb0] sm:$0xff]
      %v2380 = vld [vmem:[%s9 + $0xb8] sm:$0xff]
      %v2381 = vld [vmem:[%s9 + $0xc0] sm:$0xff]
      %v2382 = vld [vmem:[%s9 + $0xc8] sm:$0xff]
      %v2383 = vld [vmem:[%s9 + $0xd0] sm:$0xff]
      %v2384 = vld [vmem:[%s9 + $0xd8] sm:$0xff]
      %v2385 = vld [vmem:[%s9 + $0xe0] sm:$0xff]
      %v2386 = vld [vmem:[%s9 + $0xe8] sm:$0xff]
      %v2387 = vld [vmem:[%s9 + $0xf0] sm:$0xff]
      %v2388 = vld [vmem:[%s9 + $0xf8] sm:$0xff]
      %v2389 = vld [vmem:[%s9 + $0x100] sm:$0xff]
      %v2390 = vld [vmem:[%s9 + $0x108] sm:$0xff]
      %v2391 = vld [vmem:[%s9 + $0x110] sm:$0xff]
      %v2392 = vld [vmem:[%s9 + $0x118] sm:$0xff]
      %v2393 = vld [vmem:[%s9 + $0x120] sm:$0xff]
      %v2394 = vld [vmem:[%s9 + $0x128] sm:$0xff]
      %v2395 = vld [vmem:[%s9 + $0x130] sm:$0xff]
      %v2396 = vld [vmem:[%s9 + $0x138] sm:$0xff]
      %v2397 = vld [vmem:[%s9 + $0x140] sm:$0xff]
      %v2398 = vld [vmem:[%s9 + $0x148] sm:$0xff]
      %v2399 = vld [vmem:[%s9 + $0x150] sm:$0xff]
      %v2400 = vld [vmem:[%s9 + $0x158] sm:$0xff]
      %v2401 = vld [vmem:[%s9 + $0x160] sm:$0xff]
      %v2402 = vld [vmem:[%s9 + $0x168] sm:$0xff]
      %v2403 = vld [vmem:[%s9 + $0x170] sm:$0xff]
      %v2404 = vld [vmem:[%s9 + $0x178] sm:$0xff]
      %v2405 = vld [vmem:[%s9 + $0x180] sm:$0xff]
      %v2406 = vld [vmem:[%s9 + $0x188] sm:$0xff]
      %v2407 = vld [vmem:[%s9 + $0x190] sm:$0xff]
      %v2408 = vld [vmem:[%s9 + $0x198] sm:$0xff]
      %v2409 = vld [vmem:[%s9 + $0x1a0] sm:$0xff]
      %v2410 = vld [vmem:[%s9 + $0x1a8] sm:$0xff]
      %v2411 = vld [vmem:[%s9 + $0x1b0] sm:$0xff]
      %v2412 = vld [vmem:[%s9 + $0x1b8] sm:$0xff]
      %v2413 = vld [vmem:[%s9 + $0x1c0] sm:$0xff]
      %v2414 = vld [vmem:[%s9 + $0x1c8] sm:$0xff]
      %v2415 = vld [vmem:[%s9 + $0x1d0] sm:$0xff]
      %v2416 = vld [vmem:[%s9 + $0x1d8] sm:$0xff]
      %v2417 = vld [vmem:[%s9 + $0x1e0] sm:$0xff]
      %v2418 = vld [vmem:[%s9 + $0x1e8] sm:$0xff]
      %v2419 = vld [vmem:[%s9 + $0x1f0] sm:$0xff]
      %v2420 = vld [vmem:[%s9 + $0x1f8] sm:$0xff]
      %v2421 = vld [vmem:[%s9 + $0x200] sm:$0xff]
      %v2422 = vld [vmem:[%s9 + $0x208] sm:$0xff]
      %v2423 = vld [vmem:[%s9 + $0x210] sm:$0xff]
      %v2424 = vld [vmem:[%s9 + $0x218] sm:$0xff]
      %v2425 = vld [vmem:[%s9 + $0x220] sm:$0xff]
      %v2426 = vld [vmem:[%s9 + $0x228] sm:$0xff]
      %v2427 = vld [vmem:[%s9 + $0x230] sm:$0xff]
      %v2428 = vld [vmem:[%s9 + $0x238] sm:$0xff]
      %v2429 = vld [vmem:[%s9 + $0x240] sm:$0xff]
      %v2430 = vld [vmem:[%s9 + $0x248] sm:$0xff]
      %v2431 = vld [vmem:[%s9 + $0x250] sm:$0xff]
      %v2432 = vld [vmem:[%s9 + $0x258] sm:$0xff]
      %v2433 = vld [vmem:[%s9 + $0x260] sm:$0xff]
      %v2434 = vld [vmem:[%s9 + $0x268] sm:$0xff]
      %v2435 = vld [vmem:[%s9 + $0x270] sm:$0xff]
      %v2436 = vld [vmem:[%s9 + $0x278] sm:$0xff]
      %v2437 = vld [vmem:[%s9 + $0x280] sm:$0xff]
      %v2438 = vld [vmem:[%s9 + $0x288] sm:$0xff]
      %v2439 = vld [vmem:[%s9 + $0x290] sm:$0xff]
      %v2440 = vld [vmem:[%s9 + $0x298] sm:$0xff]
      %v2441 = vld [vmem:[%s9 + $0x2a0] sm:$0xff]
      %v2442 = vld [vmem:[%s9 + $0x2a8] sm:$0xff]
      %v2443 = vld [vmem:[%s9 + $0x2b0] sm:$0xff]
      %v2444 = vld [vmem:[%s9 + $0x2b8] sm:$0xff]
      %v2445 = vld [vmem:[%s9 + $0x2c0] sm:$0xff]
      %v2446 = vld [vmem:[%s9 + $0x2c8] sm:$0xff]
      %v2447 = vld [vmem:[%s9 + $0x2d0] sm:$0xff]
      %v2448 = vld [vmem:[%s9 + $0x2d8] sm:$0xff]
      %v2449 = vld [vmem:[%s9 + $0x2e0] sm:$0xff]
      %v2450 = vld [vmem:[%s9 + $0x2e8] sm:$0xff]
      %v2451 = vld [vmem:[%s9 + $0x2f0] sm:$0xff]
      %v2452 = vld [vmem:[%s9 + $0x2f8] sm:$0xff]
      %v2453 = vld [vmem:[%s9 + $0x300] sm:$0xff]
      %v2454 = vld [vmem:[%s9 + $0x308] sm:$0xff]
      %v2455 = vld [vmem:[%s9 + $0x310] sm:$0xff]
      %v2456 = vld [vmem:[%s9 + $0x318] sm:$0xff]
      %v2457 = vld [vmem:[%s9 + $0x320] sm:$0xff]
      %v2458 = vld [vmem:[%s9 + $0x328] sm:$0xff]
      %v2459 = vld [vmem:[%s9 + $0x330] sm:$0xff]
      %v2460 = vld [vmem:[%s9 + $0x338] sm:$0xff]
      %v2461 = vld [vmem:[%s9 + $0x340] sm:$0xff]
      %v2462 = vld [vmem:[%s9 + $0x348] sm:$0xff]
      %v2463 = vld [vmem:[%s9 + $0x350] sm:$0xff]
      %v2464 = vld [vmem:[%s9 + $0x358] sm:$0xff]
      %v2465 = vld [vmem:[%s9 + $0x360] sm:$0xff]
      %v2466 = vld [vmem:[%s9 + $0x368] sm:$0xff]
      %v2467 = vld [vmem:[%s9 + $0x370] sm:$0xff]
      %v2468 = vld [vmem:[%s9 + $0x378] sm:$0xff]
      %v2469 = vld [vmem:[%s9 + $0x380] sm:$0xff]
      %v2470 = vld [vmem:[%s9 + $0x388] sm:$0xff]
      %v2471 = vld [vmem:[%s9 + $0x390] sm:$0xff]
      %v2472 = vld [vmem:[%s9 + $0x398] sm:$0xff]
      %v2473 = vld [vmem:[%s9 + $0x3a0] sm:$0xff]
      %v2474 = vld [vmem:[%s9 + $0x3a8] sm:$0xff]
      %v2475 = vld [vmem:[%s9 + $0x3b0] sm:$0xff]
      %v2476 = vld [vmem:[%s9 + $0x3b8] sm:$0xff]
      %v2477 = vld [vmem:[%s9 + $0x3c0] sm:$0xff]
      %v2478 = vld [vmem:[%s9 + $0x3c8] sm:$0xff]
      %v2479 = vld [vmem:[%s9 + $0x3d0] sm:$0xff]
      %v2480 = vld [vmem:[%s9 + $0x3d8] sm:$0xff]
      %v2481 = vld [vmem:[%s9 + $0x3e0] sm:$0xff]
      %v2482 = vld [vmem:[%s9 + $0x3e8] sm:$0xff]
      %v2483 = vld [vmem:[%s9 + $0x3f0] sm:$0xff]
      %v2484 = vld [vmem:[%s9 + $0x3f8] sm:$0xff]
      %v2485 = vld [vmem:[%s9 + $0x400] sm:$0xff]
      %v2486 = vld [vmem:[%s9 + $0x408] sm:$0xff]
      %v2487 = vld [vmem:[%s9 + $0x410] sm:$0xff]
      %v2488 = vld [vmem:[%s9 + $0x418] sm:$0xff]
      %v2489 = vld [vmem:[%s9 + $0x420] sm:$0xff]
      %v2490 = vld [vmem:[%s9 + $0x428] sm:$0xff]
      %v2491 = vld [vmem:[%s9 + $0x430] sm:$0xff]
      %v2492 = vld [vmem:[%s9 + $0x438] sm:$0xff]
      %v2493 = vld [vmem:[%s9 + $0x440] sm:$0xff]
      %v2494 = vld [vmem:[%s9 + $0x448] sm:$0xff]
      %v2495 = vld [vmem:[%s9 + $0x450] sm:$0xff]
      %v2496 = vld [vmem:[%s9 + $0x458] sm:$0xff]
      %v2497 = vld [vmem:[%s9 + $0x460] sm:$0xff]
      %v2498 = vld [vmem:[%s9 + $0x468] sm:$0xff]
      %v2499 = vld [vmem:[%s9 + $0x470] sm:$0xff]
      %v2500 = vld [vmem:[%s9 + $0x478] sm:$0xff]
      %v2501 = vld [vmem:[%s9 + $0x480] sm:$0xff]
      %v2502 = vld [vmem:[%s9 + $0x488] sm:$0xff]
      %v2503 = vld [vmem:[%s9 + $0x490] sm:$0xff]
      %v2504 = vld [vmem:[%s9 + $0x498] sm:$0xff]
      %v2505 = vld [vmem:[%s9 + $0x4a0] sm:$0xff]
      %v2506 = vld [vmem:[%s9 + $0x4a8] sm:$0xff]
      %v2507 = vld [vmem:[%s9 + $0x4b0] sm:$0xff]
      %v2508 = vld [vmem:[%s9 + $0x4b8] sm:$0xff]
      %v2509 = vld [vmem:[%s9 + $0x4c0] sm:$0xff]
      %v2510 = vld [vmem:[%s9 + $0x4c8] sm:$0xff]
      %v2511 = vld [vmem:[%s9 + $0x4d0] sm:$0xff]
      %v2512 = vld [vmem:[%s9 + $0x4d8] sm:$0xff]
      %v2513 = vld [vmem:[%s9 + $0x4e0] sm:$0xff]
      %v2514 = vld [vmem:[%s9 + $0x4e8] sm:$0xff]
      %v2515 = vld [vmem:[%s9 + $0x4f0] sm:$0xff]
      %v2516 = vld [vmem:[%s9 + $0x4f8] sm:$0xff]
      %v2517 = vld [vmem:[%s9 + $0x500] sm:$0xff]
      %v2518 = vld [vmem:[%s9 + $0x508] sm:$0xff]
      %v2519 = vld [vmem:[%s9 + $0x510] sm:$0xff]
      %v2520 = vld [vmem:[%s9 + $0x518] sm:$0xff]
      %v2521 = vld [vmem:[%s9 + $0x520] sm:$0xff]
      %v2522 = vld [vmem:[%s9 + $0x528] sm:$0xff]
      %v2523 = vld [vmem:[%s9 + $0x530] sm:$0xff]
      %v2524 = vld [vmem:[%s9 + $0x538] sm:$0xff]
      %v2525 = vld [vmem:[%s9 + $0x540] sm:$0xff]
      %v2526 = vld [vmem:[%s9 + $0x548] sm:$0xff]
      %v2527 = vld [vmem:[%s9 + $0x550] sm:$0xff]
      %v2528 = vld [vmem:[%s9 + $0x558] sm:$0xff]
      %v2529 = vld [vmem:[%s9 + $0x560] sm:$0xff]
      %v2530 = vld [vmem:[%s9 + $0x568] sm:$0xff]
      %v2531 = vld [vmem:[%s9 + $0x570] sm:$0xff]
      %v2532 = vld [vmem:[%s9 + $0x578] sm:$0xff]
      %v2533 = vld [vmem:[%s9 + $0x580] sm:$0xff]
      %v2534 = vld [vmem:[%s9 + $0x588] sm:$0xff]
      %v2535 = vld [vmem:[%s9 + $0x590] sm:$0xff]
      %v2536 = vld [vmem:[%s9 + $0x598] sm:$0xff]
      %v2537 = vld [vmem:[%s9 + $0x5a0] sm:$0xff]
      %v2538 = vld [vmem:[%s9 + $0x5a8] sm:$0xff]
      %v2539 = vld [vmem:[%s9 + $0x5b0] sm:$0xff]
      %v2540 = vld [vmem:[%s9 + $0x5b8] sm:$0xff]
      %v2541 = vld [vmem:[%s9 + $0x5c0] sm:$0xff]
      %v2542 = vld [vmem:[%s9 + $0x5c8] sm:$0xff]
      %v2543 = vld [vmem:[%s9 + $0x5d0] sm:$0xff]
      %v2544 = vld [vmem:[%s9 + $0x5d8] sm:$0xff]
      %v2545 = vld [vmem:[%s9 + $0x5e0] sm:$0xff]
      %v2546 = vld [vmem:[%s9 + $0x5e8] sm:$0xff]
      %v2547 = vld [vmem:[%s9 + $0x5f0] sm:$0xff]
      %v2548 = vld [vmem:[%s9 + $0x5f8] sm:$0xff]
      %v2549 = vld [vmem:[%s9 + $0x600] sm:$0xff]
      %v2550 = vld [vmem:[%s9 + $0x608] sm:$0xff]
      %v2551 = vld [vmem:[%s9 + $0x610] sm:$0xff]
      %v2552 = vld [vmem:[%s9 + $0x618] sm:$0xff]
      %v2553 = vld [vmem:[%s9 + $0x620] sm:$0xff]
      %v2554 = vld [vmem:[%s9 + $0x628] sm:$0xff]
      %v2555 = vld [vmem:[%s9 + $0x630] sm:$0xff]
      %v2556 = vld [vmem:[%s9 + $0x638] sm:$0xff]
      %v2557 = vld [vmem:[%s9 + $0x640] sm:$0xff]
      %v2558 = vld [vmem:[%s9 + $0x648] sm:$0xff]
      %v2559 = vld [vmem:[%s9 + $0x650] sm:$0xff]
      %v2560 = vld [vmem:[%s9 + $0x658] sm:$0xff]
      %v2561 = vld [vmem:[%s9 + $0x660] sm:$0xff]
      %v2562 = vld [vmem:[%s9 + $0x668] sm:$0xff]
      %v2563 = vld [vmem:[%s9 + $0x670] sm:$0xff]
      %v2564 = vld [vmem:[%s9 + $0x678] sm:$0xff]
      %v2565 = vld [vmem:[%s9 + $0x680] sm:$0xff]
      %v2566 = vld [vmem:[%s9 + $0x688] sm:$0xff]
      %v2567 = vld [vmem:[%s9 + $0x690] sm:$0xff]
      %v2568 = vld [vmem:[%s9 + $0x698] sm:$0xff]
      %v2569 = vld [vmem:[%s9 + $0x6a0] sm:$0xff]
      %v2570 = vld [vmem:[%s9 + $0x6a8] sm:$0xff]
      %v2571 = vld [vmem:[%s9 + $0x6b0] sm:$0xff]
      %v2572 = vld [vmem:[%s9 + $0x6b8] sm:$0xff]
      %v2573 = vld [vmem:[%s9 + $0x6c0] sm:$0xff]
      %v2574 = vld [vmem:[%s9 + $0x6c8] sm:$0xff]
      %v2575 = vld [vmem:[%s9 + $0x6d0] sm:$0xff]
      %v2576 = vld [vmem:[%s9 + $0x6d8] sm:$0xff]
      %v2577 = vld [vmem:[%s9 + $0x6e0] sm:$0xff]
      %v2578 = vld [vmem:[%s9 + $0x6e8] sm:$0xff]
      %v2579 = vld [vmem:[%s9 + $0x6f0] sm:$0xff]
      %v2580 = vld [vmem:[%s9 + $0x6f8] sm:$0xff]
      %v2581 = vld [vmem:[%s9 + $0x700] sm:$0xff]
      %v2582 = vld [vmem:[%s9 + $0x708] sm:$0xff]
      %v2583 = vld [vmem:[%s9 + $0x710] sm:$0xff]
      %v2584 = vld [vmem:[%s9 + $0x718] sm:$0xff]
      %v2585 = vld [vmem:[%s9 + $0x720] sm:$0xff]
      %v2586 = vld [vmem:[%s9 + $0x728] sm:$0xff]
      %v2587 = vld [vmem:[%s9 + $0x730] sm:$0xff]
      %v2588 = vld [vmem:[%s9 + $0x738] sm:$0xff]
      %v2589 = vld [vmem:[%s9 + $0x740] sm:$0xff]
      %v2590 = vld [vmem:[%s9 + $0x748] sm:$0xff]
      %v2591 = vld [vmem:[%s9 + $0x750] sm:$0xff]
      %v2592 = vld [vmem:[%s9 + $0x758] sm:$0xff]
      %v2593 = vld [vmem:[%s9 + $0x760] sm:$0xff]
      %v2594 = vld [vmem:[%s9 + $0x768] sm:$0xff]
      %v2595 = vld [vmem:[%s9 + $0x770] sm:$0xff]
      %v2596 = vld [vmem:[%s9 + $0x778] sm:$0xff]
      %v2597 = vld [vmem:[%s9 + $0x780] sm:$0xff]
      %v2598 = vld [vmem:[%s9 + $0x788] sm:$0xff]
      %v2599 = vld [vmem:[%s9 + $0x790] sm:$0xff]
      %v2600 = vld [vmem:[%s9 + $0x798] sm:$0xff]
      %v2601 = vld [vmem:[%s9 + $0x7a0] sm:$0xff]
      %v2602 = vld [vmem:[%s9 + $0x7a8] sm:$0xff]
      %v2603 = vld [vmem:[%s9 + $0x7b0] sm:$0xff]
      %v2604 = vld [vmem:[%s9 + $0x7b8] sm:$0xff]
      %v2605 = vld [vmem:[%s9 + $0x7c0] sm:$0xff]
      %v2606 = vld [vmem:[%s9 + $0x7c8] sm:$0xff]
      %v2607 = vld [vmem:[%s9 + $0x7d0] sm:$0xff]
      %v2608 = vld [vmem:[%s9 + $0x7d8] sm:$0xff]
      %v2609 = vld [vmem:[%s9 + $0x7e0] sm:$0xff]
      %v2610 = vld [vmem:[%s9 + $0x7e8] sm:$0xff]
      %v2611 = vld [vmem:[%s9 + $0x7f0] sm:$0xff]
      %v2612 = vld [vmem:[%s9 + $0x7f8] sm:$0xff]
      %v2613 = vld [vmem:[%s9 + $0x800] sm:$0xff]
      %v2614 = vld [vmem:[%s9 + $0x808] sm:$0xff]
      %v2615 = vld [vmem:[%s9 + $0x810] sm:$0xff]
      %v2616 = vld [vmem:[%s9 + $0x818] sm:$0xff]
      %v2617 = vld [vmem:[%s9 + $0x820] sm:$0xff]
      %v2618 = vld [vmem:[%s9 + $0x828] sm:$0xff]
      %v2619 = vld [vmem:[%s9 + $0x830] sm:$0xff]
      %v2620 = vld [vmem:[%s9 + $0x838] sm:$0xff]
      %v2621 = vld [vmem:[%s9 + $0x840] sm:$0xff]
      %v2622 = vld [vmem:[%s9 + $0x848] sm:$0xff]
      %v2623 = vld [vmem:[%s9 + $0x850] sm:$0xff]
      %v2624 = vld [vmem:[%s9 + $0x858] sm:$0xff]
      %v2625 = vld [vmem:[%s9 + $0x860] sm:$0xff]
      %v2626 = vld [vmem:[%s9 + $0x868] sm:$0xff]
      %v2627 = vld [vmem:[%s9 + $0x870] sm:$0xff]
      %v2628 = vld [vmem:[%s9 + $0x878] sm:$0xff]
      %v2629 = vld [vmem:[%s9 + $0x880] sm:$0xff]
      %v2630 = vld [vmem:[%s9 + $0x888] sm:$0xff]
      %v2631 = vld [vmem:[%s9 + $0x890] sm:$0xff]
      %v2632 = vld [vmem:[%s9 + $0x898] sm:$0xff]
      %v2633 = vld [vmem:[%s9 + $0x8a0] sm:$0xff]
      %v2634 = vld [vmem:[%s9 + $0x8a8] sm:$0xff]
      %v2635 = vld [vmem:[%s9 + $0x8b0] sm:$0xff]
      %v2636 = vld [vmem:[%s9 + $0x8b8] sm:$0xff]
      %v2637 = vld [vmem:[%s9 + $0x8c0] sm:$0xff]
      %v2638 = vld [vmem:[%s9 + $0x8c8] sm:$0xff]
      %v2639 = vld [vmem:[%s9 + $0x8d0] sm:$0xff]
      %v2640 = vld [vmem:[%s9 + $0x8d8] sm:$0xff]
      %v2641 = vld [vmem:[%s9 + $0x8e0] sm:$0xff]
      %v2642 = vld [vmem:[%s9 + $0x8e8] sm:$0xff]
      %v2643 = vld [vmem:[%s9 + $0x8f0] sm:$0xff]
      %v2644 = vld [vmem:[%s9 + $0x8f8] sm:$0xff]
      %v2645 = vld [vmem:[%s9 + $0x900] sm:$0xff]
      %v2646 = vld [vmem:[%s9 + $0x908] sm:$0xff]
      %v2647 = vld [vmem:[%s9 + $0x910] sm:$0xff]
      %v2648 = vld [vmem:[%s9 + $0x918] sm:$0xff]
      %v2649 = vld [vmem:[%s9 + $0x920] sm:$0xff]
      %v2650 = vld [vmem:[%s9 + $0x928] sm:$0xff]
      %v2651 = vld [vmem:[%s9 + $0x930] sm:$0xff]
      %v2652 = vld [vmem:[%s9 + $0x938] sm:$0xff]
      %v2653 = vld [vmem:[%s9 + $0x940] sm:$0xff]
      %v2654 = vld [vmem:[%s9 + $0x948] sm:$0xff]
      %v2655 = vld [vmem:[%s9 + $0x950] sm:$0xff]
      %v2656 = vld [vmem:[%s9 + $0x958] sm:$0xff]
      %v2657 = vld [vmem:[%s9 + $0x960] sm:$0xff]
      %v2658 = vld [vmem:[%s9 + $0x968] sm:$0xff]
      %v2659 = vld [vmem:[%s9 + $0x970] sm:$0xff]
      %v2660 = vld [vmem:[%s9 + $0x978] sm:$0xff]
      %v2661 = vld [vmem:[%s9 + $0x980] sm:$0xff]
      %v2662 = vld [vmem:[%s9 + $0x988] sm:$0xff]
      %v2663 = vld [vmem:[%s9 + $0x990] sm:$0xff]
      %v2664 = vld [vmem:[%s9 + $0x998] sm:$0xff]
      %v2665 = vld [vmem:[%s9 + $0x9a0] sm:$0xff]
      %v2666 = vld [vmem:[%s9 + $0x9a8] sm:$0xff]
      %v2667 = vld [vmem:[%s9 + $0x9b0] sm:$0xff]
      %v2668 = vld [vmem:[%s9 + $0x9b8] sm:$0xff]
      %v2669 = vld [vmem:[%s9 + $0x9c0] sm:$0xff]
      %v2670 = vld [vmem:[%s9 + $0x9c8] sm:$0xff]
      %v2671 = vld [vmem:[%s9 + $0x9d0] sm:$0xff]
      %v2672 = vld [vmem:[%s9 + $0x9d8] sm:$0xff]
      %v2673 = vld [vmem:[%s9 + $0x9e0] sm:$0xff]
      %v2674 = vld [vmem:[%s9 + $0x9e8] sm:$0xff]
      %v2675 = vld [vmem:[%s9 + $0x9f0] sm:$0xff]
      %v2676 = vld [vmem:[%s9 + $0x9f8] sm:$0xff]
      %v2677 = vld [vmem:[%s9 + $0xa00] sm:$0xff]
      %v2678 = vld [vmem:[%s9 + $0xa08] sm:$0xff]
      %v2679 = vld [vmem:[%s9 + $0xa10] sm:$0xff]
      %v2680 = vld [vmem:[%s9 + $0xa18] sm:$0xff]
      %v2681 = vld [vmem:[%s9 + $0xa20] sm:$0xff]
      %v2682 = vld [vmem:[%s9 + $0xa28] sm:$0xff]
      %v2683 = vld [vmem:[%s9 + $0xa30] sm:$0xff]
      %v2684 = vld [vmem:[%s9 + $0xa38] sm:$0xff]
      %v2685 = vld [vmem:[%s9 + $0xa40] sm:$0xff]
      %v2686 = vld [vmem:[%s9 + $0xa48] sm:$0xff]
      %v2687 = vld [vmem:[%s9 + $0xa50] sm:$0xff]
      %v2688 = vld [vmem:[%s9 + $0xa58] sm:$0xff]
      %v2689 = vld [vmem:[%s9 + $0xa60] sm:$0xff]
      %v2690 = vld [vmem:[%s9 + $0xa68] sm:$0xff]
      %v2691 = vld [vmem:[%s9 + $0xa70] sm:$0xff]
      %v2692 = vld [vmem:[%s9 + $0xa78] sm:$0xff]
      %v2693 = vld [vmem:[%s9 + $0xa80] sm:$0xff]
      %v2694 = vld [vmem:[%s9 + $0xa88] sm:$0xff]
      %v2695 = vld [vmem:[%s9 + $0xa90] sm:$0xff]
      %v2696 = vld [vmem:[%s9 + $0xa98] sm:$0xff]
      %v2697 = vld [vmem:[%s9 + $0xaa0] sm:$0xff]
      %v2698 = vld [vmem:[%s9 + $0xaa8] sm:$0xff]
      %v2699 = vld [vmem:[%s9 + $0xab0] sm:$0xff]
      %v2700 = vld [vmem:[%s9 + $0xab8] sm:$0xff]
      %v2701 = vld [vmem:[%s9 + $0xac0] sm:$0xff]
      %v2702 = vld [vmem:[%s9 + $0xac8] sm:$0xff]
      %v2703 = vld [vmem:[%s9 + $0xad0] sm:$0xff]
      %v2704 = vld [vmem:[%s9 + $0xad8] sm:$0xff]
      %v2705 = vld [vmem:[%s9 + $0xae0] sm:$0xff]
      %v2706 = vld [vmem:[%s9 + $0xae8] sm:$0xff]
      %v2707 = vld [vmem:[%s9 + $0xaf0] sm:$0xff]
      %v2708 = vld [vmem:[%s9 + $0xaf8] sm:$0xff]
      %v2709 = vld [vmem:[%s9 + $0xb00] sm:$0xff]
      %v2710 = vld [vmem:[%s9 + $0xb08] sm:$0xff]
      %v2711 = vld [vmem:[%s9 + $0xb10] sm:$0xff]
      %v2712 = vld [vmem:[%s9 + $0xb18] sm:$0xff]
      %v2713 = vld [vmem:[%s9 + $0xb20] sm:$0xff]
      %v2714 = vld [vmem:[%s9 + $0xb28] sm:$0xff]
      %v2715 = vld [vmem:[%s9 + $0xb30] sm:$0xff]
      %v2716 = vld [vmem:[%s9 + $0xb38] sm:$0xff]
      %v2717 = vld [vmem:[%s9 + $0xb40] sm:$0xff]
      %v2718 = vld [vmem:[%s9 + $0xb48] sm:$0xff]
      %v2719 = vld [vmem:[%s9 + $0xb50] sm:$0xff]
      %v2720 = vld [vmem:[%s9 + $0xb58] sm:$0xff]
      %v2721 = vld [vmem:[%s9 + $0xb60] sm:$0xff]
      %v2722 = vld [vmem:[%s9 + $0xb68] sm:$0xff]
      %v2723 = vld [vmem:[%s9 + $0xb70] sm:$0xff]
      %v2724 = vld [vmem:[%s9 + $0xb78] sm:$0xff]
      %v2725 = vld [vmem:[%s9 + $0xb80] sm:$0xff]
      %v2726 = vld [vmem:[%s9 + $0xb88] sm:$0xff]
      %v2727 = vld [vmem:[%s9 + $0xb90] sm:$0xff]
      %v2728 = vld [vmem:[%s9 + $0xb98] sm:$0xff]
      %v2729 = vld [vmem:[%s9 + $0xba0] sm:$0xff]
      %v2730 = vld [vmem:[%s9 + $0xba8] sm:$0xff]
      %v2731 = vld [vmem:[%s9 + $0xbb0] sm:$0xff]
      %v2732 = vld [vmem:[%s9 + $0xbb8] sm:$0xff]
      %v2733 = vld [vmem:[%s9 + $0xbc0] sm:$0xff]
      %v2734 = vld [vmem:[%s9 + $0xbc8] sm:$0xff]
      %v2735 = vld [vmem:[%s9 + $0xbd0] sm:$0xff]
      %v2736 = vld [vmem:[%s9 + $0xbd8] sm:$0xff]
      %v2737 = vld [vmem:[%s9 + $0xbe0] sm:$0xff]
      %v2738 = vld [vmem:[%s9 + $0xbe8] sm:$0xff]
      %v2739 = vld [vmem:[%s9 + $0xbf0] sm:$0xff]
      %v2740 = vld [vmem:[%s9 + $0xbf8] sm:$0xff]
      %v2741 = vld [vmem:[%s9 + $0xc00] sm:$0xff]
      %v2742 = vld [vmem:[%s9 + $0xc08] sm:$0xff]
      %v2743 = vld [vmem:[%s9 + $0xc10] sm:$0xff]
      %v2744 = vld [vmem:[%s9 + $0xc18] sm:$0xff]
      %v2745 = vld [vmem:[%s9 + $0xc20] sm:$0xff]
      %v2746 = vld [vmem:[%s9 + $0xc28] sm:$0xff]
      %v2747 = vld [vmem:[%s9 + $0xc30] sm:$0xff]
      %v2748 = vld [vmem:[%s9 + $0xc38] sm:$0xff]
      %v2749 = vld [vmem:[%s9 + $0xc40] sm:$0xff]
      %v2750 = vld [vmem:[%s9 + $0xc48] sm:$0xff]
      %v2751 = vld [vmem:[%s9 + $0xc50] sm:$0xff]
      %v2752 = vld [vmem:[%s9 + $0xc58] sm:$0xff]
      %v2753 = vld [vmem:[%s9 + $0xc60] sm:$0xff]
      %v2754 = vld [vmem:[%s9 + $0xc68] sm:$0xff]
      %v2755 = vld [vmem:[%s9 + $0xc70] sm:$0xff]
      %v2756 = vld [vmem:[%s9 + $0xc78] sm:$0xff]
      %v2757 = vld [vmem:[%s9 + $0xc80] sm:$0xff]
      %v2758 = vld [vmem:[%s9 + $0xc88] sm:$0xff]
      %v2759 = vld [vmem:[%s9 + $0xc90] sm:$0xff]
      %v2760 = vld [vmem:[%s9 + $0xc98] sm:$0xff]
      %v2761 = vld [vmem:[%s9 + $0xca0] sm:$0xff]
      %v2762 = vld [vmem:[%s9 + $0xca8] sm:$0xff]
      %v2763 = vld [vmem:[%s9 + $0xcb0] sm:$0xff]
      %v2764 = vld [vmem:[%s9 + $0xcb8] sm:$0xff]
      %v2765 = vld [vmem:[%s9 + $0xcc0] sm:$0xff]
      %v2766 = vld [vmem:[%s9 + $0xcc8] sm:$0xff]
      %v2767 = vld [vmem:[%s9 + $0xcd0] sm:$0xff]
      %v2768 = vld [vmem:[%s9 + $0xcd8] sm:$0xff]
      %v2769 = vld [vmem:[%s9 + $0xce0] sm:$0xff]
      %v2770 = vld [vmem:[%s9 + $0xce8] sm:$0xff]
      %v2771 = vld [vmem:[%s9 + $0xcf0] sm:$0xff]
      %v2772 = vld [vmem:[%s9 + $0xcf8] sm:$0xff]
      %v2773 = vld [vmem:[%s9 + $0xd00] sm:$0xff]
      %v2774 = vld [vmem:[%s9 + $0xd08] sm:$0xff]
      %v2775 = vld [vmem:[%s9 + $0xd10] sm:$0xff]
      %v2776 = vld [vmem:[%s9 + $0xd18] sm:$0xff]
      %v2777 = vld [vmem:[%s9 + $0xd20] sm:$0xff]
      %v2778 = vld [vmem:[%s9 + $0xd28] sm:$0xff]
      %v2779 = vld [vmem:[%s9 + $0xd30] sm:$0xff]
      %v2780 = vld [vmem:[%s9 + $0xd38] sm:$0xff]
      %v2781 = vld [vmem:[%s9 + $0xd40] sm:$0xff]
      %v2782 = vld [vmem:[%s9 + $0xd48] sm:$0xff]
      %v2783 = vld [vmem:[%s9 + $0xd50] sm:$0xff]
      %v2784 = vld [vmem:[%s9 + $0xd58] sm:$0xff]
      %v2785 = vld [vmem:[%s9 + $0xd60] sm:$0xff]
      %v2786 = vld [vmem:[%s9 + $0xd68] sm:$0xff]
      %v2787 = vld [vmem:[%s9 + $0xd70] sm:$0xff]
      %v2788 = vld [vmem:[%s9 + $0xd78] sm:$0xff]
      %v2789 = vld [vmem:[%s9 + $0xd80] sm:$0xff]
      %v2790 = vld [vmem:[%s9 + $0xd88] sm:$0xff]
      %v2791 = vld [vmem:[%s9 + $0xd90] sm:$0xff]
      %v2792 = vld [vmem:[%s9 + $0xd98] sm:$0xff]
      %v2793 = vld [vmem:[%s9 + $0xda0] sm:$0xff]
      %v2794 = vld [vmem:[%s9 + $0xda8] sm:$0xff]
      %v2795 = vld [vmem:[%s9 + $0xdb0] sm:$0xff]
      %v2796 = vld [vmem:[%s9 + $0xdb8] sm:$0xff]
      %v2797 = vld [vmem:[%s9 + $0xdc0] sm:$0xff]
      %v2798 = vld [vmem:[%s9 + $0xdc8] sm:$0xff]
      %v2799 = vld [vmem:[%s9 + $0xdd0] sm:$0xff]
      %v2800 = vld [vmem:[%s9 + $0xdd8] sm:$0xff]
      %v2801 = vld [vmem:[%s9 + $0xde0] sm:$0xff]
      %v2802 = vld [vmem:[%s9 + $0xde8] sm:$0xff]
      %v2803 = vld [vmem:[%s9 + $0xdf0] sm:$0xff]
      %v2804 = vld [vmem:[%s9 + $0xdf8] sm:$0xff]
      %s2805 = sld [smem:[#allocation2]]
      %v2806 = vstv %s2805
      %v3255 = vunpack.c.l.b16 %v2357
      %v3256 = vunpack.c.h.b16 %v2357
      %v3257 = vunpack.c.l.b16 %v2358
      %v3258 = vunpack.c.h.b16 %v2358
      %v3259 = vunpack.c.l.b16 %v2359
      %v3260 = vunpack.c.h.b16 %v2359
      %v3261 = vunpack.c.l.b16 %v2360
      %v3262 = vunpack.c.h.b16 %v2360
      %v3263 = vunpack.c.l.b16 %v2361
      %v3264 = vunpack.c.h.b16 %v2361
      %v3265 = vunpack.c.l.b16 %v2362
      %v3266 = vunpack.c.h.b16 %v2362
      %v3267 = vunpack.c.l.b16 %v2363
      %v3268 = vunpack.c.h.b16 %v2363
      %v3269 = vunpack.c.l.b16 %v2364
      %v3270 = vunpack.c.h.b16 %v2364
      %v3271 = vunpack.c.l.b16 %v2365
      %v3272 = vunpack.c.h.b16 %v2365
      %v3273 = vunpack.c.l.b16 %v2366
      %v3274 = vunpack.c.h.b16 %v2366
      %v3275 = vunpack.c.l.b16 %v2367
      %v3276 = vunpack.c.h.b16 %v2367
      %v3277 = vunpack.c.l.b16 %v2368
      %v3278 = vunpack.c.h.b16 %v2368
      %v3279 = vunpack.c.l.b16 %v2369
      %v3280 = vunpack.c.h.b16 %v2369
      %v3281 = vunpack.c.l.b16 %v2370
      %v3282 = vunpack.c.h.b16 %v2370
      %v3283 = vunpack.c.l.b16 %v2371
      %v3284 = vunpack.c.h.b16 %v2371
      %v3285 = vunpack.c.l.b16 %v2372
      %v3286 = vunpack.c.h.b16 %v2372
      %v3287 = vunpack.c.l.b16 %v2373
      %v3288 = vunpack.c.h.b16 %v2373
      %v3289 = vunpack.c.l.b16 %v2374
      %v3290 = vunpack.c.h.b16 %v2374
      %v3291 = vunpack.c.l.b16 %v2375
      %v3292 = vunpack.c.h.b16 %v2375
      %v3293 = vunpack.c.l.b16 %v2376
      %v3294 = vunpack.c.h.b16 %v2376
      %v3295 = vunpack.c.l.b16 %v2377
      %v3296 = vunpack.c.h.b16 %v2377
      %v3297 = vunpack.c.l.b16 %v2378
      %v3298 = vunpack.c.h.b16 %v2378
      %v3299 = vunpack.c.l.b16 %v2379
      %v3300 = vunpack.c.h.b16 %v2379
      %v3301 = vunpack.c.l.b16 %v2380
      %v3302 = vunpack.c.h.b16 %v2380
      %v3303 = vunpack.c.l.b16 %v2381
      %v3304 = vunpack.c.h.b16 %v2381
      %v3305 = vunpack.c.l.b16 %v2382
      %v3306 = vunpack.c.h.b16 %v2382
      %v3307 = vunpack.c.l.b16 %v2383
      %v3308 = vunpack.c.h.b16 %v2383
      %v3309 = vunpack.c.l.b16 %v2384
      %v3310 = vunpack.c.h.b16 %v2384
      %v3311 = vunpack.c.l.b16 %v2385
      %v3312 = vunpack.c.h.b16 %v2385
      %v3313 = vunpack.c.l.b16 %v2386
      %v3314 = vunpack.c.h.b16 %v2386
      %v3315 = vunpack.c.l.b16 %v2387
      %v3316 = vunpack.c.h.b16 %v2387
      %v3317 = vunpack.c.l.b16 %v2388
      %v3318 = vunpack.c.h.b16 %v2388
      %v3319 = vunpack.c.l.b16 %v2389
      %v3320 = vunpack.c.h.b16 %v2389
      %v3321 = vunpack.c.l.b16 %v2390
      %v3322 = vunpack.c.h.b16 %v2390
      %v3323 = vunpack.c.l.b16 %v2391
      %v3324 = vunpack.c.h.b16 %v2391
      %v3325 = vunpack.c.l.b16 %v2392
      %v3326 = vunpack.c.h.b16 %v2392
      %v3327 = vunpack.c.l.b16 %v2393
      %v3328 = vunpack.c.h.b16 %v2393
      %v3329 = vunpack.c.l.b16 %v2394
      %v3330 = vunpack.c.h.b16 %v2394
      %v3331 = vunpack.c.l.b16 %v2395
      %v3332 = vunpack.c.h.b16 %v2395
      %v3333 = vunpack.c.l.b16 %v2396
      %v3334 = vunpack.c.h.b16 %v2396
      %v3335 = vunpack.c.l.b16 %v2397
      %v3336 = vunpack.c.h.b16 %v2397
      %v3337 = vunpack.c.l.b16 %v2398
      %v3338 = vunpack.c.h.b16 %v2398
      %v3339 = vunpack.c.l.b16 %v2399
      %v3340 = vunpack.c.h.b16 %v2399
      %v3341 = vunpack.c.l.b16 %v2400
      %v3342 = vunpack.c.h.b16 %v2400
      %v3343 = vunpack.c.l.b16 %v2401
      %v3344 = vunpack.c.h.b16 %v2401
      %v3345 = vunpack.c.l.b16 %v2402
      %v3346 = vunpack.c.h.b16 %v2402
      %v3347 = vunpack.c.l.b16 %v2403
      %v3348 = vunpack.c.h.b16 %v2403
      %v3349 = vunpack.c.l.b16 %v2404
      %v3350 = vunpack.c.h.b16 %v2404
      %v3351 = vunpack.c.l.b16 %v2405
      %v3352 = vunpack.c.h.b16 %v2405
      %v3353 = vunpack.c.l.b16 %v2406
      %v3354 = vunpack.c.h.b16 %v2406
      %v3355 = vunpack.c.l.b16 %v2407
      %v3356 = vunpack.c.h.b16 %v2407
      %v3357 = vunpack.c.l.b16 %v2408
      %v3358 = vunpack.c.h.b16 %v2408
      %v3359 = vunpack.c.l.b16 %v2409
      %v3360 = vunpack.c.h.b16 %v2409
      %v3361 = vunpack.c.l.b16 %v2410
      %v3362 = vunpack.c.h.b16 %v2410
      %v3363 = vunpack.c.l.b16 %v2411
      %v3364 = vunpack.c.h.b16 %v2411
      %v3365 = vunpack.c.l.b16 %v2412
      %v3366 = vunpack.c.h.b16 %v2412
      %v3367 = vunpack.c.l.b16 %v2413
      %v3368 = vunpack.c.h.b16 %v2413
      %v3369 = vunpack.c.l.b16 %v2414
      %v3370 = vunpack.c.h.b16 %v2414
      %v3371 = vunpack.c.l.b16 %v2415
      %v3372 = vunpack.c.h.b16 %v2415
      %v3373 = vunpack.c.l.b16 %v2416
      %v3374 = vunpack.c.h.b16 %v2416
      %v3375 = vunpack.c.l.b16 %v2417
      %v3376 = vunpack.c.h.b16 %v2417
      %v3377 = vunpack.c.l.b16 %v2418
      %v3378 = vunpack.c.h.b16 %v2418
      %v3379 = vunpack.c.l.b16 %v2419
      %v3380 = vunpack.c.h.b16 %v2419
      %v3381 = vunpack.c.l.b16 %v2420
      %v3382 = vunpack.c.h.b16 %v2420
      %v3383 = vunpack.c.l.b16 %v2421
      %v3384 = vunpack.c.h.b16 %v2421
      %v3385 = vunpack.c.l.b16 %v2422
      %v3386 = vunpack.c.h.b16 %v2422
      %v3387 = vunpack.c.l.b16 %v2423
      %v3388 = vunpack.c.h.b16 %v2423
      %v3389 = vunpack.c.l.b16 %v2424
      %v3390 = vunpack.c.h.b16 %v2424
      %v3391 = vunpack.c.l.b16 %v2425
      %v3392 = vunpack.c.h.b16 %v2425
      %v3393 = vunpack.c.l.b16 %v2426
      %v3394 = vunpack.c.h.b16 %v2426
      %v3395 = vunpack.c.l.b16 %v2427
      %v3396 = vunpack.c.h.b16 %v2427
      %v3397 = vunpack.c.l.b16 %v2428
      %v3398 = vunpack.c.h.b16 %v2428
      %v3399 = vunpack.c.l.b16 %v2429
      %v3400 = vunpack.c.h.b16 %v2429
      %v3401 = vunpack.c.l.b16 %v2430
      %v3402 = vunpack.c.h.b16 %v2430
      %v3403 = vunpack.c.l.b16 %v2431
      %v3404 = vunpack.c.h.b16 %v2431
      %v3405 = vunpack.c.l.b16 %v2432
      %v3406 = vunpack.c.h.b16 %v2432
      %v3407 = vunpack.c.l.b16 %v2433
      %v3408 = vunpack.c.h.b16 %v2433
      %v3409 = vunpack.c.l.b16 %v2434
      %v3410 = vunpack.c.h.b16 %v2434
      %v3411 = vunpack.c.l.b16 %v2435
      %v3412 = vunpack.c.h.b16 %v2435
      %v3413 = vunpack.c.l.b16 %v2436
      %v3414 = vunpack.c.h.b16 %v2436
      %v3415 = vunpack.c.l.b16 %v2437
      %v3416 = vunpack.c.h.b16 %v2437
      %v3417 = vunpack.c.l.b16 %v2438
      %v3418 = vunpack.c.h.b16 %v2438
      %v3419 = vunpack.c.l.b16 %v2439
      %v3420 = vunpack.c.h.b16 %v2439
      %v3421 = vunpack.c.l.b16 %v2440
      %v3422 = vunpack.c.h.b16 %v2440
      %v3423 = vunpack.c.l.b16 %v2441
      %v3424 = vunpack.c.h.b16 %v2441
      %v3425 = vunpack.c.l.b16 %v2442
      %v3426 = vunpack.c.h.b16 %v2442
      %v3427 = vunpack.c.l.b16 %v2443
      %v3428 = vunpack.c.h.b16 %v2443
      %v3429 = vunpack.c.l.b16 %v2444
      %v3430 = vunpack.c.h.b16 %v2444
      %v3431 = vunpack.c.l.b16 %v2445
      %v3432 = vunpack.c.h.b16 %v2445
      %v3433 = vunpack.c.l.b16 %v2446
      %v3434 = vunpack.c.h.b16 %v2446
      %v3435 = vunpack.c.l.b16 %v2447
      %v3436 = vunpack.c.h.b16 %v2447
      %v3437 = vunpack.c.l.b16 %v2448
      %v3438 = vunpack.c.h.b16 %v2448
      %v3439 = vunpack.c.l.b16 %v2449
      %v3440 = vunpack.c.h.b16 %v2449
      %v3441 = vunpack.c.l.b16 %v2450
      %v3442 = vunpack.c.h.b16 %v2450
      %v3443 = vunpack.c.l.b16 %v2451
      %v3444 = vunpack.c.h.b16 %v2451
      %v3445 = vunpack.c.l.b16 %v2452
      %v3446 = vunpack.c.h.b16 %v2452
      %v3447 = vunpack.c.l.b16 %v2453
      %v3448 = vunpack.c.h.b16 %v2453
      %v3449 = vunpack.c.l.b16 %v2454
      %v3450 = vunpack.c.h.b16 %v2454
      %v3451 = vunpack.c.l.b16 %v2455
      %v3452 = vunpack.c.h.b16 %v2455
      %v3453 = vunpack.c.l.b16 %v2456
      %v3454 = vunpack.c.h.b16 %v2456
      %v3455 = vunpack.c.l.b16 %v2457
      %v3456 = vunpack.c.h.b16 %v2457
      %v3457 = vunpack.c.l.b16 %v2458
      %v3458 = vunpack.c.h.b16 %v2458
      %v3459 = vunpack.c.l.b16 %v2459
      %v3460 = vunpack.c.h.b16 %v2459
      %v3461 = vunpack.c.l.b16 %v2460
      %v3462 = vunpack.c.h.b16 %v2460
      %v3463 = vunpack.c.l.b16 %v2461
      %v3464 = vunpack.c.h.b16 %v2461
      %v3465 = vunpack.c.l.b16 %v2462
      %v3466 = vunpack.c.h.b16 %v2462
      %v3467 = vunpack.c.l.b16 %v2463
      %v3468 = vunpack.c.h.b16 %v2463
      %v3469 = vunpack.c.l.b16 %v2464
      %v3470 = vunpack.c.h.b16 %v2464
      %v3471 = vunpack.c.l.b16 %v2465
      %v3472 = vunpack.c.h.b16 %v2465
      %v3473 = vunpack.c.l.b16 %v2466
      %v3474 = vunpack.c.h.b16 %v2466
      %v3475 = vunpack.c.l.b16 %v2467
      %v3476 = vunpack.c.h.b16 %v2467
      %v3477 = vunpack.c.l.b16 %v2468
      %v3478 = vunpack.c.h.b16 %v2468
      %v3479 = vunpack.c.l.b16 %v2469
      %v3480 = vunpack.c.h.b16 %v2469
      %v3481 = vunpack.c.l.b16 %v2470
      %v3482 = vunpack.c.h.b16 %v2470
      %v3483 = vunpack.c.l.b16 %v2471
      %v3484 = vunpack.c.h.b16 %v2471
      %v3485 = vunpack.c.l.b16 %v2472
      %v3486 = vunpack.c.h.b16 %v2472
      %v3487 = vunpack.c.l.b16 %v2473
      %v3488 = vunpack.c.h.b16 %v2473
      %v3489 = vunpack.c.l.b16 %v2474
      %v3490 = vunpack.c.h.b16 %v2474
      %v3491 = vunpack.c.l.b16 %v2475
      %v3492 = vunpack.c.h.b16 %v2475
      %v3493 = vunpack.c.l.b16 %v2476
      %v3494 = vunpack.c.h.b16 %v2476
      %v3495 = vunpack.c.l.b16 %v2477
      %v3496 = vunpack.c.h.b16 %v2477
      %v3497 = vunpack.c.l.b16 %v2478
      %v3498 = vunpack.c.h.b16 %v2478
      %v3499 = vunpack.c.l.b16 %v2479
      %v3500 = vunpack.c.h.b16 %v2479
      %v3501 = vunpack.c.l.b16 %v2480
      %v3502 = vunpack.c.h.b16 %v2480
      %v3503 = vunpack.c.l.b16 %v2481
      %v3504 = vunpack.c.h.b16 %v2481
      %v3505 = vunpack.c.l.b16 %v2482
      %v3506 = vunpack.c.h.b16 %v2482
      %v3507 = vunpack.c.l.b16 %v2483
      %v3508 = vunpack.c.h.b16 %v2483
      %v3509 = vunpack.c.l.b16 %v2484
      %v3510 = vunpack.c.h.b16 %v2484
      %v3511 = vunpack.c.l.b16 %v2485
      %v3512 = vunpack.c.h.b16 %v2485
      %v3513 = vunpack.c.l.b16 %v2486
      %v3514 = vunpack.c.h.b16 %v2486
      %v3515 = vunpack.c.l.b16 %v2487
      %v3516 = vunpack.c.h.b16 %v2487
      %v3517 = vunpack.c.l.b16 %v2488
      %v3518 = vunpack.c.h.b16 %v2488
      %v3519 = vunpack.c.l.b16 %v2489
      %v3520 = vunpack.c.h.b16 %v2489
      %v3521 = vunpack.c.l.b16 %v2490
      %v3522 = vunpack.c.h.b16 %v2490
      %v3523 = vunpack.c.l.b16 %v2491
      %v3524 = vunpack.c.h.b16 %v2491
      %v3525 = vunpack.c.l.b16 %v2492
      %v3526 = vunpack.c.h.b16 %v2492
      %v3527 = vunpack.c.l.b16 %v2493
      %v3528 = vunpack.c.h.b16 %v2493
      %v3529 = vunpack.c.l.b16 %v2494
      %v3530 = vunpack.c.h.b16 %v2494
      %v3531 = vunpack.c.l.b16 %v2495
      %v3532 = vunpack.c.h.b16 %v2495
      %v3533 = vunpack.c.l.b16 %v2496
      %v3534 = vunpack.c.h.b16 %v2496
      %v3535 = vunpack.c.l.b16 %v2497
      %v3536 = vunpack.c.h.b16 %v2497
      %v3537 = vunpack.c.l.b16 %v2498
      %v3538 = vunpack.c.h.b16 %v2498
      %v3539 = vunpack.c.l.b16 %v2499
      %v3540 = vunpack.c.h.b16 %v2499
      %v3541 = vunpack.c.l.b16 %v2500
      %v3542 = vunpack.c.h.b16 %v2500
      %v3543 = vunpack.c.l.b16 %v2501
      %v3544 = vunpack.c.h.b16 %v2501
      %v3545 = vunpack.c.l.b16 %v2502
      %v3546 = vunpack.c.h.b16 %v2502
      %v3547 = vunpack.c.l.b16 %v2503
      %v3548 = vunpack.c.h.b16 %v2503
      %v3549 = vunpack.c.l.b16 %v2504
      %v3550 = vunpack.c.h.b16 %v2504
      %v3551 = vunpack.c.l.b16 %v2505
      %v3552 = vunpack.c.h.b16 %v2505
      %v3553 = vunpack.c.l.b16 %v2506
      %v3554 = vunpack.c.h.b16 %v2506
      %v3555 = vunpack.c.l.b16 %v2507
      %v3556 = vunpack.c.h.b16 %v2507
      %v3557 = vunpack.c.l.b16 %v2508
      %v3558 = vunpack.c.h.b16 %v2508
      %v3559 = vunpack.c.l.b16 %v2509
      %v3560 = vunpack.c.h.b16 %v2509
      %v3561 = vunpack.c.l.b16 %v2510
      %v3562 = vunpack.c.h.b16 %v2510
      %v3563 = vunpack.c.l.b16 %v2511
      %v3564 = vunpack.c.h.b16 %v2511
      %v3565 = vunpack.c.l.b16 %v2512
      %v3566 = vunpack.c.h.b16 %v2512
      %v3567 = vunpack.c.l.b16 %v2513
      %v3568 = vunpack.c.h.b16 %v2513
      %v3569 = vunpack.c.l.b16 %v2514
      %v3570 = vunpack.c.h.b16 %v2514
      %v3571 = vunpack.c.l.b16 %v2515
      %v3572 = vunpack.c.h.b16 %v2515
      %v3573 = vunpack.c.l.b16 %v2516
      %v3574 = vunpack.c.h.b16 %v2516
      %v3575 = vunpack.c.l.b16 %v2517
      %v3576 = vunpack.c.h.b16 %v2517
      %v3577 = vunpack.c.l.b16 %v2518
      %v3578 = vunpack.c.h.b16 %v2518
      %v3579 = vunpack.c.l.b16 %v2519
      %v3580 = vunpack.c.h.b16 %v2519
      %v3581 = vunpack.c.l.b16 %v2520
      %v3582 = vunpack.c.h.b16 %v2520
      %v3583 = vunpack.c.l.b16 %v2521
      %v3584 = vunpack.c.h.b16 %v2521
      %v3585 = vunpack.c.l.b16 %v2522
      %v3586 = vunpack.c.h.b16 %v2522
      %v3587 = vunpack.c.l.b16 %v2523
      %v3588 = vunpack.c.h.b16 %v2523
      %v3589 = vunpack.c.l.b16 %v2524
      %v3590 = vunpack.c.h.b16 %v2524
      %v3591 = vunpack.c.l.b16 %v2525
      %v3592 = vunpack.c.h.b16 %v2525
      %v3593 = vunpack.c.l.b16 %v2526
      %v3594 = vunpack.c.h.b16 %v2526
      %v3595 = vunpack.c.l.b16 %v2527
      %v3596 = vunpack.c.h.b16 %v2527
      %v3597 = vunpack.c.l.b16 %v2528
      %v3598 = vunpack.c.h.b16 %v2528
      %v3599 = vunpack.c.l.b16 %v2529
      %v3600 = vunpack.c.h.b16 %v2529
      %v3601 = vunpack.c.l.b16 %v2530
      %v3602 = vunpack.c.h.b16 %v2530
      %v3603 = vunpack.c.l.b16 %v2531
      %v3604 = vunpack.c.h.b16 %v2531
      %v3605 = vunpack.c.l.b16 %v2532
      %v3606 = vunpack.c.h.b16 %v2532
      %v3607 = vunpack.c.l.b16 %v2533
      %v3608 = vunpack.c.h.b16 %v2533
      %v3609 = vunpack.c.l.b16 %v2534
      %v3610 = vunpack.c.h.b16 %v2534
      %v3611 = vunpack.c.l.b16 %v2535
      %v3612 = vunpack.c.h.b16 %v2535
      %v3613 = vunpack.c.l.b16 %v2536
      %v3614 = vunpack.c.h.b16 %v2536
      %v3615 = vunpack.c.l.b16 %v2537
      %v3616 = vunpack.c.h.b16 %v2537
      %v3617 = vunpack.c.l.b16 %v2538
      %v3618 = vunpack.c.h.b16 %v2538
      %v3619 = vunpack.c.l.b16 %v2539
      %v3620 = vunpack.c.h.b16 %v2539
      %v3621 = vunpack.c.l.b16 %v2540
      %v3622 = vunpack.c.h.b16 %v2540
      %v3623 = vunpack.c.l.b16 %v2541
      %v3624 = vunpack.c.h.b16 %v2541
      %v3625 = vunpack.c.l.b16 %v2542
      %v3626 = vunpack.c.h.b16 %v2542
      %v3627 = vunpack.c.l.b16 %v2543
      %v3628 = vunpack.c.h.b16 %v2543
      %v3629 = vunpack.c.l.b16 %v2544
      %v3630 = vunpack.c.h.b16 %v2544
      %v3631 = vunpack.c.l.b16 %v2545
      %v3632 = vunpack.c.h.b16 %v2545
      %v3633 = vunpack.c.l.b16 %v2546
      %v3634 = vunpack.c.h.b16 %v2546
      %v3635 = vunpack.c.l.b16 %v2547
      %v3636 = vunpack.c.h.b16 %v2547
      %v3637 = vunpack.c.l.b16 %v2548
      %v3638 = vunpack.c.h.b16 %v2548
      %v3639 = vunpack.c.l.b16 %v2549
      %v3640 = vunpack.c.h.b16 %v2549
      %v3641 = vunpack.c.l.b16 %v2550
      %v3642 = vunpack.c.h.b16 %v2550
      %v3643 = vunpack.c.l.b16 %v2551
      %v3644 = vunpack.c.h.b16 %v2551
      %v3645 = vunpack.c.l.b16 %v2552
      %v3646 = vunpack.c.h.b16 %v2552
      %v3647 = vunpack.c.l.b16 %v2553
      %v3648 = vunpack.c.h.b16 %v2553
      %v3649 = vunpack.c.l.b16 %v2554
      %v3650 = vunpack.c.h.b16 %v2554
      %v3651 = vunpack.c.l.b16 %v2555
      %v3652 = vunpack.c.h.b16 %v2555
      %v3653 = vunpack.c.l.b16 %v2556
      %v3654 = vunpack.c.h.b16 %v2556
      %v3655 = vunpack.c.l.b16 %v2557
      %v3656 = vunpack.c.h.b16 %v2557
      %v3657 = vunpack.c.l.b16 %v2558
      %v3658 = vunpack.c.h.b16 %v2558
      %v3659 = vunpack.c.l.b16 %v2559
      %v3660 = vunpack.c.h.b16 %v2559
      %v3661 = vunpack.c.l.b16 %v2560
      %v3662 = vunpack.c.h.b16 %v2560
      %v3663 = vunpack.c.l.b16 %v2561
      %v3664 = vunpack.c.h.b16 %v2561
      %v3665 = vunpack.c.l.b16 %v2562
      %v3666 = vunpack.c.h.b16 %v2562
      %v3667 = vunpack.c.l.b16 %v2563
      %v3668 = vunpack.c.h.b16 %v2563
      %v3669 = vunpack.c.l.b16 %v2564
      %v3670 = vunpack.c.h.b16 %v2564
      %v3671 = vunpack.c.l.b16 %v2565
      %v3672 = vunpack.c.h.b16 %v2565
      %v3673 = vunpack.c.l.b16 %v2566
      %v3674 = vunpack.c.h.b16 %v2566
      %v3675 = vunpack.c.l.b16 %v2567
      %v3676 = vunpack.c.h.b16 %v2567
      %v3677 = vunpack.c.l.b16 %v2568
      %v3678 = vunpack.c.h.b16 %v2568
      %v3679 = vunpack.c.l.b16 %v2569
      %v3680 = vunpack.c.h.b16 %v2569
      %v3681 = vunpack.c.l.b16 %v2570
      %v3682 = vunpack.c.h.b16 %v2570
      %v3683 = vunpack.c.l.b16 %v2571
      %v3684 = vunpack.c.h.b16 %v2571
      %v3685 = vunpack.c.l.b16 %v2572
      %v3686 = vunpack.c.h.b16 %v2572
      %v3687 = vunpack.c.l.b16 %v2573
      %v3688 = vunpack.c.h.b16 %v2573
      %v3689 = vunpack.c.l.b16 %v2574
      %v3690 = vunpack.c.h.b16 %v2574
      %v3691 = vunpack.c.l.b16 %v2575
      %v3692 = vunpack.c.h.b16 %v2575
      %v3693 = vunpack.c.l.b16 %v2576
      %v3694 = vunpack.c.h.b16 %v2576
      %v3695 = vunpack.c.l.b16 %v2577
      %v3696 = vunpack.c.h.b16 %v2577
      %v3697 = vunpack.c.l.b16 %v2578
      %v3698 = vunpack.c.h.b16 %v2578
      %v3699 = vunpack.c.l.b16 %v2579
      %v3700 = vunpack.c.h.b16 %v2579
      %v3701 = vunpack.c.l.b16 %v2580
      %v3702 = vunpack.c.h.b16 %v2580
      %v3703 = vunpack.c.l.b16 %v2581
      %v3704 = vunpack.c.h.b16 %v2581
      %v3705 = vunpack.c.l.b16 %v2582
      %v3706 = vunpack.c.h.b16 %v2582
      %v3707 = vunpack.c.l.b16 %v2583
      %v3708 = vunpack.c.h.b16 %v2583
      %v3709 = vunpack.c.l.b16 %v2584
      %v3710 = vunpack.c.h.b16 %v2584
      %v3711 = vunpack.c.l.b16 %v2585
      %v3712 = vunpack.c.h.b16 %v2585
      %v3713 = vunpack.c.l.b16 %v2586
      %v3714 = vunpack.c.h.b16 %v2586
      %v3715 = vunpack.c.l.b16 %v2587
      %v3716 = vunpack.c.h.b16 %v2587
      %v3717 = vunpack.c.l.b16 %v2588
      %v3718 = vunpack.c.h.b16 %v2588
      %v3719 = vunpack.c.l.b16 %v2589
      %v3720 = vunpack.c.h.b16 %v2589
      %v3721 = vunpack.c.l.b16 %v2590
      %v3722 = vunpack.c.h.b16 %v2590
      %v3723 = vunpack.c.l.b16 %v2591
      %v3724 = vunpack.c.h.b16 %v2591
      %v3725 = vunpack.c.l.b16 %v2592
      %v3726 = vunpack.c.h.b16 %v2592
      %v3727 = vunpack.c.l.b16 %v2593
      %v3728 = vunpack.c.h.b16 %v2593
      %v3729 = vunpack.c.l.b16 %v2594
      %v3730 = vunpack.c.h.b16 %v2594
      %v3731 = vunpack.c.l.b16 %v2595
      %v3732 = vunpack.c.h.b16 %v2595
      %v3733 = vunpack.c.l.b16 %v2596
      %v3734 = vunpack.c.h.b16 %v2596
      %v3735 = vunpack.c.l.b16 %v2597
      %v3736 = vunpack.c.h.b16 %v2597
      %v3737 = vunpack.c.l.b16 %v2598
      %v3738 = vunpack.c.h.b16 %v2598
      %v3739 = vunpack.c.l.b16 %v2599
      %v3740 = vunpack.c.h.b16 %v2599
      %v3741 = vunpack.c.l.b16 %v2600
      %v3742 = vunpack.c.h.b16 %v2600
      %v3743 = vunpack.c.l.b16 %v2601
      %v3744 = vunpack.c.h.b16 %v2601
      %v3745 = vunpack.c.l.b16 %v2602
      %v3746 = vunpack.c.h.b16 %v2602
      %v3747 = vunpack.c.l.b16 %v2603
      %v3748 = vunpack.c.h.b16 %v2603
      %v3749 = vunpack.c.l.b16 %v2604
      %v3750 = vunpack.c.h.b16 %v2604
      %v3751 = vunpack.c.l.b16 %v2605
      %v3752 = vunpack.c.h.b16 %v2605
      %v3753 = vunpack.c.l.b16 %v2606
      %v3754 = vunpack.c.h.b16 %v2606
      %v3755 = vunpack.c.l.b16 %v2607
      %v3756 = vunpack.c.h.b16 %v2607
      %v3757 = vunpack.c.l.b16 %v2608
      %v3758 = vunpack.c.h.b16 %v2608
      %v3759 = vunpack.c.l.b16 %v2609
      %v3760 = vunpack.c.h.b16 %v2609
      %v3761 = vunpack.c.l.b16 %v2610
      %v3762 = vunpack.c.h.b16 %v2610
      %v3763 = vunpack.c.l.b16 %v2611
      %v3764 = vunpack.c.h.b16 %v2611
      %v3765 = vunpack.c.l.b16 %v2612
      %v3766 = vunpack.c.h.b16 %v2612
      %v3767 = vunpack.c.l.b16 %v2613
      %v3768 = vunpack.c.h.b16 %v2613
      %v3769 = vunpack.c.l.b16 %v2614
      %v3770 = vunpack.c.h.b16 %v2614
      %v3771 = vunpack.c.l.b16 %v2615
      %v3772 = vunpack.c.h.b16 %v2615
      %v3773 = vunpack.c.l.b16 %v2616
      %v3774 = vunpack.c.h.b16 %v2616
      %v3775 = vunpack.c.l.b16 %v2617
      %v3776 = vunpack.c.h.b16 %v2617
      %v3777 = vunpack.c.l.b16 %v2618
      %v3778 = vunpack.c.h.b16 %v2618
      %v3779 = vunpack.c.l.b16 %v2619
      %v3780 = vunpack.c.h.b16 %v2619
      %v3781 = vunpack.c.l.b16 %v2620
      %v3782 = vunpack.c.h.b16 %v2620
      %v3783 = vunpack.c.l.b16 %v2621
      %v3784 = vunpack.c.h.b16 %v2621
      %v3785 = vunpack.c.l.b16 %v2622
      %v3786 = vunpack.c.h.b16 %v2622
      %v3787 = vunpack.c.l.b16 %v2623
      %v3788 = vunpack.c.h.b16 %v2623
      %v3789 = vunpack.c.l.b16 %v2624
      %v3790 = vunpack.c.h.b16 %v2624
      %v3791 = vunpack.c.l.b16 %v2625
      %v3792 = vunpack.c.h.b16 %v2625
      %v3793 = vunpack.c.l.b16 %v2626
      %v3794 = vunpack.c.h.b16 %v2626
      %v3795 = vunpack.c.l.b16 %v2627
      %v3796 = vunpack.c.h.b16 %v2627
      %v3797 = vunpack.c.l.b16 %v2628
      %v3798 = vunpack.c.h.b16 %v2628
      %v3799 = vunpack.c.l.b16 %v2629
      %v3800 = vunpack.c.h.b16 %v2629
      %v3801 = vunpack.c.l.b16 %v2630
      %v3802 = vunpack.c.h.b16 %v2630
      %v3803 = vunpack.c.l.b16 %v2631
      %v3804 = vunpack.c.h.b16 %v2631
      %v3805 = vunpack.c.l.b16 %v2632
      %v3806 = vunpack.c.h.b16 %v2632
      %v3807 = vunpack.c.l.b16 %v2633
      %v3808 = vunpack.c.h.b16 %v2633
      %v3809 = vunpack.c.l.b16 %v2634
      %v3810 = vunpack.c.h.b16 %v2634
      %v3811 = vunpack.c.l.b16 %v2635
      %v3812 = vunpack.c.h.b16 %v2635
      %v3813 = vunpack.c.l.b16 %v2636
      %v3814 = vunpack.c.h.b16 %v2636
      %v3815 = vunpack.c.l.b16 %v2637
      %v3816 = vunpack.c.h.b16 %v2637
      %v3817 = vunpack.c.l.b16 %v2638
      %v3818 = vunpack.c.h.b16 %v2638
      %v3819 = vunpack.c.l.b16 %v2639
      %v3820 = vunpack.c.h.b16 %v2639
      %v3821 = vunpack.c.l.b16 %v2640
      %v3822 = vunpack.c.h.b16 %v2640
      %v3823 = vunpack.c.l.b16 %v2641
      %v3824 = vunpack.c.h.b16 %v2641
      %v3825 = vunpack.c.l.b16 %v2642
      %v3826 = vunpack.c.h.b16 %v2642
      %v3827 = vunpack.c.l.b16 %v2643
      %v3828 = vunpack.c.h.b16 %v2643
      %v3829 = vunpack.c.l.b16 %v2644
      %v3830 = vunpack.c.h.b16 %v2644
      %v3831 = vunpack.c.l.b16 %v2645
      %v3832 = vunpack.c.h.b16 %v2645
      %v3833 = vunpack.c.l.b16 %v2646
      %v3834 = vunpack.c.h.b16 %v2646
      %v3835 = vunpack.c.l.b16 %v2647
      %v3836 = vunpack.c.h.b16 %v2647
      %v3837 = vunpack.c.l.b16 %v2648
      %v3838 = vunpack.c.h.b16 %v2648
      %v3839 = vunpack.c.l.b16 %v2649
      %v3840 = vunpack.c.h.b16 %v2649
      %v3841 = vunpack.c.l.b16 %v2650
      %v3842 = vunpack.c.h.b16 %v2650
      %v3843 = vunpack.c.l.b16 %v2651
      %v3844 = vunpack.c.h.b16 %v2651
      %v3845 = vunpack.c.l.b16 %v2652
      %v3846 = vunpack.c.h.b16 %v2652
      %v3847 = vunpack.c.l.b16 %v2653
      %v3848 = vunpack.c.h.b16 %v2653
      %v3849 = vunpack.c.l.b16 %v2654
      %v3850 = vunpack.c.h.b16 %v2654
      %v3851 = vunpack.c.l.b16 %v2655
      %v3852 = vunpack.c.h.b16 %v2655
      %v3853 = vunpack.c.l.b16 %v2656
      %v3854 = vunpack.c.h.b16 %v2656
      %v3855 = vunpack.c.l.b16 %v2657
      %v3856 = vunpack.c.h.b16 %v2657
      %v3857 = vunpack.c.l.b16 %v2658
      %v3858 = vunpack.c.h.b16 %v2658
      %v3859 = vunpack.c.l.b16 %v2659
      %v3860 = vunpack.c.h.b16 %v2659
      %v3861 = vunpack.c.l.b16 %v2660
      %v3862 = vunpack.c.h.b16 %v2660
      %v3863 = vunpack.c.l.b16 %v2661
      %v3864 = vunpack.c.h.b16 %v2661
      %v3865 = vunpack.c.l.b16 %v2662
      %v3866 = vunpack.c.h.b16 %v2662
      %v3867 = vunpack.c.l.b16 %v2663
      %v3868 = vunpack.c.h.b16 %v2663
      %v3869 = vunpack.c.l.b16 %v2664
      %v3870 = vunpack.c.h.b16 %v2664
      %v3871 = vunpack.c.l.b16 %v2665
      %v3872 = vunpack.c.h.b16 %v2665
      %v3873 = vunpack.c.l.b16 %v2666
      %v3874 = vunpack.c.h.b16 %v2666
      %v3875 = vunpack.c.l.b16 %v2667
      %v3876 = vunpack.c.h.b16 %v2667
      %v3877 = vunpack.c.l.b16 %v2668
      %v3878 = vunpack.c.h.b16 %v2668
      %v3879 = vunpack.c.l.b16 %v2669
      %v3880 = vunpack.c.h.b16 %v2669
      %v3881 = vunpack.c.l.b16 %v2670
      %v3882 = vunpack.c.h.b16 %v2670
      %v3883 = vunpack.c.l.b16 %v2671
      %v3884 = vunpack.c.h.b16 %v2671
      %v3885 = vunpack.c.l.b16 %v2672
      %v3886 = vunpack.c.h.b16 %v2672
      %v3887 = vunpack.c.l.b16 %v2673
      %v3888 = vunpack.c.h.b16 %v2673
      %v3889 = vunpack.c.l.b16 %v2674
      %v3890 = vunpack.c.h.b16 %v2674
      %v3891 = vunpack.c.l.b16 %v2675
      %v3892 = vunpack.c.h.b16 %v2675
      %v3893 = vunpack.c.l.b16 %v2676
      %v3894 = vunpack.c.h.b16 %v2676
      %v3895 = vunpack.c.l.b16 %v2677
      %v3896 = vunpack.c.h.b16 %v2677
      %v3897 = vunpack.c.l.b16 %v2678
      %v3898 = vunpack.c.h.b16 %v2678
      %v3899 = vunpack.c.l.b16 %v2679
      %v3900 = vunpack.c.h.b16 %v2679
      %v3901 = vunpack.c.l.b16 %v2680
      %v3902 = vunpack.c.h.b16 %v2680
      %v3903 = vunpack.c.l.b16 %v2681
      %v3904 = vunpack.c.h.b16 %v2681
      %v3905 = vunpack.c.l.b16 %v2682
      %v3906 = vunpack.c.h.b16 %v2682
      %v3907 = vunpack.c.l.b16 %v2683
      %v3908 = vunpack.c.h.b16 %v2683
      %v3909 = vunpack.c.l.b16 %v2684
      %v3910 = vunpack.c.h.b16 %v2684
      %v3911 = vunpack.c.l.b16 %v2685
      %v3912 = vunpack.c.h.b16 %v2685
      %v3913 = vunpack.c.l.b16 %v2686
      %v3914 = vunpack.c.h.b16 %v2686
      %v3915 = vunpack.c.l.b16 %v2687
      %v3916 = vunpack.c.h.b16 %v2687
      %v3917 = vunpack.c.l.b16 %v2688
      %v3918 = vunpack.c.h.b16 %v2688
      %v3919 = vunpack.c.l.b16 %v2689
      %v3920 = vunpack.c.h.b16 %v2689
      %v3921 = vunpack.c.l.b16 %v2690
      %v3922 = vunpack.c.h.b16 %v2690
      %v3923 = vunpack.c.l.b16 %v2691
      %v3924 = vunpack.c.h.b16 %v2691
      %v3925 = vunpack.c.l.b16 %v2692
      %v3926 = vunpack.c.h.b16 %v2692
      %v3927 = vunpack.c.l.b16 %v2693
      %v3928 = vunpack.c.h.b16 %v2693
      %v3929 = vunpack.c.l.b16 %v2694
      %v3930 = vunpack.c.h.b16 %v2694
      %v3931 = vunpack.c.l.b16 %v2695
      %v3932 = vunpack.c.h.b16 %v2695
      %v3933 = vunpack.c.l.b16 %v2696
      %v3934 = vunpack.c.h.b16 %v2696
      %v3935 = vunpack.c.l.b16 %v2697
      %v3936 = vunpack.c.h.b16 %v2697
      %v3937 = vunpack.c.l.b16 %v2698
      %v3938 = vunpack.c.h.b16 %v2698
      %v3939 = vunpack.c.l.b16 %v2699
      %v3940 = vunpack.c.h.b16 %v2699
      %v3941 = vunpack.c.l.b16 %v2700
      %v3942 = vunpack.c.h.b16 %v2700
      %v3943 = vunpack.c.l.b16 %v2701
      %v3944 = vunpack.c.h.b16 %v2701
      %v3945 = vunpack.c.l.b16 %v2702
      %v3946 = vunpack.c.h.b16 %v2702
      %v3947 = vunpack.c.l.b16 %v2703
      %v3948 = vunpack.c.h.b16 %v2703
      %v3949 = vunpack.c.l.b16 %v2704
      %v3950 = vunpack.c.h.b16 %v2704
      %v3951 = vunpack.c.l.b16 %v2705
      %v3952 = vunpack.c.h.b16 %v2705
      %v3953 = vunpack.c.l.b16 %v2706
      %v3954 = vunpack.c.h.b16 %v2706
      %v3955 = vunpack.c.l.b16 %v2707
      %v3956 = vunpack.c.h.b16 %v2707
      %v3957 = vunpack.c.l.b16 %v2708
      %v3958 = vunpack.c.h.b16 %v2708
      %v3959 = vunpack.c.l.b16 %v2709
      %v3960 = vunpack.c.h.b16 %v2709
      %v3961 = vunpack.c.l.b16 %v2710
      %v3962 = vunpack.c.h.b16 %v2710
      %v3963 = vunpack.c.l.b16 %v2711
      %v3964 = vunpack.c.h.b16 %v2711
      %v3965 = vunpack.c.l.b16 %v2712
      %v3966 = vunpack.c.h.b16 %v2712
      %v3967 = vunpack.c.l.b16 %v2713
      %v3968 = vunpack.c.h.b16 %v2713
      %v3969 = vunpack.c.l.b16 %v2714
      %v3970 = vunpack.c.h.b16 %v2714
      %v3971 = vunpack.c.l.b16 %v2715
      %v3972 = vunpack.c.h.b16 %v2715
      %v3973 = vunpack.c.l.b16 %v2716
      %v3974 = vunpack.c.h.b16 %v2716
      %v3975 = vunpack.c.l.b16 %v2717
      %v3976 = vunpack.c.h.b16 %v2717
      %v3977 = vunpack.c.l.b16 %v2718
      %v3978 = vunpack.c.h.b16 %v2718
      %v3979 = vunpack.c.l.b16 %v2719
      %v3980 = vunpack.c.h.b16 %v2719
      %v3981 = vunpack.c.l.b16 %v2720
      %v3982 = vunpack.c.h.b16 %v2720
      %v3983 = vunpack.c.l.b16 %v2721
      %v3984 = vunpack.c.h.b16 %v2721
      %v3985 = vunpack.c.l.b16 %v2722
      %v3986 = vunpack.c.h.b16 %v2722
      %v3987 = vunpack.c.l.b16 %v2723
      %v3988 = vunpack.c.h.b16 %v2723
      %v3989 = vunpack.c.l.b16 %v2724
      %v3990 = vunpack.c.h.b16 %v2724
      %v3991 = vunpack.c.l.b16 %v2725
      %v3992 = vunpack.c.h.b16 %v2725
      %v3993 = vunpack.c.l.b16 %v2726
      %v3994 = vunpack.c.h.b16 %v2726
      %v3995 = vunpack.c.l.b16 %v2727
      %v3996 = vunpack.c.h.b16 %v2727
      %v3997 = vunpack.c.l.b16 %v2728
      %v3998 = vunpack.c.h.b16 %v2728
      %v3999 = vunpack.c.l.b16 %v2729
      %v4000 = vunpack.c.h.b16 %v2729
      %v4001 = vunpack.c.l.b16 %v2730
      %v4002 = vunpack.c.h.b16 %v2730
      %v4003 = vunpack.c.l.b16 %v2731
      %v4004 = vunpack.c.h.b16 %v2731
      %v4005 = vunpack.c.l.b16 %v2732
      %v4006 = vunpack.c.h.b16 %v2732
      %v4007 = vunpack.c.l.b16 %v2733
      %v4008 = vunpack.c.h.b16 %v2733
      %v4009 = vunpack.c.l.b16 %v2734
      %v4010 = vunpack.c.h.b16 %v2734
      %v4011 = vunpack.c.l.b16 %v2735
      %v4012 = vunpack.c.h.b16 %v2735
      %v4013 = vunpack.c.l.b16 %v2736
      %v4014 = vunpack.c.h.b16 %v2736
      %v4015 = vunpack.c.l.b16 %v2737
      %v4016 = vunpack.c.h.b16 %v2737
      %v4017 = vunpack.c.l.b16 %v2738
      %v4018 = vunpack.c.h.b16 %v2738
      %v4019 = vunpack.c.l.b16 %v2739
      %v4020 = vunpack.c.h.b16 %v2739
      %v4021 = vunpack.c.l.b16 %v2740
      %v4022 = vunpack.c.h.b16 %v2740
      %v4023 = vunpack.c.l.b16 %v2741
      %v4024 = vunpack.c.h.b16 %v2741
      %v4025 = vunpack.c.l.b16 %v2742
      %v4026 = vunpack.c.h.b16 %v2742
      %v4027 = vunpack.c.l.b16 %v2743
      %v4028 = vunpack.c.h.b16 %v2743
      %v4029 = vunpack.c.l.b16 %v2744
      %v4030 = vunpack.c.h.b16 %v2744
      %v4031 = vunpack.c.l.b16 %v2745
      %v4032 = vunpack.c.h.b16 %v2745
      %v4033 = vunpack.c.l.b16 %v2746
      %v4034 = vunpack.c.h.b16 %v2746
      %v4035 = vunpack.c.l.b16 %v2747
      %v4036 = vunpack.c.h.b16 %v2747
      %v4037 = vunpack.c.l.b16 %v2748
      %v4038 = vunpack.c.h.b16 %v2748
      %v4039 = vunpack.c.l.b16 %v2749
      %v4040 = vunpack.c.h.b16 %v2749
      %v4041 = vunpack.c.l.b16 %v2750
      %v4042 = vunpack.c.h.b16 %v2750
      %v4043 = vunpack.c.l.b16 %v2751
      %v4044 = vunpack.c.h.b16 %v2751
      %v4045 = vunpack.c.l.b16 %v2752
      %v4046 = vunpack.c.h.b16 %v2752
      %v4047 = vunpack.c.l.b16 %v2753
      %v4048 = vunpack.c.h.b16 %v2753
      %v4049 = vunpack.c.l.b16 %v2754
      %v4050 = vunpack.c.h.b16 %v2754
      %v4051 = vunpack.c.l.b16 %v2755
      %v4052 = vunpack.c.h.b16 %v2755
      %v4053 = vunpack.c.l.b16 %v2756
      %v4054 = vunpack.c.h.b16 %v2756
      %v4055 = vunpack.c.l.b16 %v2757
      %v4056 = vunpack.c.h.b16 %v2757
      %v4057 = vunpack.c.l.b16 %v2758
      %v4058 = vunpack.c.h.b16 %v2758
      %v4059 = vunpack.c.l.b16 %v2759
      %v4060 = vunpack.c.h.b16 %v2759
      %v4061 = vunpack.c.l.b16 %v2760
      %v4062 = vunpack.c.h.b16 %v2760
      %v4063 = vunpack.c.l.b16 %v2761
      %v4064 = vunpack.c.h.b16 %v2761
      %v4065 = vunpack.c.l.b16 %v2762
      %v4066 = vunpack.c.h.b16 %v2762
      %v4067 = vunpack.c.l.b16 %v2763
      %v4068 = vunpack.c.h.b16 %v2763
      %v4069 = vunpack.c.l.b16 %v2764
      %v4070 = vunpack.c.h.b16 %v2764
      %v4071 = vunpack.c.l.b16 %v2765
      %v4072 = vunpack.c.h.b16 %v2765
      %v4073 = vunpack.c.l.b16 %v2766
      %v4074 = vunpack.c.h.b16 %v2766
      %v4075 = vunpack.c.l.b16 %v2767
      %v4076 = vunpack.c.h.b16 %v2767
      %v4077 = vunpack.c.l.b16 %v2768
      %v4078 = vunpack.c.h.b16 %v2768
      %v4079 = vunpack.c.l.b16 %v2769
      %v4080 = vunpack.c.h.b16 %v2769
      %v4081 = vunpack.c.l.b16 %v2770
      %v4082 = vunpack.c.h.b16 %v2770
      %v4083 = vunpack.c.l.b16 %v2771
      %v4084 = vunpack.c.h.b16 %v2771
      %v4085 = vunpack.c.l.b16 %v2772
      %v4086 = vunpack.c.h.b16 %v2772
      %v4087 = vunpack.c.l.b16 %v2773
      %v4088 = vunpack.c.h.b16 %v2773
      %v4089 = vunpack.c.l.b16 %v2774
      %v4090 = vunpack.c.h.b16 %v2774
      %v4091 = vunpack.c.l.b16 %v2775
      %v4092 = vunpack.c.h.b16 %v2775
      %v4093 = vunpack.c.l.b16 %v2776
      %v4094 = vunpack.c.h.b16 %v2776
      %v4095 = vunpack.c.l.b16 %v2777
      %v4096 = vunpack.c.h.b16 %v2777
      %v4097 = vunpack.c.l.b16 %v2778
      %v4098 = vunpack.c.h.b16 %v2778
      %v4099 = vunpack.c.l.b16 %v2779
      %v4100 = vunpack.c.h.b16 %v2779
      %v4101 = vunpack.c.l.b16 %v2780
      %v4102 = vunpack.c.h.b16 %v2780
      %v4103 = vunpack.c.l.b16 %v2781
      %v4104 = vunpack.c.h.b16 %v2781
      %v4105 = vunpack.c.l.b16 %v2782
      %v4106 = vunpack.c.h.b16 %v2782
      %v4107 = vunpack.c.l.b16 %v2783
      %v4108 = vunpack.c.h.b16 %v2783
      %v4109 = vunpack.c.l.b16 %v2784
      %v4110 = vunpack.c.h.b16 %v2784
      %v4111 = vunpack.c.l.b16 %v2785
      %v4112 = vunpack.c.h.b16 %v2785
      %v4113 = vunpack.c.l.b16 %v2786
      %v4114 = vunpack.c.h.b16 %v2786
      %v4115 = vunpack.c.l.b16 %v2787
      %v4116 = vunpack.c.h.b16 %v2787
      %v4117 = vunpack.c.l.b16 %v2788
      %v4118 = vunpack.c.h.b16 %v2788
      %v4119 = vunpack.c.l.b16 %v2789
      %v4120 = vunpack.c.h.b16 %v2789
      %v4121 = vunpack.c.l.b16 %v2790
      %v4122 = vunpack.c.h.b16 %v2790
      %v4123 = vunpack.c.l.b16 %v2791
      %v4124 = vunpack.c.h.b16 %v2791
      %v4125 = vunpack.c.l.b16 %v2792
      %v4126 = vunpack.c.h.b16 %v2792
      %v4127 = vunpack.c.l.b16 %v2793
      %v4128 = vunpack.c.h.b16 %v2793
      %v4129 = vunpack.c.l.b16 %v2794
      %v4130 = vunpack.c.h.b16 %v2794
      %v4131 = vunpack.c.l.b16 %v2795
      %v4132 = vunpack.c.h.b16 %v2795
      %v4133 = vunpack.c.l.b16 %v2796
      %v4134 = vunpack.c.h.b16 %v2796
      %v4135 = vunpack.c.l.b16 %v2797
      %v4136 = vunpack.c.h.b16 %v2797
      %v4137 = vunpack.c.l.b16 %v2798
      %v4138 = vunpack.c.h.b16 %v2798
      %v4139 = vunpack.c.l.b16 %v2799
      %v4140 = vunpack.c.h.b16 %v2799
      %v4141 = vunpack.c.l.b16 %v2800
      %v4142 = vunpack.c.h.b16 %v2800
      %v4143 = vunpack.c.l.b16 %v2801
      %v4144 = vunpack.c.h.b16 %v2801
      %v4145 = vunpack.c.l.b16 %v2802
      %v4146 = vunpack.c.h.b16 %v2802
      %v4147 = vunpack.c.l.b16 %v2803
      %v4148 = vunpack.c.h.b16 %v2803
      %v4149 = vunpack.c.l.b16 %v2804
      %v4150 = vunpack.c.h.b16 %v2804
      %v4151 = vpack.c.b16 %v3257, %v3255
      %v4152 = vpack.c.b16 %v3258, %v3256
      %v4153 = vpack.c.b16 %v3261, %v3259
      %v4154 = vpack.c.b16 %v3262, %v3260
      %v4155 = vpack.c.b16 %v3265, %v3263
      %v4156 = vpack.c.b16 %v3266, %v3264
      %v4157 = vpack.c.b16 %v3269, %v3267
      %v4158 = vpack.c.b16 %v3270, %v3268
      %v4159 = vpack.c.b16 %v3273, %v3271
      %v4160 = vpack.c.b16 %v3274, %v3272
      %v4161 = vpack.c.b16 %v3277, %v3275
      %v4162 = vpack.c.b16 %v3278, %v3276
      %v4163 = vpack.c.b16 %v3281, %v3279
      %v4164 = vpack.c.b16 %v3282, %v3280
      %v4165 = vpack.c.b16 %v3285, %v3283
      %v4166 = vpack.c.b16 %v3286, %v3284
      %v4167 = vpack.c.b16 %v3289, %v3287
      %v4168 = vpack.c.b16 %v3290, %v3288
      %v4169 = vpack.c.b16 %v3293, %v3291
      %v4170 = vpack.c.b16 %v3294, %v3292
      %v4171 = vpack.c.b16 %v3297, %v3295
      %v4172 = vpack.c.b16 %v3298, %v3296
      %v4173 = vpack.c.b16 %v3301, %v3299
      %v4174 = vpack.c.b16 %v3302, %v3300
      %v4175 = vpack.c.b16 %v3305, %v3303
      %v4176 = vpack.c.b16 %v3306, %v3304
      %v4177 = vpack.c.b16 %v3309, %v3307
      %v4178 = vpack.c.b16 %v3310, %v3308
      %v4179 = vpack.c.b16 %v3313, %v3311
      %v4180 = vpack.c.b16 %v3314, %v3312
      %v4181 = vpack.c.b16 %v3317, %v3315
      %v4182 = vpack.c.b16 %v3318, %v3316
      %v4183 = vpack.c.b16 %v3321, %v3319
      %v4184 = vpack.c.b16 %v3322, %v3320
      %v4185 = vpack.c.b16 %v3325, %v3323
      %v4186 = vpack.c.b16 %v3326, %v3324
      %v4187 = vpack.c.b16 %v3329, %v3327
      %v4188 = vpack.c.b16 %v3330, %v3328
      %v4189 = vpack.c.b16 %v3333, %v3331
      %v4190 = vpack.c.b16 %v3334, %v3332
      %v4191 = vpack.c.b16 %v3337, %v3335
      %v4192 = vpack.c.b16 %v3338, %v3336
      %v4193 = vpack.c.b16 %v3341, %v3339
      %v4194 = vpack.c.b16 %v3342, %v3340
      %v4195 = vpack.c.b16 %v3345, %v3343
      %v4196 = vpack.c.b16 %v3346, %v3344
      %v4197 = vpack.c.b16 %v3349, %v3347
      %v4198 = vpack.c.b16 %v3350, %v3348
      %v4199 = vpack.c.b16 %v3353, %v3351
      %v4200 = vpack.c.b16 %v3354, %v3352
      %v4201 = vpack.c.b16 %v3357, %v3355
      %v4202 = vpack.c.b16 %v3358, %v3356
      %v4203 = vpack.c.b16 %v3361, %v3359
      %v4204 = vpack.c.b16 %v3362, %v3360
      %v4205 = vpack.c.b16 %v3365, %v3363
      %v4206 = vpack.c.b16 %v3366, %v3364
      %v4207 = vpack.c.b16 %v3369, %v3367
      %v4208 = vpack.c.b16 %v3370, %v3368
      %v4209 = vpack.c.b16 %v3373, %v3371
      %v4210 = vpack.c.b16 %v3374, %v3372
      %v4211 = vpack.c.b16 %v3377, %v3375
      %v4212 = vpack.c.b16 %v3378, %v3376
      %v4213 = vpack.c.b16 %v3381, %v3379
      %v4214 = vpack.c.b16 %v3382, %v3380
      %v4215 = vpack.c.b16 %v3385, %v3383
      %v4216 = vpack.c.b16 %v3386, %v3384
      %v4217 = vpack.c.b16 %v3389, %v3387
      %v4218 = vpack.c.b16 %v3390, %v3388
      %v4219 = vpack.c.b16 %v3393, %v3391
      %v4220 = vpack.c.b16 %v3394, %v3392
      %v4221 = vpack.c.b16 %v3397, %v3395
      %v4222 = vpack.c.b16 %v3398, %v3396
      %v4223 = vpack.c.b16 %v3401, %v3399
      %v4224 = vpack.c.b16 %v3402, %v3400
      %v4225 = vpack.c.b16 %v3405, %v3403
      %v4226 = vpack.c.b16 %v3406, %v3404
      %v4227 = vpack.c.b16 %v3409, %v3407
      %v4228 = vpack.c.b16 %v3410, %v3408
      %v4229 = vpack.c.b16 %v3413, %v3411
      %v4230 = vpack.c.b16 %v3414, %v3412
      %v4231 = vpack.c.b16 %v3417, %v3415
      %v4232 = vpack.c.b16 %v3418, %v3416
      %v4233 = vpack.c.b16 %v3421, %v3419
      %v4234 = vpack.c.b16 %v3422, %v3420
      %v4235 = vpack.c.b16 %v3425, %v3423
      %v4236 = vpack.c.b16 %v3426, %v3424
      %v4237 = vpack.c.b16 %v3429, %v3427
      %v4238 = vpack.c.b16 %v3430, %v3428
      %v4239 = vpack.c.b16 %v3433, %v3431
      %v4240 = vpack.c.b16 %v3434, %v3432
      %v4241 = vpack.c.b16 %v3437, %v3435
      %v4242 = vpack.c.b16 %v3438, %v3436
      %v4243 = vpack.c.b16 %v3441, %v3439
      %v4244 = vpack.c.b16 %v3442, %v3440
      %v4245 = vpack.c.b16 %v3445, %v3443
      %v4246 = vpack.c.b16 %v3446, %v3444
      %v4247 = vpack.c.b16 %v3449, %v3447
      %v4248 = vpack.c.b16 %v3450, %v3448
      %v4249 = vpack.c.b16 %v3453, %v3451
      %v4250 = vpack.c.b16 %v3454, %v3452
      %v4251 = vpack.c.b16 %v3457, %v3455
      %v4252 = vpack.c.b16 %v3458, %v3456
      %v4253 = vpack.c.b16 %v3461, %v3459
      %v4254 = vpack.c.b16 %v3462, %v3460
      %v4255 = vpack.c.b16 %v3465, %v3463
      %v4256 = vpack.c.b16 %v3466, %v3464
      %v4257 = vpack.c.b16 %v3469, %v3467
      %v4258 = vpack.c.b16 %v3470, %v3468
      %v4259 = vpack.c.b16 %v3473, %v3471
      %v4260 = vpack.c.b16 %v3474, %v3472
      %v4261 = vpack.c.b16 %v3477, %v3475
      %v4262 = vpack.c.b16 %v3478, %v3476
      %v4263 = vpack.c.b16 %v3481, %v3479
      %v4264 = vpack.c.b16 %v3482, %v3480
      %v4265 = vpack.c.b16 %v3485, %v3483
      %v4266 = vpack.c.b16 %v3486, %v3484
      %v4267 = vpack.c.b16 %v3489, %v3487
      %v4268 = vpack.c.b16 %v3490, %v3488
      %v4269 = vpack.c.b16 %v3493, %v3491
      %v4270 = vpack.c.b16 %v3494, %v3492
      %v4271 = vpack.c.b16 %v3497, %v3495
      %v4272 = vpack.c.b16 %v3498, %v3496
      %v4273 = vpack.c.b16 %v3501, %v3499
      %v4274 = vpack.c.b16 %v3502, %v3500
      %v4275 = vpack.c.b16 %v3505, %v3503
      %v4276 = vpack.c.b16 %v3506, %v3504
      %v4277 = vpack.c.b16 %v3509, %v3507
      %v4278 = vpack.c.b16 %v3510, %v3508
      %v4279 = vpack.c.b16 %v3513, %v3511
      %v4280 = vpack.c.b16 %v3514, %v3512
      %v4281 = vpack.c.b16 %v3517, %v3515
      %v4282 = vpack.c.b16 %v3518, %v3516
      %v4283 = vpack.c.b16 %v3521, %v3519
      %v4284 = vpack.c.b16 %v3522, %v3520
      %v4285 = vpack.c.b16 %v3525, %v3523
      %v4286 = vpack.c.b16 %v3526, %v3524
      %v4287 = vpack.c.b16 %v3529, %v3527
      %v4288 = vpack.c.b16 %v3530, %v3528
      %v4289 = vpack.c.b16 %v3533, %v3531
      %v4290 = vpack.c.b16 %v3534, %v3532
      %v4291 = vpack.c.b16 %v3537, %v3535
      %v4292 = vpack.c.b16 %v3538, %v3536
      %v4293 = vpack.c.b16 %v3541, %v3539
      %v4294 = vpack.c.b16 %v3542, %v3540
      %v4295 = vpack.c.b16 %v3545, %v3543
      %v4296 = vpack.c.b16 %v3546, %v3544
      %v4297 = vpack.c.b16 %v3549, %v3547
      %v4298 = vpack.c.b16 %v3550, %v3548
      %v4299 = vpack.c.b16 %v3553, %v3551
      %v4300 = vpack.c.b16 %v3554, %v3552
      %v4301 = vpack.c.b16 %v3557, %v3555
      %v4302 = vpack.c.b16 %v3558, %v3556
      %v4303 = vpack.c.b16 %v3561, %v3559
      %v4304 = vpack.c.b16 %v3562, %v3560
      %v4305 = vpack.c.b16 %v3565, %v3563
      %v4306 = vpack.c.b16 %v3566, %v3564
      %v4307 = vpack.c.b16 %v3569, %v3567
      %v4308 = vpack.c.b16 %v3570, %v3568
      %v4309 = vpack.c.b16 %v3573, %v3571
      %v4310 = vpack.c.b16 %v3574, %v3572
      %v4311 = vpack.c.b16 %v3577, %v3575
      %v4312 = vpack.c.b16 %v3578, %v3576
      %v4313 = vpack.c.b16 %v3581, %v3579
      %v4314 = vpack.c.b16 %v3582, %v3580
      %v4315 = vpack.c.b16 %v3585, %v3583
      %v4316 = vpack.c.b16 %v3586, %v3584
      %v4317 = vpack.c.b16 %v3589, %v3587
      %v4318 = vpack.c.b16 %v3590, %v3588
      %v4319 = vpack.c.b16 %v3593, %v3591
      %v4320 = vpack.c.b16 %v3594, %v3592
      %v4321 = vpack.c.b16 %v3597, %v3595
      %v4322 = vpack.c.b16 %v3598, %v3596
      %v4323 = vpack.c.b16 %v3601, %v3599
      %v4324 = vpack.c.b16 %v3602, %v3600
      %v4325 = vpack.c.b16 %v3605, %v3603
      %v4326 = vpack.c.b16 %v3606, %v3604
      %v4327 = vpack.c.b16 %v3609, %v3607
      %v4328 = vpack.c.b16 %v3610, %v3608
      %v4329 = vpack.c.b16 %v3613, %v3611
      %v4330 = vpack.c.b16 %v3614, %v3612
      %v4331 = vpack.c.b16 %v3617, %v3615
      %v4332 = vpack.c.b16 %v3618, %v3616
      %v4333 = vpack.c.b16 %v3621, %v3619
      %v4334 = vpack.c.b16 %v3622, %v3620
      %v4335 = vpack.c.b16 %v3625, %v3623
      %v4336 = vpack.c.b16 %v3626, %v3624
      %v4337 = vpack.c.b16 %v3629, %v3627
      %v4338 = vpack.c.b16 %v3630, %v3628
      %v4339 = vpack.c.b16 %v3633, %v3631
      %v4340 = vpack.c.b16 %v3634, %v3632
      %v4341 = vpack.c.b16 %v3637, %v3635
      %v4342 = vpack.c.b16 %v3638, %v3636
      %v4343 = vpack.c.b16 %v3641, %v3639
      %v4344 = vpack.c.b16 %v3642, %v3640
      %v4345 = vpack.c.b16 %v3645, %v3643
      %v4346 = vpack.c.b16 %v3646, %v3644
      %v4347 = vpack.c.b16 %v3649, %v3647
      %v4348 = vpack.c.b16 %v3650, %v3648
      %v4349 = vpack.c.b16 %v3653, %v3651
      %v4350 = vpack.c.b16 %v3654, %v3652
      %v4351 = vpack.c.b16 %v3657, %v3655
      %v4352 = vpack.c.b16 %v3658, %v3656
      %v4353 = vpack.c.b16 %v3661, %v3659
      %v4354 = vpack.c.b16 %v3662, %v3660
      %v4355 = vpack.c.b16 %v3665, %v3663
      %v4356 = vpack.c.b16 %v3666, %v3664
      %v4357 = vpack.c.b16 %v3669, %v3667
      %v4358 = vpack.c.b16 %v3670, %v3668
      %v4359 = vpack.c.b16 %v3673, %v3671
      %v4360 = vpack.c.b16 %v3674, %v3672
      %v4361 = vpack.c.b16 %v3677, %v3675
      %v4362 = vpack.c.b16 %v3678, %v3676
      %v4363 = vpack.c.b16 %v3681, %v3679
      %v4364 = vpack.c.b16 %v3682, %v3680
      %v4365 = vpack.c.b16 %v3685, %v3683
      %v4366 = vpack.c.b16 %v3686, %v3684
      %v4367 = vpack.c.b16 %v3689, %v3687
      %v4368 = vpack.c.b16 %v3690, %v3688
      %v4369 = vpack.c.b16 %v3693, %v3691
      %v4370 = vpack.c.b16 %v3694, %v3692
      %v4371 = vpack.c.b16 %v3697, %v3695
      %v4372 = vpack.c.b16 %v3698, %v3696
      %v4373 = vpack.c.b16 %v3701, %v3699
      %v4374 = vpack.c.b16 %v3702, %v3700
      %v4375 = vpack.c.b16 %v3705, %v3703
      %v4376 = vpack.c.b16 %v3706, %v3704
      %v4377 = vpack.c.b16 %v3709, %v3707
      %v4378 = vpack.c.b16 %v3710, %v3708
      %v4379 = vpack.c.b16 %v3713, %v3711
      %v4380 = vpack.c.b16 %v3714, %v3712
      %v4381 = vpack.c.b16 %v3717, %v3715
      %v4382 = vpack.c.b16 %v3718, %v3716
      %v4383 = vpack.c.b16 %v3721, %v3719
      %v4384 = vpack.c.b16 %v3722, %v3720
      %v4385 = vpack.c.b16 %v3725, %v3723
      %v4386 = vpack.c.b16 %v3726, %v3724
      %v4387 = vpack.c.b16 %v3729, %v3727
      %v4388 = vpack.c.b16 %v3730, %v3728
      %v4389 = vpack.c.b16 %v3733, %v3731
      %v4390 = vpack.c.b16 %v3734, %v3732
      %v4391 = vpack.c.b16 %v3737, %v3735
      %v4392 = vpack.c.b16 %v3738, %v3736
      %v4393 = vpack.c.b16 %v3741, %v3739
      %v4394 = vpack.c.b16 %v3742, %v3740
      %v4395 = vpack.c.b16 %v3745, %v3743
      %v4396 = vpack.c.b16 %v3746, %v3744
      %v4397 = vpack.c.b16 %v3749, %v3747
      %v4398 = vpack.c.b16 %v3750, %v3748
      %v4399 = vpack.c.b16 %v3753, %v3751
      %v4400 = vpack.c.b16 %v3754, %v3752
      %v4401 = vpack.c.b16 %v3757, %v3755
      %v4402 = vpack.c.b16 %v3758, %v3756
      %v4403 = vpack.c.b16 %v3761, %v3759
      %v4404 = vpack.c.b16 %v3762, %v3760
      %v4405 = vpack.c.b16 %v3765, %v3763
      %v4406 = vpack.c.b16 %v3766, %v3764
      %v4407 = vpack.c.b16 %v3769, %v3767
      %v4408 = vpack.c.b16 %v3770, %v3768
      %v4409 = vpack.c.b16 %v3773, %v3771
      %v4410 = vpack.c.b16 %v3774, %v3772
      %v4411 = vpack.c.b16 %v3777, %v3775
      %v4412 = vpack.c.b16 %v3778, %v3776
      %v4413 = vpack.c.b16 %v3781, %v3779
      %v4414 = vpack.c.b16 %v3782, %v3780
      %v4415 = vpack.c.b16 %v3785, %v3783
      %v4416 = vpack.c.b16 %v3786, %v3784
      %v4417 = vpack.c.b16 %v3789, %v3787
      %v4418 = vpack.c.b16 %v3790, %v3788
      %v4419 = vpack.c.b16 %v3793, %v3791
      %v4420 = vpack.c.b16 %v3794, %v3792
      %v4421 = vpack.c.b16 %v3797, %v3795
      %v4422 = vpack.c.b16 %v3798, %v3796
      %v4423 = vpack.c.b16 %v3801, %v3799
      %v4424 = vpack.c.b16 %v3802, %v3800
      %v4425 = vpack.c.b16 %v3805, %v3803
      %v4426 = vpack.c.b16 %v3806, %v3804
      %v4427 = vpack.c.b16 %v3809, %v3807
      %v4428 = vpack.c.b16 %v3810, %v3808
      %v4429 = vpack.c.b16 %v3813, %v3811
      %v4430 = vpack.c.b16 %v3814, %v3812
      %v4431 = vpack.c.b16 %v3817, %v3815
      %v4432 = vpack.c.b16 %v3818, %v3816
      %v4433 = vpack.c.b16 %v3821, %v3819
      %v4434 = vpack.c.b16 %v3822, %v3820
      %v4435 = vpack.c.b16 %v3825, %v3823
      %v4436 = vpack.c.b16 %v3826, %v3824
      %v4437 = vpack.c.b16 %v3829, %v3827
      %v4438 = vpack.c.b16 %v3830, %v3828
      %v4439 = vpack.c.b16 %v3833, %v3831
      %v4440 = vpack.c.b16 %v3834, %v3832
      %v4441 = vpack.c.b16 %v3837, %v3835
      %v4442 = vpack.c.b16 %v3838, %v3836
      %v4443 = vpack.c.b16 %v3841, %v3839
      %v4444 = vpack.c.b16 %v3842, %v3840
      %v4445 = vpack.c.b16 %v3845, %v3843
      %v4446 = vpack.c.b16 %v3846, %v3844
      %v4447 = vpack.c.b16 %v3849, %v3847
      %v4448 = vpack.c.b16 %v3850, %v3848
      %v4449 = vpack.c.b16 %v3853, %v3851
      %v4450 = vpack.c.b16 %v3854, %v3852
      %v4451 = vpack.c.b16 %v3857, %v3855
      %v4452 = vpack.c.b16 %v3858, %v3856
      %v4453 = vpack.c.b16 %v3861, %v3859
      %v4454 = vpack.c.b16 %v3862, %v3860
      %v4455 = vpack.c.b16 %v3865, %v3863
      %v4456 = vpack.c.b16 %v3866, %v3864
      %v4457 = vpack.c.b16 %v3869, %v3867
      %v4458 = vpack.c.b16 %v3870, %v3868
      %v4459 = vpack.c.b16 %v3873, %v3871
      %v4460 = vpack.c.b16 %v3874, %v3872
      %v4461 = vpack.c.b16 %v3877, %v3875
      %v4462 = vpack.c.b16 %v3878, %v3876
      %v4463 = vpack.c.b16 %v3881, %v3879
      %v4464 = vpack.c.b16 %v3882, %v3880
      %v4465 = vpack.c.b16 %v3885, %v3883
      %v4466 = vpack.c.b16 %v3886, %v3884
      %v4467 = vpack.c.b16 %v3889, %v3887
      %v4468 = vpack.c.b16 %v3890, %v3888
      %v4469 = vpack.c.b16 %v3893, %v3891
      %v4470 = vpack.c.b16 %v3894, %v3892
      %v4471 = vpack.c.b16 %v3897, %v3895
      %v4472 = vpack.c.b16 %v3898, %v3896
      %v4473 = vpack.c.b16 %v3901, %v3899
      %v4474 = vpack.c.b16 %v3902, %v3900
      %v4475 = vpack.c.b16 %v3905, %v3903
      %v4476 = vpack.c.b16 %v3906, %v3904
      %v4477 = vpack.c.b16 %v3909, %v3907
      %v4478 = vpack.c.b16 %v3910, %v3908
      %v4479 = vpack.c.b16 %v3913, %v3911
      %v4480 = vpack.c.b16 %v3914, %v3912
      %v4481 = vpack.c.b16 %v3917, %v3915
      %v4482 = vpack.c.b16 %v3918, %v3916
      %v4483 = vpack.c.b16 %v3921, %v3919
      %v4484 = vpack.c.b16 %v3922, %v3920
      %v4485 = vpack.c.b16 %v3925, %v3923
      %v4486 = vpack.c.b16 %v3926, %v3924
      %v4487 = vpack.c.b16 %v3929, %v3927
      %v4488 = vpack.c.b16 %v3930, %v3928
      %v4489 = vpack.c.b16 %v3933, %v3931
      %v4490 = vpack.c.b16 %v3934, %v3932
      %v4491 = vpack.c.b16 %v3937, %v3935
      %v4492 = vpack.c.b16 %v3938, %v3936
      %v4493 = vpack.c.b16 %v3941, %v3939
      %v4494 = vpack.c.b16 %v3942, %v3940
      %v4495 = vpack.c.b16 %v3945, %v3943
      %v4496 = vpack.c.b16 %v3946, %v3944
      %v4497 = vpack.c.b16 %v3949, %v3947
      %v4498 = vpack.c.b16 %v3950, %v3948
      %v4499 = vpack.c.b16 %v3953, %v3951
      %v4500 = vpack.c.b16 %v3954, %v3952
      %v4501 = vpack.c.b16 %v3957, %v3955
      %v4502 = vpack.c.b16 %v3958, %v3956
      %v4503 = vpack.c.b16 %v3961, %v3959
      %v4504 = vpack.c.b16 %v3962, %v3960
      %v4505 = vpack.c.b16 %v3965, %v3963
      %v4506 = vpack.c.b16 %v3966, %v3964
      %v4507 = vpack.c.b16 %v3969, %v3967
      %v4508 = vpack.c.b16 %v3970, %v3968
      %v4509 = vpack.c.b16 %v3973, %v3971
      %v4510 = vpack.c.b16 %v3974, %v3972
      %v4511 = vpack.c.b16 %v3977, %v3975
      %v4512 = vpack.c.b16 %v3978, %v3976
      %v4513 = vpack.c.b16 %v3981, %v3979
      %v4514 = vpack.c.b16 %v3982, %v3980
      %v4515 = vpack.c.b16 %v3985, %v3983
      %v4516 = vpack.c.b16 %v3986, %v3984
      %v4517 = vpack.c.b16 %v3989, %v3987
      %v4518 = vpack.c.b16 %v3990, %v3988
      %v4519 = vpack.c.b16 %v3993, %v3991
      %v4520 = vpack.c.b16 %v3994, %v3992
      %v4521 = vpack.c.b16 %v3997, %v3995
      %v4522 = vpack.c.b16 %v3998, %v3996
      %v4523 = vpack.c.b16 %v4001, %v3999
      %v4524 = vpack.c.b16 %v4002, %v4000
      %v4525 = vpack.c.b16 %v4005, %v4003
      %v4526 = vpack.c.b16 %v4006, %v4004
      %v4527 = vpack.c.b16 %v4009, %v4007
      %v4528 = vpack.c.b16 %v4010, %v4008
      %v4529 = vpack.c.b16 %v4013, %v4011
      %v4530 = vpack.c.b16 %v4014, %v4012
      %v4531 = vpack.c.b16 %v4017, %v4015
      %v4532 = vpack.c.b16 %v4018, %v4016
      %v4533 = vpack.c.b16 %v4021, %v4019
      %v4534 = vpack.c.b16 %v4022, %v4020
      %v4535 = vpack.c.b16 %v4025, %v4023
      %v4536 = vpack.c.b16 %v4026, %v4024
      %v4537 = vpack.c.b16 %v4029, %v4027
      %v4538 = vpack.c.b16 %v4030, %v4028
      %v4539 = vpack.c.b16 %v4033, %v4031
      %v4540 = vpack.c.b16 %v4034, %v4032
      %v4541 = vpack.c.b16 %v4037, %v4035
      %v4542 = vpack.c.b16 %v4038, %v4036
      %v4543 = vpack.c.b16 %v4041, %v4039
      %v4544 = vpack.c.b16 %v4042, %v4040
      %v4545 = vpack.c.b16 %v4045, %v4043
      %v4546 = vpack.c.b16 %v4046, %v4044
      %v4547 = vpack.c.b16 %v4049, %v4047
      %v4548 = vpack.c.b16 %v4050, %v4048
      %v4549 = vpack.c.b16 %v4053, %v4051
      %v4550 = vpack.c.b16 %v4054, %v4052
      %v4551 = vpack.c.b16 %v4057, %v4055
      %v4552 = vpack.c.b16 %v4058, %v4056
      %v4553 = vpack.c.b16 %v4061, %v4059
      %v4554 = vpack.c.b16 %v4062, %v4060
      %v4555 = vpack.c.b16 %v4065, %v4063
      %v4556 = vpack.c.b16 %v4066, %v4064
      %v4557 = vpack.c.b16 %v4069, %v4067
      %v4558 = vpack.c.b16 %v4070, %v4068
      %v4559 = vpack.c.b16 %v4073, %v4071
      %v4560 = vpack.c.b16 %v4074, %v4072
      %v4561 = vpack.c.b16 %v4077, %v4075
      %v4562 = vpack.c.b16 %v4078, %v4076
      %v4563 = vpack.c.b16 %v4081, %v4079
      %v4564 = vpack.c.b16 %v4082, %v4080
      %v4565 = vpack.c.b16 %v4085, %v4083
      %v4566 = vpack.c.b16 %v4086, %v4084
      %v4567 = vpack.c.b16 %v4089, %v4087
      %v4568 = vpack.c.b16 %v4090, %v4088
      %v4569 = vpack.c.b16 %v4093, %v4091
      %v4570 = vpack.c.b16 %v4094, %v4092
      %v4571 = vpack.c.b16 %v4097, %v4095
      %v4572 = vpack.c.b16 %v4098, %v4096
      %v4573 = vpack.c.b16 %v4101, %v4099
      %v4574 = vpack.c.b16 %v4102, %v4100
      %v4575 = vpack.c.b16 %v4105, %v4103
      %v4576 = vpack.c.b16 %v4106, %v4104
      %v4577 = vpack.c.b16 %v4109, %v4107
      %v4578 = vpack.c.b16 %v4110, %v4108
      %v4579 = vpack.c.b16 %v4113, %v4111
      %v4580 = vpack.c.b16 %v4114, %v4112
      %v4581 = vpack.c.b16 %v4117, %v4115
      %v4582 = vpack.c.b16 %v4118, %v4116
      %v4583 = vpack.c.b16 %v4121, %v4119
      %v4584 = vpack.c.b16 %v4122, %v4120
      %v4585 = vpack.c.b16 %v4125, %v4123
      %v4586 = vpack.c.b16 %v4126, %v4124
      %v4587 = vpack.c.b16 %v4129, %v4127
      %v4588 = vpack.c.b16 %v4130, %v4128
      %v4589 = vpack.c.b16 %v4133, %v4131
      %v4590 = vpack.c.b16 %v4134, %v4132
      %v4591 = vpack.c.b16 %v4137, %v4135
      %v4592 = vpack.c.b16 %v4138, %v4136
      %v4593 = vpack.c.b16 %v4141, %v4139
      %v4594 = vpack.c.b16 %v4142, %v4140
      %v4595 = vpack.c.b16 %v4145, %v4143
      %v4596 = vpack.c.b16 %v4146, %v4144
      %v4597 = vpack.c.b16 %v4149, %v4147
      %v4598 = vpack.c.b16 %v4150, %v4148
      %5047 = vmatpush.bf16.msra.mxu0 %v4165
      %5048 = vmatpush.bf16.msra.mxu0 %v4163
      %5049 = vmatpush.bf16.msra.mxu0 %v4161
      %5050 = vmatpush.bf16.msra.mxu0 %v4159
      %5051 = vmatpush.bf16.msra.mxu0 %v4157
      %5052 = vmatpush.bf16.msra.mxu0 %v4155
      %5053 = vmatpush.bf16.msra.mxu0 %v4153
      %5054 = vmatpush.bf16.msra.mxu0 %v4151
      %5055 = vmatmul.bf16.gmra.mxu0 %v2329
      %v5056 = vpop.f32.mrf.mxu0
      %v5057 = vadd.f32 %v2806, %v5056
      %v5058 = vpop.f32.mrf.mxu0
      %5059 = vdwg.mxu0
      %5060 = vmatpush.bf16.msra.mxu0 %v4181
      %5061 = vmatpush.bf16.msra.mxu0 %v4179
      %5062 = vmatpush.bf16.msra.mxu0 %v4177
      %5063 = vmatpush.bf16.msra.mxu0 %v4175
      %5064 = vmatpush.bf16.msra.mxu0 %v4173
      %5065 = vmatpush.bf16.msra.mxu0 %v4171
      %5066 = vmatpush.bf16.msra.mxu0 %v4169
      %5067 = vmatpush.bf16.msra.mxu0 %v4167
      %5068 = vmatmul.bf16.gmra.mxu0 %v2330
      %v5069 = vpop.f32.mrf.mxu0
      %v5070 = vadd.f32 %v5057, %v5069
      %v5071 = vpop.f32.mrf.mxu0
      %5072 = vdwg.mxu0
      %5073 = vmatpush.bf16.msra.mxu0 %v4197
      %5074 = vmatpush.bf16.msra.mxu0 %v4195
      %5075 = vmatpush.bf16.msra.mxu0 %v4193
      %5076 = vmatpush.bf16.msra.mxu0 %v4191
      %5077 = vmatpush.bf16.msra.mxu0 %v4189
      %5078 = vmatpush.bf16.msra.mxu0 %v4187
      %5079 = vmatpush.bf16.msra.mxu0 %v4185
      %5080 = vmatpush.bf16.msra.mxu0 %v4183
      %5081 = vmatmul.bf16.gmra.mxu0 %v2331
      %v5082 = vpop.f32.mrf.mxu0
      %v5083 = vadd.f32 %v5070, %v5082
      %v5084 = vpop.f32.mrf.mxu0
      %5085 = vdwg.mxu0
      %5086 = vmatpush.bf16.msra.mxu0 %v4213
      %5087 = vmatpush.bf16.msra.mxu0 %v4211
      %5088 = vmatpush.bf16.msra.mxu0 %v4209
      %5089 = vmatpush.bf16.msra.mxu0 %v4207
      %5090 = vmatpush.bf16.msra.mxu0 %v4205
      %5091 = vmatpush.bf16.msra.mxu0 %v4203
      %5092 = vmatpush.bf16.msra.mxu0 %v4201
      %5093 = vmatpush.bf16.msra.mxu0 %v4199
      %5094 = vmatmul.bf16.gmra.mxu0 %v2332
      %v5095 = vpop.f32.mrf.mxu0
      %v5096 = vadd.f32 %v5083, %v5095
      %v5097 = vpop.f32.mrf.mxu0
      %5098 = vdwg.mxu0
      %5099 = vmatpush.bf16.msra.mxu0 %v4229
      %5100 = vmatpush.bf16.msra.mxu0 %v4227
      %5101 = vmatpush.bf16.msra.mxu0 %v4225
      %5102 = vmatpush.bf16.msra.mxu0 %v4223
      %5103 = vmatpush.bf16.msra.mxu0 %v4221
      %5104 = vmatpush.bf16.msra.mxu0 %v4219
      %5105 = vmatpush.bf16.msra.mxu0 %v4217
      %5106 = vmatpush.bf16.msra.mxu0 %v4215
      %5107 = vmatmul.bf16.gmra.mxu0 %v2333
      %v5108 = vpop.f32.mrf.mxu0
      %v5109 = vadd.f32 %v5096, %v5108
      %v5110 = vpop.f32.mrf.mxu0
      %5111 = vdwg.mxu0
      %5112 = vmatpush.bf16.msra.mxu0 %v4245
      %5113 = vmatpush.bf16.msra.mxu0 %v4243
      %5114 = vmatpush.bf16.msra.mxu0 %v4241
      %5115 = vmatpush.bf16.msra.mxu0 %v4239
      %5116 = vmatpush.bf16.msra.mxu0 %v4237
      %5117 = vmatpush.bf16.msra.mxu0 %v4235
      %5118 = vmatpush.bf16.msra.mxu0 %v4233
      %5119 = vmatpush.bf16.msra.mxu0 %v4231
      %5120 = vmatmul.bf16.gmra.mxu0 %v2334
      %v5121 = vpop.f32.mrf.mxu0
      %v5122 = vadd.f32 %v5109, %v5121
      %v5123 = vpop.f32.mrf.mxu0
      %5124 = vdwg.mxu0
      %5125 = vmatpush.bf16.msra.mxu0 %v4261
      %5126 = vmatpush.bf16.msra.mxu0 %v4259
      %5127 = vmatpush.bf16.msra.mxu0 %v4257
      %5128 = vmatpush.bf16.msra.mxu0 %v4255
      %5129 = vmatpush.bf16.msra.mxu0 %v4253
      %5130 = vmatpush.bf16.msra.mxu0 %v4251
      %5131 = vmatpush.bf16.msra.mxu0 %v4249
      %5132 = vmatpush.bf16.msra.mxu0 %v4247
      %5133 = vmatmul.bf16.gmra.mxu0 %v2335
      %v5134 = vpop.f32.mrf.mxu0
      %v5135 = vadd.f32 %v5122, %v5134
      %v5136 = vpop.f32.mrf.mxu0
      %5137 = vdwg.mxu0
      %5138 = vmatpush.bf16.msra.mxu0 %v4277
      %5139 = vmatpush.bf16.msra.mxu0 %v4275
      %5140 = vmatpush.bf16.msra.mxu0 %v4273
      %5141 = vmatpush.bf16.msra.mxu0 %v4271
      %5142 = vmatpush.bf16.msra.mxu0 %v4269
      %5143 = vmatpush.bf16.msra.mxu0 %v4267
      %5144 = vmatpush.bf16.msra.mxu0 %v4265
      %5145 = vmatpush.bf16.msra.mxu0 %v4263
      %5146 = vmatmul.bf16.gmra.mxu0 %v2336
      %v5147 = vpop.f32.mrf.mxu0
      %v5148 = vadd.f32 %v5135, %v5147
      %v5149 = vpop.f32.mrf.mxu0
      %5150 = vdwg.mxu0
      %5151 = vmatpush.bf16.msra.mxu0 %v4293
      %5152 = vmatpush.bf16.msra.mxu0 %v4291
      %5153 = vmatpush.bf16.msra.mxu0 %v4289
      %5154 = vmatpush.bf16.msra.mxu0 %v4287
      %5155 = vmatpush.bf16.msra.mxu0 %v4285
      %5156 = vmatpush.bf16.msra.mxu0 %v4283
      %5157 = vmatpush.bf16.msra.mxu0 %v4281
      %5158 = vmatpush.bf16.msra.mxu0 %v4279
      %5159 = vmatmul.bf16.gmra.mxu0 %v2337
      %v5160 = vpop.f32.mrf.mxu0
      %v5161 = vadd.f32 %v5148, %v5160
      %v5162 = vpop.f32.mrf.mxu0
      %5163 = vdwg.mxu0
      %5164 = vmatpush.bf16.msra.mxu0 %v4309
      %5165 = vmatpush.bf16.msra.mxu0 %v4307
      %5166 = vmatpush.bf16.msra.mxu0 %v4305
      %5167 = vmatpush.bf16.msra.mxu0 %v4303
      %5168 = vmatpush.bf16.msra.mxu0 %v4301
      %5169 = vmatpush.bf16.msra.mxu0 %v4299
      %5170 = vmatpush.bf16.msra.mxu0 %v4297
      %5171 = vmatpush.bf16.msra.mxu0 %v4295
      %5172 = vmatmul.bf16.gmra.mxu0 %v2338
      %v5173 = vpop.f32.mrf.mxu0
      %v5174 = vadd.f32 %v5161, %v5173
      %v5175 = vpop.f32.mrf.mxu0
      %5176 = vdwg.mxu0
      %5177 = vmatpush.bf16.msra.mxu0 %v4325
      %5178 = vmatpush.bf16.msra.mxu0 %v4323
      %5179 = vmatpush.bf16.msra.mxu0 %v4321
      %5180 = vmatpush.bf16.msra.mxu0 %v4319
      %5181 = vmatpush.bf16.msra.mxu0 %v4317
      %5182 = vmatpush.bf16.msra.mxu0 %v4315
      %5183 = vmatpush.bf16.msra.mxu0 %v4313
      %5184 = vmatpush.bf16.msra.mxu0 %v4311
      %5185 = vmatmul.bf16.gmra.mxu0 %v2339
      %v5186 = vpop.f32.mrf.mxu0
      %v5187 = vadd.f32 %v5174, %v5186
      %v5188 = vpop.f32.mrf.mxu0
      %5189 = vdwg.mxu0
      %5190 = vmatpush.bf16.msra.mxu0 %v4341
      %5191 = vmatpush.bf16.msra.mxu0 %v4339
      %5192 = vmatpush.bf16.msra.mxu0 %v4337
      %5193 = vmatpush.bf16.msra.mxu0 %v4335
      %5194 = vmatpush.bf16.msra.mxu0 %v4333
      %5195 = vmatpush.bf16.msra.mxu0 %v4331
      %5196 = vmatpush.bf16.msra.mxu0 %v4329
      %5197 = vmatpush.bf16.msra.mxu0 %v4327
      %5198 = vmatmul.bf16.gmra.mxu0 %v2340
      %v5199 = vpop.f32.mrf.mxu0
      %v5200 = vadd.f32 %v5187, %v5199
      %v5201 = vpop.f32.mrf.mxu0
      %5202 = vdwg.mxu0
      %5203 = vmatpush.bf16.msra.mxu0 %v4357
      %5204 = vmatpush.bf16.msra.mxu0 %v4355
      %5205 = vmatpush.bf16.msra.mxu0 %v4353
      %5206 = vmatpush.bf16.msra.mxu0 %v4351
      %5207 = vmatpush.bf16.msra.mxu0 %v4349
      %5208 = vmatpush.bf16.msra.mxu0 %v4347
      %5209 = vmatpush.bf16.msra.mxu0 %v4345
      %5210 = vmatpush.bf16.msra.mxu0 %v4343
      %5211 = vmatmul.bf16.gmra.mxu0 %v2341
      %v5212 = vpop.f32.mrf.mxu0
      %v5213 = vadd.f32 %v5200, %v5212
      %v5214 = vpop.f32.mrf.mxu0
      %5215 = vdwg.mxu0
      %5216 = vmatpush.bf16.msra.mxu0 %v4373
      %5217 = vmatpush.bf16.msra.mxu0 %v4371
      %5218 = vmatpush.bf16.msra.mxu0 %v4369
      %5219 = vmatpush.bf16.msra.mxu0 %v4367
      %5220 = vmatpush.bf16.msra.mxu0 %v4365
      %5221 = vmatpush.bf16.msra.mxu0 %v4363
      %5222 = vmatpush.bf16.msra.mxu0 %v4361
      %5223 = vmatpush.bf16.msra.mxu0 %v4359
      %5224 = vmatmul.bf16.gmra.mxu0 %v2342
      %v5225 = vpop.f32.mrf.mxu0
      %v5226 = vadd.f32 %v5213, %v5225
      %v5227 = vpop.f32.mrf.mxu0
      %5228 = vdwg.mxu0
      %5229 = vmatpush.bf16.msra.mxu0 %v4389
      %5230 = vmatpush.bf16.msra.mxu0 %v4387
      %5231 = vmatpush.bf16.msra.mxu0 %v4385
      %5232 = vmatpush.bf16.msra.mxu0 %v4383
      %5233 = vmatpush.bf16.msra.mxu0 %v4381
      %5234 = vmatpush.bf16.msra.mxu0 %v4379
      %5235 = vmatpush.bf16.msra.mxu0 %v4377
      %5236 = vmatpush.bf16.msra.mxu0 %v4375
      %5237 = vmatmul.bf16.gmra.mxu0 %v2343
      %v5238 = vpop.f32.mrf.mxu0
      %v5239 = vadd.f32 %v5226, %v5238
      %v5240 = vpop.f32.mrf.mxu0
      %5241 = vdwg.mxu0
      %5242 = vmatpush.bf16.msra.mxu0 %v4405
      %5243 = vmatpush.bf16.msra.mxu0 %v4403
      %5244 = vmatpush.bf16.msra.mxu0 %v4401
      %5245 = vmatpush.bf16.msra.mxu0 %v4399
      %5246 = vmatpush.bf16.msra.mxu0 %v4397
      %5247 = vmatpush.bf16.msra.mxu0 %v4395
      %5248 = vmatpush.bf16.msra.mxu0 %v4393
      %5249 = vmatpush.bf16.msra.mxu0 %v4391
      %5250 = vmatmul.bf16.gmra.mxu0 %v2344
      %v5251 = vpop.f32.mrf.mxu0
      %v5252 = vadd.f32 %v5239, %v5251
      %v5253 = vpop.f32.mrf.mxu0
      %5254 = vdwg.mxu0
      %5255 = vmatpush.bf16.msra.mxu0 %v4421
      %5256 = vmatpush.bf16.msra.mxu0 %v4419
      %5257 = vmatpush.bf16.msra.mxu0 %v4417
      %5258 = vmatpush.bf16.msra.mxu0 %v4415
      %5259 = vmatpush.bf16.msra.mxu0 %v4413
      %5260 = vmatpush.bf16.msra.mxu0 %v4411
      %5261 = vmatpush.bf16.msra.mxu0 %v4409
      %5262 = vmatpush.bf16.msra.mxu0 %v4407
      %5263 = vmatmul.bf16.gmra.mxu0 %v2345
      %v5264 = vpop.f32.mrf.mxu0
      %v5265 = vadd.f32 %v5252, %v5264
      %v5266 = vpop.f32.mrf.mxu0
      %5267 = vdwg.mxu0
      %5268 = vmatpush.bf16.msra.mxu0 %v4437
      %5269 = vmatpush.bf16.msra.mxu0 %v4435
      %5270 = vmatpush.bf16.msra.mxu0 %v4433
      %5271 = vmatpush.bf16.msra.mxu0 %v4431
      %5272 = vmatpush.bf16.msra.mxu0 %v4429
      %5273 = vmatpush.bf16.msra.mxu0 %v4427
      %5274 = vmatpush.bf16.msra.mxu0 %v4425
      %5275 = vmatpush.bf16.msra.mxu0 %v4423
      %5276 = vmatmul.bf16.gmra.mxu0 %v2346
      %v5277 = vpop.f32.mrf.mxu0
      %v5278 = vadd.f32 %v5265, %v5277
      %v5279 = vpop.f32.mrf.mxu0
      %5280 = vdwg.mxu0
      %5281 = vmatpush.bf16.msra.mxu0 %v4453
      %5282 = vmatpush.bf16.msra.mxu0 %v4451
      %5283 = vmatpush.bf16.msra.mxu0 %v4449
      %5284 = vmatpush.bf16.msra.mxu0 %v4447
      %5285 = vmatpush.bf16.msra.mxu0 %v4445
      %5286 = vmatpush.bf16.msra.mxu0 %v4443
      %5287 = vmatpush.bf16.msra.mxu0 %v4441
      %5288 = vmatpush.bf16.msra.mxu0 %v4439
      %5289 = vmatmul.bf16.gmra.mxu0 %v2347
      %v5290 = vpop.f32.mrf.mxu0
      %v5291 = vadd.f32 %v5278, %v5290
      %v5292 = vpop.f32.mrf.mxu0
      %5293 = vdwg.mxu0
      %5294 = vmatpush.bf16.msra.mxu0 %v4469
      %5295 = vmatpush.bf16.msra.mxu0 %v4467
      %5296 = vmatpush.bf16.msra.mxu0 %v4465
      %5297 = vmatpush.bf16.msra.mxu0 %v4463
      %5298 = vmatpush.bf16.msra.mxu0 %v4461
      %5299 = vmatpush.bf16.msra.mxu0 %v4459
      %5300 = vmatpush.bf16.msra.mxu0 %v4457
      %5301 = vmatpush.bf16.msra.mxu0 %v4455
      %5302 = vmatmul.bf16.gmra.mxu0 %v2348
      %v5303 = vpop.f32.mrf.mxu0
      %v5304 = vadd.f32 %v5291, %v5303
      %v5305 = vpop.f32.mrf.mxu0
      %5306 = vdwg.mxu0
      %5307 = vmatpush.bf16.msra.mxu0 %v4485
      %5308 = vmatpush.bf16.msra.mxu0 %v4483
      %5309 = vmatpush.bf16.msra.mxu0 %v4481
      %5310 = vmatpush.bf16.msra.mxu0 %v4479
      %5311 = vmatpush.bf16.msra.mxu0 %v4477
      %5312 = vmatpush.bf16.msra.mxu0 %v4475
      %5313 = vmatpush.bf16.msra.mxu0 %v4473
      %5314 = vmatpush.bf16.msra.mxu0 %v4471
      %5315 = vmatmul.bf16.gmra.mxu0 %v2349
      %v5316 = vpop.f32.mrf.mxu0
      %v5317 = vadd.f32 %v5304, %v5316
      %v5318 = vpop.f32.mrf.mxu0
      %5319 = vdwg.mxu0
      %5320 = vmatpush.bf16.msra.mxu0 %v4501
      %5321 = vmatpush.bf16.msra.mxu0 %v4499
      %5322 = vmatpush.bf16.msra.mxu0 %v4497
      %5323 = vmatpush.bf16.msra.mxu0 %v4495
      %5324 = vmatpush.bf16.msra.mxu0 %v4493
      %5325 = vmatpush.bf16.msra.mxu0 %v4491
      %5326 = vmatpush.bf16.msra.mxu0 %v4489
      %5327 = vmatpush.bf16.msra.mxu0 %v4487
      %5328 = vmatmul.bf16.gmra.mxu0 %v2350
      %v5329 = vpop.f32.mrf.mxu0
      %v5330 = vadd.f32 %v5317, %v5329
      %v5331 = vpop.f32.mrf.mxu0
      %5332 = vdwg.mxu0
      %5333 = vmatpush.bf16.msra.mxu0 %v4517
      %5334 = vmatpush.bf16.msra.mxu0 %v4515
      %5335 = vmatpush.bf16.msra.mxu0 %v4513
      %5336 = vmatpush.bf16.msra.mxu0 %v4511
      %5337 = vmatpush.bf16.msra.mxu0 %v4509
      %5338 = vmatpush.bf16.msra.mxu0 %v4507
      %5339 = vmatpush.bf16.msra.mxu0 %v4505
      %5340 = vmatpush.bf16.msra.mxu0 %v4503
      %5341 = vmatmul.bf16.gmra.mxu0 %v2351
      %v5342 = vpop.f32.mrf.mxu0
      %v5343 = vadd.f32 %v5330, %v5342
      %v5344 = vpop.f32.mrf.mxu0
      %5345 = vdwg.mxu0
      %5346 = vmatpush.bf16.msra.mxu0 %v4533
      %5347 = vmatpush.bf16.msra.mxu0 %v4531
      %5348 = vmatpush.bf16.msra.mxu0 %v4529
      %5349 = vmatpush.bf16.msra.mxu0 %v4527
      %5350 = vmatpush.bf16.msra.mxu0 %v4525
      %5351 = vmatpush.bf16.msra.mxu0 %v4523
      %5352 = vmatpush.bf16.msra.mxu0 %v4521
      %5353 = vmatpush.bf16.msra.mxu0 %v4519
      %5354 = vmatmul.bf16.gmra.mxu0 %v2352
      %v5355 = vpop.f32.mrf.mxu0
      %v5356 = vadd.f32 %v5343, %v5355
      %v5357 = vpop.f32.mrf.mxu0
      %5358 = vdwg.mxu0
      %5359 = vmatpush.bf16.msra.mxu0 %v4549
      %5360 = vmatpush.bf16.msra.mxu0 %v4547
      %5361 = vmatpush.bf16.msra.mxu0 %v4545
      %5362 = vmatpush.bf16.msra.mxu0 %v4543
      %5363 = vmatpush.bf16.msra.mxu0 %v4541
      %5364 = vmatpush.bf16.msra.mxu0 %v4539
      %5365 = vmatpush.bf16.msra.mxu0 %v4537
      %5366 = vmatpush.bf16.msra.mxu0 %v4535
      %5367 = vmatmul.bf16.gmra.mxu0 %v2353
      %v5368 = vpop.f32.mrf.mxu0
      %v5369 = vadd.f32 %v5356, %v5368
      %v5370 = vpop.f32.mrf.mxu0
      %5371 = vdwg.mxu0
      %5372 = vmatpush.bf16.msra.mxu0 %v4565
      %5373 = vmatpush.bf16.msra.mxu0 %v4563
      %5374 = vmatpush.bf16.msra.mxu0 %v4561
      %5375 = vmatpush.bf16.msra.mxu0 %v4559
      %5376 = vmatpush.bf16.msra.mxu0 %v4557
      %5377 = vmatpush.bf16.msra.mxu0 %v4555
      %5378 = vmatpush.bf16.msra.mxu0 %v4553
      %5379 = vmatpush.bf16.msra.mxu0 %v4551
      %5380 = vmatmul.bf16.gmra.mxu0 %v2354
      %v5381 = vpop.f32.mrf.mxu0
      %v5382 = vadd.f32 %v5369, %v5381
      %v5383 = vpop.f32.mrf.mxu0
      %5384 = vdwg.mxu0
      %5385 = vmatpush.bf16.msra.mxu0 %v4581
      %5386 = vmatpush.bf16.msra.mxu0 %v4579
      %5387 = vmatpush.bf16.msra.mxu0 %v4577
      %5388 = vmatpush.bf16.msra.mxu0 %v4575
      %5389 = vmatpush.bf16.msra.mxu0 %v4573
      %5390 = vmatpush.bf16.msra.mxu0 %v4571
      %5391 = vmatpush.bf16.msra.mxu0 %v4569
      %5392 = vmatpush.bf16.msra.mxu0 %v4567
      %5393 = vmatmul.bf16.gmra.mxu0 %v2355
      %v5394 = vpop.f32.mrf.mxu0
      %v5395 = vadd.f32 %v5382, %v5394
      %v5396 = vpop.f32.mrf.mxu0
      %5397 = vdwg.mxu0
      %5398 = vmatpush.bf16.msra.mxu0 %v4597
      %5399 = vmatpush.bf16.msra.mxu0 %v4595
      %5400 = vmatpush.bf16.msra.mxu0 %v4593
      %5401 = vmatpush.bf16.msra.mxu0 %v4591
      %5402 = vmatpush.bf16.msra.mxu0 %v4589
      %5403 = vmatpush.bf16.msra.mxu0 %v4587
      %5404 = vmatpush.bf16.msra.mxu0 %v4585
      %5405 = vmatpush.bf16.msra.mxu0 %v4583
      %5406 = vmatmul.bf16.gmra.mxu0 %v2356
      %v5407 = vpop.f32.mrf.mxu0
      %v5408 = vadd.f32 %v5395, %v5407
      %v5409 = vpop.f32.mrf.mxu0
      %5410 = vdwg.mxu0
      %5411 = vmatpush.bf16.msra.mxu0 %v4166
      %5412 = vmatpush.bf16.msra.mxu0 %v4164
      %5413 = vmatpush.bf16.msra.mxu0 %v4162
      %5414 = vmatpush.bf16.msra.mxu0 %v4160
      %5415 = vmatpush.bf16.msra.mxu0 %v4158
      %5416 = vmatpush.bf16.msra.mxu0 %v4156
      %5417 = vmatpush.bf16.msra.mxu0 %v4154
      %5418 = vmatpush.bf16.msra.mxu0 %v4152
      %5419 = vmatmul.bf16.gmra.mxu0 %v2329
      %v5420 = vpop.f32.mrf.mxu0
      %v5421 = vadd.f32 %v2806, %v5420
      %v5422 = vpop.f32.mrf.mxu0
      %5423 = vdwg.mxu0
      %5424 = vmatpush.bf16.msra.mxu0 %v4182
      %5425 = vmatpush.bf16.msra.mxu0 %v4180
      %5426 = vmatpush.bf16.msra.mxu0 %v4178
      %5427 = vmatpush.bf16.msra.mxu0 %v4176
      %5428 = vmatpush.bf16.msra.mxu0 %v4174
      %5429 = vmatpush.bf16.msra.mxu0 %v4172
      %5430 = vmatpush.bf16.msra.mxu0 %v4170
      %5431 = vmatpush.bf16.msra.mxu0 %v4168
      %5432 = vmatmul.bf16.gmra.mxu0 %v2330
      %v5433 = vpop.f32.mrf.mxu0
      %v5434 = vadd.f32 %v5421, %v5433
      %v5435 = vpop.f32.mrf.mxu0
      %5436 = vdwg.mxu0
      %5437 = vmatpush.bf16.msra.mxu0 %v4198
      %5438 = vmatpush.bf16.msra.mxu0 %v4196
      %5439 = vmatpush.bf16.msra.mxu0 %v4194
      %5440 = vmatpush.bf16.msra.mxu0 %v4192
      %5441 = vmatpush.bf16.msra.mxu0 %v4190
      %5442 = vmatpush.bf16.msra.mxu0 %v4188
      %5443 = vmatpush.bf16.msra.mxu0 %v4186
      %5444 = vmatpush.bf16.msra.mxu0 %v4184
      %5445 = vmatmul.bf16.gmra.mxu0 %v2331
      %v5446 = vpop.f32.mrf.mxu0
      %v5447 = vadd.f32 %v5434, %v5446
      %v5448 = vpop.f32.mrf.mxu0
      %5449 = vdwg.mxu0
      %5450 = vmatpush.bf16.msra.mxu0 %v4214
      %5451 = vmatpush.bf16.msra.mxu0 %v4212
      %5452 = vmatpush.bf16.msra.mxu0 %v4210
      %5453 = vmatpush.bf16.msra.mxu0 %v4208
      %5454 = vmatpush.bf16.msra.mxu0 %v4206
      %5455 = vmatpush.bf16.msra.mxu0 %v4204
      %5456 = vmatpush.bf16.msra.mxu0 %v4202
      %5457 = vmatpush.bf16.msra.mxu0 %v4200
      %5458 = vmatmul.bf16.gmra.mxu0 %v2332
      %v5459 = vpop.f32.mrf.mxu0
      %v5460 = vadd.f32 %v5447, %v5459
      %v5461 = vpop.f32.mrf.mxu0
      %5462 = vdwg.mxu0
      %5463 = vmatpush.bf16.msra.mxu0 %v4230
      %5464 = vmatpush.bf16.msra.mxu0 %v4228
      %5465 = vmatpush.bf16.msra.mxu0 %v4226
      %5466 = vmatpush.bf16.msra.mxu0 %v4224
      %5467 = vmatpush.bf16.msra.mxu0 %v4222
      %5468 = vmatpush.bf16.msra.mxu0 %v4220
      %5469 = vmatpush.bf16.msra.mxu0 %v4218
      %5470 = vmatpush.bf16.msra.mxu0 %v4216
      %5471 = vmatmul.bf16.gmra.mxu0 %v2333
      %v5472 = vpop.f32.mrf.mxu0
      %v5473 = vadd.f32 %v5460, %v5472
      %v5474 = vpop.f32.mrf.mxu0
      %5475 = vdwg.mxu0
      %5476 = vmatpush.bf16.msra.mxu0 %v4246
      %5477 = vmatpush.bf16.msra.mxu0 %v4244
      %5478 = vmatpush.bf16.msra.mxu0 %v4242
      %5479 = vmatpush.bf16.msra.mxu0 %v4240
      %5480 = vmatpush.bf16.msra.mxu0 %v4238
      %5481 = vmatpush.bf16.msra.mxu0 %v4236
      %5482 = vmatpush.bf16.msra.mxu0 %v4234
      %5483 = vmatpush.bf16.msra.mxu0 %v4232
      %5484 = vmatmul.bf16.gmra.mxu0 %v2334
      %v5485 = vpop.f32.mrf.mxu0
      %v5486 = vadd.f32 %v5473, %v5485
      %v5487 = vpop.f32.mrf.mxu0
      %5488 = vdwg.mxu0
      %5489 = vmatpush.bf16.msra.mxu0 %v4262
      %5490 = vmatpush.bf16.msra.mxu0 %v4260
      %5491 = vmatpush.bf16.msra.mxu0 %v4258
      %5492 = vmatpush.bf16.msra.mxu0 %v4256
      %5493 = vmatpush.bf16.msra.mxu0 %v4254
      %5494 = vmatpush.bf16.msra.mxu0 %v4252
      %5495 = vmatpush.bf16.msra.mxu0 %v4250
      %5496 = vmatpush.bf16.msra.mxu0 %v4248
      %5497 = vmatmul.bf16.gmra.mxu0 %v2335
      %v5498 = vpop.f32.mrf.mxu0
      %v5499 = vadd.f32 %v5486, %v5498
      %v5500 = vpop.f32.mrf.mxu0
      %5501 = vdwg.mxu0
      %5502 = vmatpush.bf16.msra.mxu0 %v4278
      %5503 = vmatpush.bf16.msra.mxu0 %v4276
      %5504 = vmatpush.bf16.msra.mxu0 %v4274
      %5505 = vmatpush.bf16.msra.mxu0 %v4272
      %5506 = vmatpush.bf16.msra.mxu0 %v4270
      %5507 = vmatpush.bf16.msra.mxu0 %v4268
      %5508 = vmatpush.bf16.msra.mxu0 %v4266
      %5509 = vmatpush.bf16.msra.mxu0 %v4264
      %5510 = vmatmul.bf16.gmra.mxu0 %v2336
      %v5511 = vpop.f32.mrf.mxu0
      %v5512 = vadd.f32 %v5499, %v5511
      %v5513 = vpop.f32.mrf.mxu0
      %5514 = vdwg.mxu0
      %5515 = vmatpush.bf16.msra.mxu0 %v4294
      %5516 = vmatpush.bf16.msra.mxu0 %v4292
      %5517 = vmatpush.bf16.msra.mxu0 %v4290
      %5518 = vmatpush.bf16.msra.mxu0 %v4288
      %5519 = vmatpush.bf16.msra.mxu0 %v4286
      %5520 = vmatpush.bf16.msra.mxu0 %v4284
      %5521 = vmatpush.bf16.msra.mxu0 %v4282
      %5522 = vmatpush.bf16.msra.mxu0 %v4280
      %5523 = vmatmul.bf16.gmra.mxu0 %v2337
      %v5524 = vpop.f32.mrf.mxu0
      %v5525 = vadd.f32 %v5512, %v5524
      %v5526 = vpop.f32.mrf.mxu0
      %5527 = vdwg.mxu0
      %5528 = vmatpush.bf16.msra.mxu0 %v4310
      %5529 = vmatpush.bf16.msra.mxu0 %v4308
      %5530 = vmatpush.bf16.msra.mxu0 %v4306
      %5531 = vmatpush.bf16.msra.mxu0 %v4304
      %5532 = vmatpush.bf16.msra.mxu0 %v4302
      %5533 = vmatpush.bf16.msra.mxu0 %v4300
      %5534 = vmatpush.bf16.msra.mxu0 %v4298
      %5535 = vmatpush.bf16.msra.mxu0 %v4296
      %5536 = vmatmul.bf16.gmra.mxu0 %v2338
      %v5537 = vpop.f32.mrf.mxu0
      %v5538 = vadd.f32 %v5525, %v5537
      %v5539 = vpop.f32.mrf.mxu0
      %5540 = vdwg.mxu0
      %5541 = vmatpush.bf16.msra.mxu0 %v4326
      %5542 = vmatpush.bf16.msra.mxu0 %v4324
      %5543 = vmatpush.bf16.msra.mxu0 %v4322
      %5544 = vmatpush.bf16.msra.mxu0 %v4320
      %5545 = vmatpush.bf16.msra.mxu0 %v4318
      %5546 = vmatpush.bf16.msra.mxu0 %v4316
      %5547 = vmatpush.bf16.msra.mxu0 %v4314
      %5548 = vmatpush.bf16.msra.mxu0 %v4312
      %5549 = vmatmul.bf16.gmra.mxu0 %v2339
      %v5550 = vpop.f32.mrf.mxu0
      %v5551 = vadd.f32 %v5538, %v5550
      %v5552 = vpop.f32.mrf.mxu0
      %5553 = vdwg.mxu0
      %5554 = vmatpush.bf16.msra.mxu0 %v4342
      %5555 = vmatpush.bf16.msra.mxu0 %v4340
      %5556 = vmatpush.bf16.msra.mxu0 %v4338
      %5557 = vmatpush.bf16.msra.mxu0 %v4336
      %5558 = vmatpush.bf16.msra.mxu0 %v4334
      %5559 = vmatpush.bf16.msra.mxu0 %v4332
      %5560 = vmatpush.bf16.msra.mxu0 %v4330
      %5561 = vmatpush.bf16.msra.mxu0 %v4328
      %5562 = vmatmul.bf16.gmra.mxu0 %v2340
      %v5563 = vpop.f32.mrf.mxu0
      %v5564 = vadd.f32 %v5551, %v5563
      %v5565 = vpop.f32.mrf.mxu0
      %5566 = vdwg.mxu0
      %5567 = vmatpush.bf16.msra.mxu0 %v4358
      %5568 = vmatpush.bf16.msra.mxu0 %v4356
      %5569 = vmatpush.bf16.msra.mxu0 %v4354
      %5570 = vmatpush.bf16.msra.mxu0 %v4352
      %5571 = vmatpush.bf16.msra.mxu0 %v4350
      %5572 = vmatpush.bf16.msra.mxu0 %v4348
      %5573 = vmatpush.bf16.msra.mxu0 %v4346
      %5574 = vmatpush.bf16.msra.mxu0 %v4344
      %5575 = vmatmul.bf16.gmra.mxu0 %v2341
      %v5576 = vpop.f32.mrf.mxu0
      %v5577 = vadd.f32 %v5564, %v5576
      %v5578 = vpop.f32.mrf.mxu0
      %5579 = vdwg.mxu0
      %5580 = vmatpush.bf16.msra.mxu0 %v4374
      %5581 = vmatpush.bf16.msra.mxu0 %v4372
      %5582 = vmatpush.bf16.msra.mxu0 %v4370
      %5583 = vmatpush.bf16.msra.mxu0 %v4368
      %5584 = vmatpush.bf16.msra.mxu0 %v4366
      %5585 = vmatpush.bf16.msra.mxu0 %v4364
      %5586 = vmatpush.bf16.msra.mxu0 %v4362
      %5587 = vmatpush.bf16.msra.mxu0 %v4360
      %5588 = vmatmul.bf16.gmra.mxu0 %v2342
      %v5589 = vpop.f32.mrf.mxu0
      %v5590 = vadd.f32 %v5577, %v5589
      %v5591 = vpop.f32.mrf.mxu0
      %5592 = vdwg.mxu0
      %5593 = vmatpush.bf16.msra.mxu0 %v4390
      %5594 = vmatpush.bf16.msra.mxu0 %v4388
      %5595 = vmatpush.bf16.msra.mxu0 %v4386
      %5596 = vmatpush.bf16.msra.mxu0 %v4384
      %5597 = vmatpush.bf16.msra.mxu0 %v4382
      %5598 = vmatpush.bf16.msra.mxu0 %v4380
      %5599 = vmatpush.bf16.msra.mxu0 %v4378
      %5600 = vmatpush.bf16.msra.mxu0 %v4376
      %5601 = vmatmul.bf16.gmra.mxu0 %v2343
      %v5602 = vpop.f32.mrf.mxu0
      %v5603 = vadd.f32 %v5590, %v5602
      %v5604 = vpop.f32.mrf.mxu0
      %5605 = vdwg.mxu0
      %5606 = vmatpush.bf16.msra.mxu0 %v4406
      %5607 = vmatpush.bf16.msra.mxu0 %v4404
      %5608 = vmatpush.bf16.msra.mxu0 %v4402
      %5609 = vmatpush.bf16.msra.mxu0 %v4400
      %5610 = vmatpush.bf16.msra.mxu0 %v4398
      %5611 = vmatpush.bf16.msra.mxu0 %v4396
      %5612 = vmatpush.bf16.msra.mxu0 %v4394
      %5613 = vmatpush.bf16.msra.mxu0 %v4392
      %5614 = vmatmul.bf16.gmra.mxu0 %v2344
      %v5615 = vpop.f32.mrf.mxu0
      %v5616 = vadd.f32 %v5603, %v5615
      %v5617 = vpop.f32.mrf.mxu0
      %5618 = vdwg.mxu0
      %5619 = vmatpush.bf16.msra.mxu0 %v4422
      %5620 = vmatpush.bf16.msra.mxu0 %v4420
      %5621 = vmatpush.bf16.msra.mxu0 %v4418
      %5622 = vmatpush.bf16.msra.mxu0 %v4416
      %5623 = vmatpush.bf16.msra.mxu0 %v4414
      %5624 = vmatpush.bf16.msra.mxu0 %v4412
      %5625 = vmatpush.bf16.msra.mxu0 %v4410
      %5626 = vmatpush.bf16.msra.mxu0 %v4408
      %5627 = vmatmul.bf16.gmra.mxu0 %v2345
      %v5628 = vpop.f32.mrf.mxu0
      %v5629 = vadd.f32 %v5616, %v5628
      %v5630 = vpop.f32.mrf.mxu0
      %5631 = vdwg.mxu0
      %5632 = vmatpush.bf16.msra.mxu0 %v4438
      %5633 = vmatpush.bf16.msra.mxu0 %v4436
      %5634 = vmatpush.bf16.msra.mxu0 %v4434
      %5635 = vmatpush.bf16.msra.mxu0 %v4432
      %5636 = vmatpush.bf16.msra.mxu0 %v4430
      %5637 = vmatpush.bf16.msra.mxu0 %v4428
      %5638 = vmatpush.bf16.msra.mxu0 %v4426
      %5639 = vmatpush.bf16.msra.mxu0 %v4424
      %5640 = vmatmul.bf16.gmra.mxu0 %v2346
      %v5641 = vpop.f32.mrf.mxu0
      %v5642 = vadd.f32 %v5629, %v5641
      %v5643 = vpop.f32.mrf.mxu0
      %5644 = vdwg.mxu0
      %5645 = vmatpush.bf16.msra.mxu0 %v4454
      %5646 = vmatpush.bf16.msra.mxu0 %v4452
      %5647 = vmatpush.bf16.msra.mxu0 %v4450
      %5648 = vmatpush.bf16.msra.mxu0 %v4448
      %5649 = vmatpush.bf16.msra.mxu0 %v4446
      %5650 = vmatpush.bf16.msra.mxu0 %v4444
      %5651 = vmatpush.bf16.msra.mxu0 %v4442
      %5652 = vmatpush.bf16.msra.mxu0 %v4440
      %5653 = vmatmul.bf16.gmra.mxu0 %v2347
      %v5654 = vpop.f32.mrf.mxu0
      %v5655 = vadd.f32 %v5642, %v5654
      %v5656 = vpop.f32.mrf.mxu0
      %5657 = vdwg.mxu0
      %5658 = vmatpush.bf16.msra.mxu0 %v4470
      %5659 = vmatpush.bf16.msra.mxu0 %v4468
      %5660 = vmatpush.bf16.msra.mxu0 %v4466
      %5661 = vmatpush.bf16.msra.mxu0 %v4464
      %5662 = vmatpush.bf16.msra.mxu0 %v4462
      %5663 = vmatpush.bf16.msra.mxu0 %v4460
      %5664 = vmatpush.bf16.msra.mxu0 %v4458
      %5665 = vmatpush.bf16.msra.mxu0 %v4456
      %5666 = vmatmul.bf16.gmra.mxu0 %v2348
      %v5667 = vpop.f32.mrf.mxu0
      %v5668 = vadd.f32 %v5655, %v5667
      %v5669 = vpop.f32.mrf.mxu0
      %5670 = vdwg.mxu0
      %5671 = vmatpush.bf16.msra.mxu0 %v4486
      %5672 = vmatpush.bf16.msra.mxu0 %v4484
      %5673 = vmatpush.bf16.msra.mxu0 %v4482
      %5674 = vmatpush.bf16.msra.mxu0 %v4480
      %5675 = vmatpush.bf16.msra.mxu0 %v4478
      %5676 = vmatpush.bf16.msra.mxu0 %v4476
      %5677 = vmatpush.bf16.msra.mxu0 %v4474
      %5678 = vmatpush.bf16.msra.mxu0 %v4472
      %5679 = vmatmul.bf16.gmra.mxu0 %v2349
      %v5680 = vpop.f32.mrf.mxu0
      %v5681 = vadd.f32 %v5668, %v5680
      %v5682 = vpop.f32.mrf.mxu0
      %5683 = vdwg.mxu0
      %5684 = vmatpush.bf16.msra.mxu0 %v4502
      %5685 = vmatpush.bf16.msra.mxu0 %v4500
      %5686 = vmatpush.bf16.msra.mxu0 %v4498
      %5687 = vmatpush.bf16.msra.mxu0 %v4496
      %5688 = vmatpush.bf16.msra.mxu0 %v4494
      %5689 = vmatpush.bf16.msra.mxu0 %v4492
      %5690 = vmatpush.bf16.msra.mxu0 %v4490
      %5691 = vmatpush.bf16.msra.mxu0 %v4488
      %5692 = vmatmul.bf16.gmra.mxu0 %v2350
      %v5693 = vpop.f32.mrf.mxu0
      %v5694 = vadd.f32 %v5681, %v5693
      %v5695 = vpop.f32.mrf.mxu0
      %5696 = vdwg.mxu0
      %5697 = vmatpush.bf16.msra.mxu0 %v4518
      %5698 = vmatpush.bf16.msra.mxu0 %v4516
      %5699 = vmatpush.bf16.msra.mxu0 %v4514
      %5700 = vmatpush.bf16.msra.mxu0 %v4512
      %5701 = vmatpush.bf16.msra.mxu0 %v4510
      %5702 = vmatpush.bf16.msra.mxu0 %v4508
      %5703 = vmatpush.bf16.msra.mxu0 %v4506
      %5704 = vmatpush.bf16.msra.mxu0 %v4504
      %5705 = vmatmul.bf16.gmra.mxu0 %v2351
      %v5706 = vpop.f32.mrf.mxu0
      %v5707 = vadd.f32 %v5694, %v5706
      %v5708 = vpop.f32.mrf.mxu0
      %5709 = vdwg.mxu0
      %5710 = vmatpush.bf16.msra.mxu0 %v4534
      %5711 = vmatpush.bf16.msra.mxu0 %v4532
      %5712 = vmatpush.bf16.msra.mxu0 %v4530
      %5713 = vmatpush.bf16.msra.mxu0 %v4528
      %5714 = vmatpush.bf16.msra.mxu0 %v4526
      %5715 = vmatpush.bf16.msra.mxu0 %v4524
      %5716 = vmatpush.bf16.msra.mxu0 %v4522
      %5717 = vmatpush.bf16.msra.mxu0 %v4520
      %5718 = vmatmul.bf16.gmra.mxu0 %v2352
      %v5719 = vpop.f32.mrf.mxu0
      %v5720 = vadd.f32 %v5707, %v5719
      %v5721 = vpop.f32.mrf.mxu0
      %5722 = vdwg.mxu0
      %5723 = vmatpush.bf16.msra.mxu0 %v4550
      %5724 = vmatpush.bf16.msra.mxu0 %v4548
      %5725 = vmatpush.bf16.msra.mxu0 %v4546
      %5726 = vmatpush.bf16.msra.mxu0 %v4544
      %5727 = vmatpush.bf16.msra.mxu0 %v4542
      %5728 = vmatpush.bf16.msra.mxu0 %v4540
      %5729 = vmatpush.bf16.msra.mxu0 %v4538
      %5730 = vmatpush.bf16.msra.mxu0 %v4536
      %5731 = vmatmul.bf16.gmra.mxu0 %v2353
      %v5732 = vpop.f32.mrf.mxu0
      %v5733 = vadd.f32 %v5720, %v5732
      %v5734 = vpop.f32.mrf.mxu0
      %5735 = vdwg.mxu0
      %5736 = vmatpush.bf16.msra.mxu0 %v4566
      %5737 = vmatpush.bf16.msra.mxu0 %v4564
      %5738 = vmatpush.bf16.msra.mxu0 %v4562
      %5739 = vmatpush.bf16.msra.mxu0 %v4560
      %5740 = vmatpush.bf16.msra.mxu0 %v4558
      %5741 = vmatpush.bf16.msra.mxu0 %v4556
      %5742 = vmatpush.bf16.msra.mxu0 %v4554
      %5743 = vmatpush.bf16.msra.mxu0 %v4552
      %5744 = vmatmul.bf16.gmra.mxu0 %v2354
      %v5745 = vpop.f32.mrf.mxu0
      %v5746 = vadd.f32 %v5733, %v5745
      %v5747 = vpop.f32.mrf.mxu0
      %5748 = vdwg.mxu0
      %5749 = vmatpush.bf16.msra.mxu0 %v4582
      %5750 = vmatpush.bf16.msra.mxu0 %v4580
      %5751 = vmatpush.bf16.msra.mxu0 %v4578
      %5752 = vmatpush.bf16.msra.mxu0 %v4576
      %5753 = vmatpush.bf16.msra.mxu0 %v4574
      %5754 = vmatpush.bf16.msra.mxu0 %v4572
      %5755 = vmatpush.bf16.msra.mxu0 %v4570
      %5756 = vmatpush.bf16.msra.mxu0 %v4568
      %5757 = vmatmul.bf16.gmra.mxu0 %v2355
      %v5758 = vpop.f32.mrf.mxu0
      %v5759 = vadd.f32 %v5746, %v5758
      %v5760 = vpop.f32.mrf.mxu0
      %5761 = vdwg.mxu0
      %5762 = vmatpush.bf16.msra.mxu0 %v4598
      %5763 = vmatpush.bf16.msra.mxu0 %v4596
      %5764 = vmatpush.bf16.msra.mxu0 %v4594
      %5765 = vmatpush.bf16.msra.mxu0 %v4592
      %5766 = vmatpush.bf16.msra.mxu0 %v4590
      %5767 = vmatpush.bf16.msra.mxu0 %v4588
      %5768 = vmatpush.bf16.msra.mxu0 %v4586
      %5769 = vmatpush.bf16.msra.mxu0 %v4584
      %5770 = vmatmul.bf16.gmra.mxu0 %v2356
      %v5771 = vpop.f32.mrf.mxu0
      %v5772 = vadd.f32 %v5759, %v5771
      %v5773 = vpop.f32.mrf.mxu0
      %5774 = vdwg.mxu0
      %v5775 = vxor.u32 %v5408, 2147483648
      %v5776 = vxor.u32 %v5772, 2147483648
      %v5777 = vmul.f32 %v5775, 1.442695
      %v5778 = vpow.pop %v5777
      %v5779 = vmul.f32 %v5776, 1.442695
      %v5780 = vpow.pop %v5779
      %v5781 = vadd.f32 %v5778, 1.0
      %v5782 = vadd.f32 %v5780, 1.0
      %v5783 = vrcp.pop %v5781
      %v5784 = vmul.f32 %v5781, %v5783
      %v5785 = vsub.f32 1.0, %v5784
      %v5786 = vmul.f32 %v5783, %v5785
      %v5787 = vadd.f32 %v5783, %v5786
      %vm5788 = vweird.f32 %v5781
      %vm5789 = vweird.f32 %v5783
      %vm5790 = vmor %vm5788, %vm5789
      %v5791 = vsel %vm5790, %v5783, %v5787
      %v5792 = vand.u32 2147483647, %v5781
      %vm5793 = vcmp.eq.f32.partialorder %v5792, 8.507059e+37
      %v5794 = vand.u32 %v5781, 2147483648
      %v5795 = vor.u32 1.1754944e-38, %v5794
      %v5796 = vsel %vm5793, %v5795, %v5791
      %v5797 = vmul.f32 1.0, %v5796
      %v5798 = vrcp.pop %v5782
      %v5799 = vmul.f32 %v5782, %v5798
      %v5800 = vsub.f32 1.0, %v5799
      %v5801 = vmul.f32 %v5798, %v5800
      %v5802 = vadd.f32 %v5798, %v5801
      %vm5803 = vweird.f32 %v5782
      %vm5804 = vweird.f32 %v5798
      %vm5805 = vmor %vm5803, %vm5804
      %v5806 = vsel %vm5805, %v5798, %v5802
      %v5807 = vand.u32 2147483647, %v5782
      %vm5808 = vcmp.eq.f32.partialorder %v5807, 8.507059e+37
      %v5809 = vand.u32 %v5782, 2147483648
      %v5810 = vor.u32 1.1754944e-38, %v5809
      %v5811 = vsel %vm5808, %v5810, %v5806
      %v5812 = vmul.f32 1.0, %v5811
      %v5813 = vmul.f32 %v2189, %v5797
      %v5814 = vmul.f32 %v2189, %v5812
      %v5815 = vmul.f32 %v1648, %v5813
      %v5816 = vmul.f32 %v1649, %v5814
      %v5817 = vmul.f32 %v1650, %v5813
      %v5818 = vmul.f32 %v1651, %v5814
      %v5819 = vmul.f32 %v1652, %v5813
      %v5820 = vmul.f32 %v1653, %v5814
      %v5821 = vmul.f32 %v1654, %v5813
      %v5822 = vmul.f32 %v1655, %v5814
      %v5823 = vmul.f32 %v1656, %v5813
      %v5824 = vmul.f32 %v1657, %v5814
      %v5825 = vmul.f32 %v1658, %v5813
      %v5826 = vmul.f32 %v1659, %v5814
      %v5827 = vmul.f32 %v1660, %v5813
      %v5828 = vmul.f32 %v1661, %v5814
      %v5829 = vmul.f32 %v1662, %v5813
      %v5830 = vmul.f32 %v1663, %v5814
      %v5831 = vmul.f32 %v1664, %v5813
      %v5832 = vmul.f32 %v1665, %v5814
      %v5833 = vmul.f32 %v1666, %v5813
      %v5834 = vmul.f32 %v1667, %v5814
      %v5835 = vmul.f32 %v1668, %v5813
      %v5836 = vmul.f32 %v1669, %v5814
      %v5837 = vmul.f32 %v1670, %v5813
      %v5838 = vmul.f32 %v1671, %v5814
      %v5839 = vmul.f32 %v1672, %v5813
      %v5840 = vmul.f32 %v1673, %v5814
      %v5841 = vmul.f32 %v1674, %v5813
      %v5842 = vmul.f32 %v1675, %v5814
      %v5843 = vmul.f32 %v1676, %v5813
      %v5844 = vmul.f32 %v1677, %v5814
      %v5845 = vmul.f32 %v1678, %v5813
      %v5846 = vmul.f32 %v1679, %v5814
      %v5847 = vmul.f32 %v1680, %v5813
      %v5848 = vmul.f32 %v1681, %v5814
      %v5849 = vmul.f32 %v1682, %v5813
      %v5850 = vmul.f32 %v1683, %v5814
      %v5851 = vmul.f32 %v1684, %v5813
      %v5852 = vmul.f32 %v1685, %v5814
      %v5853 = vmul.f32 %v1686, %v5813
      %v5854 = vmul.f32 %v1687, %v5814
      %v5855 = vmul.f32 %v1688, %v5813
      %v5856 = vmul.f32 %v1689, %v5814
      %v5857 = vmul.f32 %v1690, %v5813
      %v5858 = vmul.f32 %v1691, %v5814
      %v5859 = vmul.f32 %v1692, %v5813
      %v5860 = vmul.f32 %v1693, %v5814
      %v5861 = vmul.f32 %v1694, %v5813
      %v5862 = vmul.f32 %v1695, %v5814
      %v5863 = vmul.f32 %v1696, %v5813
      %v5864 = vmul.f32 %v1697, %v5814
      %v5865 = vmul.f32 %v1698, %v5813
      %v5866 = vmul.f32 %v1699, %v5814
      %v5867 = vmul.f32 %v1700, %v5813
      %v5868 = vmul.f32 %v1701, %v5814
      %v5869 = vmul.f32 %v1702, %v5813
      %v5870 = vmul.f32 %v1703, %v5814
      %v5871 = vmul.f32 %v1704, %v5813
      %v5872 = vmul.f32 %v1705, %v5814
      %v5873 = vmul.f32 %v1706, %v5813
      %v5874 = vmul.f32 %v1707, %v5814
      %v5875 = vmul.f32 %v1708, %v5813
      %v5876 = vmul.f32 %v1709, %v5814
      %v5877 = vmul.f32 %v1710, %v5813
      %v5878 = vmul.f32 %v1711, %v5814
      %v5879 = vadd.f32 %v388, %v5815
      %v5880 = vadd.f32 %v389, %v5816
      %v5881 = vadd.f32 %v390, %v5817
      %v5882 = vadd.f32 %v391, %v5818
      %v5883 = vadd.f32 %v392, %v5819
      %v5884 = vadd.f32 %v393, %v5820
      %v5885 = vadd.f32 %v394, %v5821
      %v5886 = vadd.f32 %v395, %v5822
      %v5887 = vadd.f32 %v396, %v5823
      %v5888 = vadd.f32 %v397, %v5824
      %v5889 = vadd.f32 %v398, %v5825
      %v5890 = vadd.f32 %v399, %v5826
      %v5891 = vadd.f32 %v400, %v5827
      %v5892 = vadd.f32 %v401, %v5828
      %v5893 = vadd.f32 %v402, %v5829
      %v5894 = vadd.f32 %v403, %v5830
      %v5895 = vadd.f32 %v404, %v5831
      %v5896 = vadd.f32 %v405, %v5832
      %v5897 = vadd.f32 %v406, %v5833
      %v5898 = vadd.f32 %v407, %v5834
      %v5899 = vadd.f32 %v408, %v5835
      %v5900 = vadd.f32 %v409, %v5836
      %v5901 = vadd.f32 %v410, %v5837
      %v5902 = vadd.f32 %v411, %v5838
      %v5903 = vadd.f32 %v412, %v5839
      %v5904 = vadd.f32 %v413, %v5840
      %v5905 = vadd.f32 %v414, %v5841
      %v5906 = vadd.f32 %v415, %v5842
      %v5907 = vadd.f32 %v416, %v5843
      %v5908 = vadd.f32 %v417, %v5844
      %v5909 = vadd.f32 %v418, %v5845
      %v5910 = vadd.f32 %v419, %v5846
      %v5911 = vadd.f32 %v420, %v5847
      %v5912 = vadd.f32 %v421, %v5848
      %v5913 = vadd.f32 %v422, %v5849
      %v5914 = vadd.f32 %v423, %v5850
      %v5915 = vadd.f32 %v424, %v5851
      %v5916 = vadd.f32 %v425, %v5852
      %v5917 = vadd.f32 %v426, %v5853
      %v5918 = vadd.f32 %v427, %v5854
      %v5919 = vadd.f32 %v428, %v5855
      %v5920 = vadd.f32 %v429, %v5856
      %v5921 = vadd.f32 %v430, %v5857
      %v5922 = vadd.f32 %v431, %v5858
      %v5923 = vadd.f32 %v432, %v5859
      %v5924 = vadd.f32 %v433, %v5860
      %v5925 = vadd.f32 %v434, %v5861
      %v5926 = vadd.f32 %v435, %v5862
      %v5927 = vadd.f32 %v436, %v5863
      %v5928 = vadd.f32 %v437, %v5864
      %v5929 = vadd.f32 %v438, %v5865
      %v5930 = vadd.f32 %v439, %v5866
      %v5931 = vadd.f32 %v440, %v5867
      %v5932 = vadd.f32 %v441, %v5868
      %v5933 = vadd.f32 %v442, %v5869
      %v5934 = vadd.f32 %v443, %v5870
      %v5935 = vadd.f32 %v444, %v5871
      %v5936 = vadd.f32 %v445, %v5872
      %v5937 = vadd.f32 %v446, %v5873
      %v5938 = vadd.f32 %v447, %v5874
      %v5939 = vadd.f32 %v448, %v5875
      %v5940 = vadd.f32 %v449, %v5876
      %v5941 = vadd.f32 %v450, %v5877
      %v5942 = vadd.f32 %v451, %v5878
      %5943 = vst [vmem:[%s387] sm:$0xff] %v5879
      %5944 = vst [vmem:[%s387 + $0x8] sm:$0xff] %v5880
      %5945 = vst [vmem:[%s387 + $0x10] sm:$0xff] %v5881
      %5946 = vst [vmem:[%s387 + $0x18] sm:$0xff] %v5882
      %5947 = vst [vmem:[%s387 + $0x20] sm:$0xff] %v5883
      %5948 = vst [vmem:[%s387 + $0x28] sm:$0xff] %v5884
      %5949 = vst [vmem:[%s387 + $0x30] sm:$0xff] %v5885
      %5950 = vst [vmem:[%s387 + $0x38] sm:$0xff] %v5886
      %5951 = vst [vmem:[%s387 + $0x40] sm:$0xff] %v5887
      %5952 = vst [vmem:[%s387 + $0x48] sm:$0xff] %v5888
      %5953 = vst [vmem:[%s387 + $0x50] sm:$0xff] %v5889
      %5954 = vst [vmem:[%s387 + $0x58] sm:$0xff] %v5890
      %5955 = vst [vmem:[%s387 + $0x60] sm:$0xff] %v5891
      %5956 = vst [vmem:[%s387 + $0x68] sm:$0xff] %v5892
      %5957 = vst [vmem:[%s387 + $0x70] sm:$0xff] %v5893
      %5958 = vst [vmem:[%s387 + $0x78] sm:$0xff] %v5894
      %5959 = vst [vmem:[%s387 + $0x80] sm:$0xff] %v5895
      %5960 = vst [vmem:[%s387 + $0x88] sm:$0xff] %v5896
      %5961 = vst [vmem:[%s387 + $0x90] sm:$0xff] %v5897
      %5962 = vst [vmem:[%s387 + $0x98] sm:$0xff] %v5898
      %5963 = vst [vmem:[%s387 + $0xa0] sm:$0xff] %v5899
      %5964 = vst [vmem:[%s387 + $0xa8] sm:$0xff] %v5900
      %5965 = vst [vmem:[%s387 + $0xb0] sm:$0xff] %v5901
      %5966 = vst [vmem:[%s387 + $0xb8] sm:$0xff] %v5902
      %5967 = vst [vmem:[%s387 + $0xc0] sm:$0xff] %v5903
      %5968 = vst [vmem:[%s387 + $0xc8] sm:$0xff] %v5904
      %5969 = vst [vmem:[%s387 + $0xd0] sm:$0xff] %v5905
      %5970 = vst [vmem:[%s387 + $0xd8] sm:$0xff] %v5906
      %5971 = vst [vmem:[%s387 + $0xe0] sm:$0xff] %v5907
      %5972 = vst [vmem:[%s387 + $0xe8] sm:$0xff] %v5908
      %5973 = vst [vmem:[%s387 + $0xf0] sm:$0xff] %v5909
      %5974 = vst [vmem:[%s387 + $0xf8] sm:$0xff] %v5910
      %5975 = vst [vmem:[%s387 + $0x100] sm:$0xff] %v5911
      %5976 = vst [vmem:[%s387 + $0x108] sm:$0xff] %v5912
      %5977 = vst [vmem:[%s387 + $0x110] sm:$0xff] %v5913
      %5978 = vst [vmem:[%s387 + $0x118] sm:$0xff] %v5914
      %5979 = vst [vmem:[%s387 + $0x120] sm:$0xff] %v5915
      %5980 = vst [vmem:[%s387 + $0x128] sm:$0xff] %v5916
      %5981 = vst [vmem:[%s387 + $0x130] sm:$0xff] %v5917
      %5982 = vst [vmem:[%s387 + $0x138] sm:$0xff] %v5918
      %5983 = vst [vmem:[%s387 + $0x140] sm:$0xff] %v5919
      %5984 = vst [vmem:[%s387 + $0x148] sm:$0xff] %v5920
      %5985 = vst [vmem:[%s387 + $0x150] sm:$0xff] %v5921
      %5986 = vst [vmem:[%s387 + $0x158] sm:$0xff] %v5922
      %5987 = vst [vmem:[%s387 + $0x160] sm:$0xff] %v5923
      %5988 = vst [vmem:[%s387 + $0x168] sm:$0xff] %v5924
      %5989 = vst [vmem:[%s387 + $0x170] sm:$0xff] %v5925
      %5990 = vst [vmem:[%s387 + $0x178] sm:$0xff] %v5926
      %5991 = vst [vmem:[%s387 + $0x180] sm:$0xff] %v5927
      %5992 = vst [vmem:[%s387 + $0x188] sm:$0xff] %v5928
      %5993 = vst [vmem:[%s387 + $0x190] sm:$0xff] %v5929
      %5994 = vst [vmem:[%s387 + $0x198] sm:$0xff] %v5930
      %5995 = vst [vmem:[%s387 + $0x1a0] sm:$0xff] %v5931
      %5996 = vst [vmem:[%s387 + $0x1a8] sm:$0xff] %v5932
      %5997 = vst [vmem:[%s387 + $0x1b0] sm:$0xff] %v5933
      %5998 = vst [vmem:[%s387 + $0x1b8] sm:$0xff] %v5934
      %5999 = vst [vmem:[%s387 + $0x1c0] sm:$0xff] %v5935
      %6000 = vst [vmem:[%s387 + $0x1c8] sm:$0xff] %v5936
      %6001 = vst [vmem:[%s387 + $0x1d0] sm:$0xff] %v5937
      %6002 = vst [vmem:[%s387 + $0x1d8] sm:$0xff] %v5938
      %6003 = vst [vmem:[%s387 + $0x1e0] sm:$0xff] %v5939
      %6004 = vst [vmem:[%s387 + $0x1e8] sm:$0xff] %v5940
      %6005 = vst [vmem:[%s387 + $0x1f0] sm:$0xff] %v5941
      %6006 = vst [vmem:[%s387 + $0x1f8] sm:$0xff] %v5942
      %p6007 = scmp.lt.s32.totalorder %s23, 1
      %s6008 = scalar_select %p6007, %s23, 1
      %s6009 = smul.addr %s6008, 64
      %s6010 = smul.addr %s6009, 8
      %s6011 = scalar_lea.vmem %s11, %s6010
      // Predicated region
      $region65: #{_lambda_.1} parent=63 // pred_check
        %p6012 = pneg %p277
      $region66: #{_lambda_.1} parent=63 // pred_check_branch
        %6014 = sbr.rel (%p6012) target = $region68
      $region67: #{_lambda_.1} parent=63 // pred_region
        _
      $region68: #{_lambda_.1} parent=63 // pred_fallthru
        _
    $region64: #{_lambda_.1} parent=5 // pred_fallthru
      _
    %p6015 = scmp.le.s32.totalorder 2, %s18
    // Predicated region
    $region69: #{_lambda_.1} parent=5 // pred_check
      %p6016 = pneg %p6015
    $region70: #{_lambda_.1} parent=5 // pred_check_branch
      %6018 = sbr.rel (%p6016) target = $region72
    $region71: #{_lambda_.1} parent=5 // pred_region
      %s6019 = ssub.s32 %s18, 2
      // Predicated region
      $region73: #{_lambda_.1} parent=71 // pred_check
        %p6020 = pneg %p283
      $region74: #{_lambda_.1} parent=71 // pred_check_branch
        %6022 = sbr.rel (%p6020) target = $region76
      $region75: #{_lambda_.1} parent=71 // pred_region
        %p6023 = scmp.lt.s32.totalorder %s24, 1
        %s6024 = scalar_select %p6023, %s24, 1
        %s6025 = smul.addr %s6024, 64
        %s6026 = smul.addr %s6025, 8
        %s6027 = scalar_lea.vmem %s11, %s6026
      $region76: #{_lambda_.1} parent=71 // pred_fallthru
        _
    $region72: #{_lambda_.1} parent=5 // pred_fallthru
      _
  $region6: #{_lambda_.1} parent=0 // loop_footer
    %s22 = sadd.s32 1, %s18
  $region7: #{_lambda_.1} parent=0 // loop_footer_branch
    %17 = sbr.rel target = $region3
  $region8: #{_lambda_.1} parent=0 // loop_exit
    _

</llo_original>
